<compile_context>
chip_gen: v7x
topology: tpu7x:2x2x1
jax: 0.10.0
libtpu: 0.0.40
codegen_flags: <defaults>
</compile_context>

<pallas_src>
import functools

import jax
import jax.numpy as jnp
from jax.experimental import pallas as pl
from jax.experimental.pallas import tpu as pltpu


def _imageda_kernel(x_ref,       # (1, dim, tp)             pixels on lanes (pipelined)
                    wh_ref,      # ((K+1)*hidden, dim)      [Conv1.w ; dci[0][0].w ; ...]
                    wl_ref,      # (K_pad, dim)             conv_lst.w (zero-padded rows)
                    bl_ref,      # (K, 1)                   conv_lst.b (f32)
                    bh0_ref,     # (hidden, 1)              Conv1.b           (epilogue dtype)
                    bhr_ref,     # (K, hidden, 1)           dci[i][0].b       (epilogue dtype)
                    w2g_ref,     # (2, hidden)              Conv2.w
                    w2l_ref,     # (2K, K*hidden)           block-diag of dci[i][2].w
                    b2_ref,      # (2*(K+1), 1)             [Conv2.b ; dci[i][2].b]  (f32)
                    out_ref,     # (1, 2*(K+1), tp)         packed lane-dense output slab
                    *, K, hidden, mxu_dtype, ep_dtype):
    x = x_ref[0]                                   # (dim, tp); grad_reverse is identity in fwd
    tp = x.shape[-1]

    # ---- stage 1 (fused): Conv1 and all dci[i][0] share one dim-contraction on the MXU ----
    zh = jnp.dot(wh_ref[...], x, preferred_element_type=jnp.float32)   # ((K+1)*hidden, tp)
    zh = zh.astype(ep_dtype)          # packed bf16 epilogue on v6e/v7x; stays f32 on v5e

    # ---- class softmax over the K logits (channels on sublanes); exp / recip kept in f32 ----
    zl = jnp.dot(wl_ref[...], x, preferred_element_type=jnp.float32)[:K] + bl_ref[...]
    m = jnp.max(zl, axis=0, keepdims=True)
    e = jnp.exp(zl - m)
    inv = pl.reciprocal(jnp.sum(e, axis=0, keepdims=True))   # EUP path; exact (approx=False)
    p = (e * inv).astype(ep_dtype)                            # (K, tp)

    # ---- epilogue: global branch skips the x1.0 scale; locals scale PRE-bias ----
    h0 = jnp.maximum(zh[:hidden] + bh0_ref[...], 0)                       # (hidden, tp)
    zr = zh[hidden:].reshape(K, hidden, tp)
    hr = jnp.maximum(zr * p[:, None, :] + bhr_ref[...], 0)                # (K, hidden, tp)

    # ---- stage 2: one dot for the global head + ONE block-diagonal dot for all locals ----
    o_g = jnp.dot(w2g_ref[...], h0.astype(mxu_dtype),
                  preferred_element_type=jnp.float32)                     # (2, tp)
    o_l = jnp.dot(w2l_ref[...], hr.reshape(K * hidden, tp).astype(mxu_dtype),
                  preferred_element_type=jnp.float32)                     # (2K, tp)
    out_ref[0] = jnp.concatenate([o_g, o_l], axis=0) + b2_ref[...]        # (2*(K+1), tp)


def _choose_lane_tiling(hw, max_lanes):
    """Lane-tile size (multiple of 128) minimizing padding; prefer bigger tiles on ties."""
    groups = -(-hw // 128)
    best = None
    for d in range(1, max(1, max_lanes // 128) + 1):
        tiles = -(-groups // d)
        padded = tiles * d * 128
        key = (padded, -d)
        if best is None or key < best[0]:
            best = (key, d, padded)
    _, d, padded = best
    return d * 128, padded


@functools.partial(jax.jit,
                   static_argnames=("dim", "hidden", "K", "use_bf16", "bf16_epilogue",
                                    "max_lanes", "vmem_limit_bytes"))
def imageda_forward(x_nchw, need_backprop, params, *, dim, hidden, K,
                    use_bf16=True, bf16_epilogue=None, max_lanes=1024,
                    vmem_limit_bytes=48 * 1024 * 1024):
    N, C, H, W = x_nchw.shape
    assert C == dim
    HW = H * W
    # max_lanes tuning per generation: <=512 on v5e (low HBM BW / small scoped VMEM),
    # 1024-2048 on v6e (128 MiB VMEM), <=1024 on v7x (64 MiB VMEM).  vmem_limit_bytes=48MiB
    # is safe on all gens (< v7x's 64 MiB physical) and leaves headroom for f32 epilogues.
    tp, HW_pad = _choose_lane_tiling(HW, max_lanes)

    mxu_dtype = jnp.bfloat16 if use_bf16 else jnp.float32
    if bf16_epilogue is None:
        bf16_epilogue = use_bf16          # set bf16_epilogue=False on v5e (no bf16 VPU/EUP)
    ep_dtype = jnp.bfloat16 if (use_bf16 and bf16_epilogue) else jnp.float32

    (w1, b1, w2, b2, wl, bl, w0, b0, wd2, bd2) = params
    K_pad = ((K + 7) // 8) * 8

    # ---- pack parameters once (native (Cout, Cin) conv orientation; no transposes) ----
    wh = jnp.concatenate([w1, w0.reshape(K * hidden, dim)], axis=0).astype(mxu_dtype)
    wl_pad = jnp.zeros((K_pad, dim), jnp.float32).at[:K].set(wl).astype(mxu_dtype)
    bl2 = bl.reshape(K, 1)                                   # softmax logits stay f32
    bh0 = b1.reshape(hidden, 1).astype(ep_dtype)
    bhr = b0.reshape(K, hidden, 1).astype(ep_dtype)
    w2g = w2.astype(mxu_dtype)                               # (2, hidden)
    w2l = jnp.zeros((2 * K, K * hidden), jnp.float32)        # block-diag local stage-2 weight
    for i in range(K):
        w2l = w2l.at[2 * i:2 * i + 2, i * hidden:(i + 1) * hidden].set(wd2[i])
    w2l = w2l.astype(mxu_dtype)
    b2all = jnp.concatenate([b2, bd2.reshape(2 * K)]).reshape(2 * (K + 1), 1)   # f32

    # NCHW already has channels leading per image: just flatten HW and pad the lane dim.
    x3 = x_nchw.reshape(N, C, HW)
    if HW_pad != HW:
        x3 = jnp.pad(x3, ((0, 0), (0, 0), (0, HW_pad - HW)))
    x3 = x3.astype(mxu_dtype)        # bf16 halves the per-tile x DMA bytes into the kernel

    kernel = functools.partial(_imageda_kernel, K=K, hidden=hidden,
                               mxu_dtype=mxu_dtype, ep_dtype=ep_dtype)
    # Grid-invariant parameters: whole array resident in VMEM (no pipeline, single copy).
    pspec = pl.BlockSpec(memory_space=pltpu.MemorySpace.VMEM)

    out = pl.pallas_call(
        kernel,
        out_shape=jax.ShapeDtypeStruct((N, 2 * (K + 1), HW_pad), jnp.float32),
        grid=(N, HW_pad // tp),
        in_specs=[
            pl.BlockSpec((1, dim, tp), lambda n, t: (n, 0, t)),   # x tile (pipelined)
            pspec,   # wh
            pspec,   # wl
            pspec,   # bl
            pspec,   # bh0
            pspec,   # bhr
            pspec,   # w2 global
            pspec,   # w2 locals (block-diag)
            pspec,   # b2 (all heads)
        ],
        out_specs=pl.BlockSpec((1, 2 * (K + 1), tp), lambda n, t: (n, 0, t)),
        compiler_params=pltpu.CompilerParams(
            dimension_semantics=("parallel", "parallel"),   # both axes megacore-splittable (v7x)
            vmem_limit_bytes=vmem_limit_bytes),
    )(x3, wh, wl_pad, bl2, bh0, bhr, w2g, w2l, b2all)

    out = out[..., :HW]                                  # strip lane padding
    global_x = out[:, 0:2].reshape(N, 2, H, W)
    local_out = [out[:, 2 + 2 * i:4 + 2 * i].reshape(N, 2, H, W) for i in range(K)]

    # ImageLabelResizeLayer: per-image scalar domain label broadcast to global_x spatial size.
    # TODO(synk): original ImageLabelResizeLayer source not in the reference snippet; this
    # reproduces the standard DA-Faster-RCNN behaviour as plain-JAX glue.
    label = jnp.broadcast_to(
        need_backprop.astype(jnp.int32).reshape(N, 1, 1), (N, H, W))

    return global_x, local_out, label


def init_params(key, dim, hidden, K):
    """Deterministic init. Conv2d(Cin, Cout, 1) weights stored in native (Cout, Cin) form."""
    ks = jax.random.split(key, 10)
    s = 0.05
    w1 = s * jax.random.normal(ks[0], (hidden, dim), jnp.float32)     # Conv1
    b1 = s * jax.random.normal(ks[1], (hidden,), jnp.float32)
    w2 = s * jax.random.normal(ks[2], (2, hidden), jnp.float32)       # Conv2
    b2 = s * jax.random.normal(ks[3], (2,), jnp.float32)
    wl = s * jax.random.normal(ks[4], (K, dim), jnp.float32)          # conv_lst
    bl = s * jax.random.normal(ks[5], (K,), jnp.float32)
    w0 = s * jax.random.normal(ks[6], (K, hidden, dim), jnp.float32)  # dci[i][0]
    b0 = s * jax.random.normal(ks[7], (K, hidden), jnp.float32)
    wd2 = s * jax.random.normal(ks[8], (K, 2, hidden), jnp.float32)   # dci[i][2]
    bd2 = s * jax.random.normal(ks[9], (K, 2), jnp.float32)
    return (w1, b1, w2, b2, wl, bl, w0, b0, wd2, bd2)


def _reference_forward(x_nchw, params, dim, hidden, K):
    """Plain-JAX reference of the PyTorch forward."""
    (w1, b1, w2, b2, wl, bl, w0, b0, wd2, bd2) = params
    N, C, H, W = x_nchw.shape
    xf = jnp.transpose(x_nchw, (0, 2, 3, 1)).reshape(-1, dim)
    h = jnp.maximum(xf @ w1.T + b1, 0.0)
    g = h @ w2.T + b2
    logits = xf @ wl.T + bl
    p = jax.nn.softmax(logits, axis=-1)
    locals_ = []
    for i in range(K):
        xi = p[:, i:i + 1] * xf
        hi = jnp.maximum(xi @ w0[i].T + b0[i], 0.0)
        locals_.append(hi @ wd2[i].T + bd2[i])
    g = jnp.transpose(g.reshape(N, H, W, 2), (0, 3, 1, 2))
    locals_ = [jnp.transpose(o.reshape(N, H, W, 2), (0, 3, 1, 2)) for o in locals_]
    return g, locals_


if __name__ == "__main__":
    dim = 4            # input feature channels
    num_classes = 4    # -> K = num_classes - 1 = 3 local domain classifiers
    hidden = 512       # Conv1 / dci[i][0] output channels (fixed by the module)
    K = num_classes - 1
    N, H, W = 2, 16, 16

    key = jax.random.PRNGKey(0)
    kx, kp = jax.random.split(key)
    x = jax.random.normal(kx, (N, dim, H, W), jnp.float32)
    need_backprop = jnp.array([0.0, 1.0], jnp.float32)
    params = init_params(kp, dim, hidden, K)

    g_ref, l_ref = _reference_forward(x, params, dim, hidden, K)

    # Strict f32 path (f32 MXU operands + f32 epilogue) -- tight correctness check.
    g32, l32, label = imageda_forward(
        x, need_backprop, params, dim=dim, hidden=hidden, K=K, use_bf16=False)
    jax.block_until_ready((g32, l32, label))

    assert g32.shape == (N, 2, H, W)
    assert label.shape == (N, H, W) and label.dtype == jnp.int32
    assert len(l32) == K and all(o.shape == (N, 2, H, W) for o in l32)
    assert jnp.allclose(g32, g_ref, atol=1e-4, rtol=1e-4)
    for o, r in zip(l32, l_ref):
        assert jnp.allclose(o, r, atol=1e-4, rtol=1e-4)

    # Default fast path: bf16 MXU operands + bf16 epilogue (f32 accumulation kept).
    g16, l16, _ = imageda_forward(
        x, need_backprop, params, dim=dim, hidden=hidden, K=K)
    jax.block_until_ready((g16, l16))
    assert jnp.allclose(g16, g_ref, atol=5e-2, rtol=5e-2)
    for o, r in zip(l16, l_ref):
        assert jnp.allclose(o, r, atol=5e-2, rtol=5e-2)

    print("KERNEL_OK")
</pallas_src>

<mosaic_0001>
module attributes {stable_mosaic.version = 11 : i64} {
  func.func @_imageda_kernel(%arg0: i32, %arg1: i32, %arg2: memref<1x4x256xf32, #tpu.memory_space<vmem>>, %arg3: memref<2048x4xf32, #tpu.memory_space<vmem>>, %arg4: memref<8x4xf32, #tpu.memory_space<vmem>>, %arg5: memref<3x1xf32, #tpu.memory_space<vmem>>, %arg6: memref<512x1xf32, #tpu.memory_space<vmem>>, %arg7: memref<3x512x1xf32, #tpu.memory_space<vmem>>, %arg8: memref<2x512xf32, #tpu.memory_space<vmem>>, %arg9: memref<6x1536xf32, #tpu.memory_space<vmem>>, %arg10: memref<8x1xf32, #tpu.memory_space<vmem>>, %arg11: memref<1x8x256xf32, #tpu.memory_space<vmem>>) attributes {dimension_semantics = [#tpu.dimension_semantics<parallel>, #tpu.dimension_semantics<parallel>], iteration_bounds = array<i64: 2, 1>, scalar_prefetch = 0 : i64, scratch_operands = 0 : i64, tpu.core_type = #tpu.core_type<tc>, window_params = [{transform_indices = @transform_0, window_bounds = array<i64: 1, 4, 256>}, {pipeline_mode = #tpu.pipeline_mode<synchronous>, transform_indices = @transform_1, window_bounds = array<i64: 2048, 4>}, {pipeline_mode = #tpu.pipeline_mode<synchronous>, transform_indices = @transform_2, window_bounds = array<i64: 8, 4>}, {pipeline_mode = #tpu.pipeline_mode<synchronous>, transform_indices = @transform_3, window_bounds = array<i64: 3, 1>}, {pipeline_mode = #tpu.pipeline_mode<synchronous>, transform_indices = @transform_4, window_bounds = array<i64: 512, 1>}, {pipeline_mode = #tpu.pipeline_mode<synchronous>, transform_indices = @transform_5, window_bounds = array<i64: 3, 512, 1>}, {pipeline_mode = #tpu.pipeline_mode<synchronous>, transform_indices = @transform_6, window_bounds = array<i64: 2, 512>}, {pipeline_mode = #tpu.pipeline_mode<synchronous>, transform_indices = @transform_7, window_bounds = array<i64: 6, 1536>}, {pipeline_mode = #tpu.pipeline_mode<synchronous>, transform_indices = @transform_8, window_bounds = array<i64: 8, 1>}, {transform_indices = @transform_9, window_bounds = array<i64: 1, 8, 256>}]} {
    %c0 = arith.constant 0 : index
    %c0_0 = arith.constant 0 : index
    %c0_1 = arith.constant 0 : index
    %0 = vector.load %arg2[%c0, %c0_0, %c0_1] : memref<1x4x256xf32, #tpu.memory_space<vmem>>, vector<1x4x256xf32>
    %1 = vector.shape_cast %0 : vector<1x4x256xf32> to vector<4x256xf32>
    %c0_2 = arith.constant 0 : index
    %c0_3 = arith.constant 0 : index
    %2 = vector.load %arg3[%c0_2, %c0_3] : memref<2048x4xf32, #tpu.memory_space<vmem>>, vector<2048x4xf32>
    %cst = arith.constant dense<0.000000e+00> : vector<2048x256xf32>
    %3 = tpu.matmul %2, %1, %cst {dimension_numbers = #tpu.dot_dimension_numbers<[1], [0], [0], [1], [0, 0, 1, 1], [], []>} : vector<2048x4xf32>, vector<4x256xf32>, vector<2048x256xf32> -> vector<2048x256xf32>
    %c0_4 = arith.constant 0 : index
    %c0_5 = arith.constant 0 : index
    %4 = vector.load %arg4[%c0_4, %c0_5] : memref<8x4xf32, #tpu.memory_space<vmem>>, vector<8x4xf32>
    %cst_6 = arith.constant dense<0.000000e+00> : vector<8x256xf32>
    %5 = tpu.matmul %4, %1, %cst_6 {dimension_numbers = #tpu.dot_dimension_numbers<[1], [0], [0], [1], [0, 0, 1, 1], [], []>} : vector<8x4xf32>, vector<4x256xf32>, vector<8x256xf32> -> vector<8x256xf32>
    %6 = vector.extract_strided_slice %5 {offsets = [0, 0], sizes = [3, 256], strides = [1, 1]} : vector<8x256xf32> to vector<3x256xf32>
    %c0_7 = arith.constant 0 : index
    %c0_8 = arith.constant 0 : index
    %7 = vector.load %arg5[%c0_7, %c0_8] : memref<3x1xf32, #tpu.memory_space<vmem>>, vector<3x1xf32>
    %8 = vector.broadcast %7 : vector<3x1xf32> to vector<3x256xf32>
    %9 = arith.addf %6, %8 : vector<3x256xf32>
    %cst_9 = arith.constant dense<0xFF800000> : vector<256xf32>
    %10 = vector.multi_reduction <maximumf>, %9, %cst_9 [0] : vector<3x256xf32> to vector<256xf32>
    %11 = vector.shape_cast %10 : vector<256xf32> to vector<1x256xf32>
    %12 = vector.broadcast %11 : vector<1x256xf32> to vector<3x256xf32>
    %13 = arith.subf %9, %12 : vector<3x256xf32>
    %14 = math.exp %13 : vector<3x256xf32>
    %cst_10 = arith.constant dense<0.000000e+00> : vector<256xf32>
    %15 = vector.multi_reduction <add>, %14, %cst_10 [0] : vector<3x256xf32> to vector<256xf32>
    %16 = vector.shape_cast %15 : vector<256xf32> to vector<1x256xf32>
    %17 = tpu.reciprocal %16 : vector<1x256xf32> -> vector<1x256xf32>
    %18 = vector.broadcast %17 : vector<1x256xf32> to vector<3x256xf32>
    %19 = arith.mulf %14, %18 : vector<3x256xf32>
    %20 = vector.extract_strided_slice %3 {offsets = [0, 0], sizes = [512, 256], strides = [1, 1]} : vector<2048x256xf32> to vector<512x256xf32>
    %c0_11 = arith.constant 0 : index
    %c0_12 = arith.constant 0 : index
    %21 = vector.load %arg6[%c0_11, %c0_12] : memref<512x1xf32, #tpu.memory_space<vmem>>, vector<512x1xf32>
    %22 = vector.broadcast %21 : vector<512x1xf32> to vector<512x256xf32>
    %23 = arith.addf %20, %22 : vector<512x256xf32>
    %cst_13 = arith.constant 0.000000e+00 : f32
    %24 = vector.broadcast %cst_13 : f32 to vector<512x256xf32>
    %25 = arith.maximumf %23, %24 : vector<512x256xf32>
    %26 = vector.extract_strided_slice %3 {offsets = [512, 0], sizes = [1536, 256], strides = [1, 1]} : vector<2048x256xf32> to vector<1536x256xf32>
    %27 = vector.shape_cast %26 : vector<1536x256xf32> to vector<3x512x256xf32>
    %28 = vector.shape_cast %19 : vector<3x256xf32> to vector<3x1x256xf32>
    %29 = vector.broadcast %28 : vector<3x1x256xf32> to vector<3x512x256xf32>
    %30 = arith.mulf %27, %29 : vector<3x512x256xf32>
    %c0_14 = arith.constant 0 : index
    %c0_15 = arith.constant 0 : index
    %c0_16 = arith.constant 0 : index
    %31 = vector.load %arg7[%c0_14, %c0_15, %c0_16] : memref<3x512x1xf32, #tpu.memory_space<vmem>>, vector<3x512x1xf32>
    %32 = vector.broadcast %31 : vector<3x512x1xf32> to vector<3x512x256xf32>
    %33 = arith.addf %30, %32 : vector<3x512x256xf32>
    %cst_17 = arith.constant 0.000000e+00 : f32
    %34 = vector.broadcast %cst_17 : f32 to vector<3x512x256xf32>
    %35 = arith.maximumf %33, %34 : vector<3x512x256xf32>
    %c0_18 = arith.constant 0 : index
    %c0_19 = arith.constant 0 : index
    %36 = vector.load %arg8[%c0_18, %c0_19] : memref<2x512xf32, #tpu.memory_space<vmem>>, vector<2x512xf32>
    %cst_20 = arith.constant dense<0.000000e+00> : vector<2x256xf32>
    %37 = tpu.matmul %36, %25, %cst_20 {dimension_numbers = #tpu.dot_dimension_numbers<[1], [0], [0], [1], [0, 0, 1, 1], [], []>} : vector<2x512xf32>, vector<512x256xf32>, vector<2x256xf32> -> vector<2x256xf32>
    %c0_21 = arith.constant 0 : index
    %c0_22 = arith.constant 0 : index
    %38 = vector.load %arg9[%c0_21, %c0_22] : memref<6x1536xf32, #tpu.memory_space<vmem>>, vector<6x1536xf32>
    %39 = vector.shape_cast %35 : vector<3x512x256xf32> to vector<1536x256xf32>
    %cst_23 = arith.constant dense<0.000000e+00> : vector<6x256xf32>
    %40 = tpu.matmul %38, %39, %cst_23 {dimension_numbers = #tpu.dot_dimension_numbers<[1], [0], [0], [1], [0, 0, 1, 1], [], []>} : vector<6x1536xf32>, vector<1536x256xf32>, vector<6x256xf32> -> vector<6x256xf32>
    %41 = tpu.concatenate %37, %40 in 0 : vector<2x256xf32>, vector<6x256xf32> -> vector<8x256xf32>
    %c0_24 = arith.constant 0 : index
    %c0_25 = arith.constant 0 : index
    %42 = vector.load %arg10[%c0_24, %c0_25] : memref<8x1xf32, #tpu.memory_space<vmem>>, vector<8x1xf32>
    %43 = vector.broadcast %42 : vector<8x1xf32> to vector<8x256xf32>
    %44 = arith.addf %41, %43 : vector<8x256xf32>
    %c0_26 = arith.constant 0 : index
    %c0_27 = arith.constant 0 : index
    %c0_28 = arith.constant 0 : index
    %45 = vector.load %arg11[%c0_26, %c0_27, %c0_28] : memref<1x8x256xf32, #tpu.memory_space<vmem>>, vector<1x8x256xf32>
    %46 = vector.shape_cast %45 : vector<1x8x256xf32> to vector<8x256xf32>
    %47 = vector.shape_cast %44 : vector<8x256xf32> to vector<1x8x256xf32>
    tpu.vector_store %arg11[%c0_26, %c0_27, %c0_28], %47 {strides = array<i32>} : memref<1x8x256xf32, #tpu.memory_space<vmem>>, vector<1x8x256xf32>,
    return
  }
  func.func @transform_0(%arg0: i32, %arg1: i32) -> (i32, i32, i32) {
    %c0_i32 = arith.constant 0 : i32
    %c0_i32_0 = arith.constant 0 : i32
    return %arg0, %c0_i32, %arg1 : i32, i32, i32
  }
  func.func @transform_1(%arg0: i32, %arg1: i32) -> (i32, i32) {
    %c0_i32 = arith.constant 0 : i32
    %c0_i32_0 = arith.constant 0 : i32
    %c0_i32_1 = arith.constant 0 : i32
    return %c0_i32, %c0_i32_0 : i32, i32
  }
  func.func @transform_2(%arg0: i32, %arg1: i32) -> (i32, i32) {
    %c0_i32 = arith.constant 0 : i32
    %c0_i32_0 = arith.constant 0 : i32
    %c0_i32_1 = arith.constant 0 : i32
    return %c0_i32, %c0_i32_0 : i32, i32
  }
  func.func @transform_3(%arg0: i32, %arg1: i32) -> (i32, i32) {
    %c0_i32 = arith.constant 0 : i32
    %c0_i32_0 = arith.constant 0 : i32
    %c0_i32_1 = arith.constant 0 : i32
    return %c0_i32, %c0_i32_0 : i32, i32
  }
  func.func @transform_4(%arg0: i32, %arg1: i32) -> (i32, i32) {
    %c0_i32 = arith.constant 0 : i32
    %c0_i32_0 = arith.constant 0 : i32
    %c0_i32_1 = arith.constant 0 : i32
    return %c0_i32, %c0_i32_0 : i32, i32
  }
  func.func @transform_5(%arg0: i32, %arg1: i32) -> (i32, i32, i32) {
    %c0_i32 = arith.constant 0 : i32
    %c0_i32_0 = arith.constant 0 : i32
    %c0_i32_1 = arith.constant 0 : i32
    %c0_i32_2 = arith.constant 0 : i32
    return %c0_i32, %c0_i32_0, %c0_i32_1 : i32, i32, i32
  }
  func.func @transform_6(%arg0: i32, %arg1: i32) -> (i32, i32) {
    %c0_i32 = arith.constant 0 : i32
    %c0_i32_0 = arith.constant 0 : i32
    %c0_i32_1 = arith.constant 0 : i32
    return %c0_i32, %c0_i32_0 : i32, i32
  }
  func.func @transform_7(%arg0: i32, %arg1: i32) -> (i32, i32) {
    %c0_i32 = arith.constant 0 : i32
    %c0_i32_0 = arith.constant 0 : i32
    %c0_i32_1 = arith.constant 0 : i32
    return %c0_i32, %c0_i32_0 : i32, i32
  }
  func.func @transform_8(%arg0: i32, %arg1: i32) -> (i32, i32) {
    %c0_i32 = arith.constant 0 : i32
    %c0_i32_0 = arith.constant 0 : i32
    %c0_i32_1 = arith.constant 0 : i32
    return %c0_i32, %c0_i32_0 : i32, i32
  }
  func.func @transform_9(%arg0: i32, %arg1: i32) -> (i32, i32, i32) {
    %c0_i32 = arith.constant 0 : i32
    %c0_i32_0 = arith.constant 0 : i32
    return %arg0, %c0_i32, %arg1 : i32, i32, i32
  }
}

</mosaic_0001>

<llo_original>
// kernel: imageda_forward.1
$region0: #{imageda_forward.1}
  #allocation0 [shape = 'u32[]', space=smem, size = 0x4, offset = 0x4, fixed_abs, tag = 'smem constant byte address 0x4 - core index']
  #allocation1 [shape = 'u32[144,128]{1,0:T(1,128)}', space=vmem, size = 0x12000, scoped, tag = 'internal scratch']
  %s0 = inlined_call_operand.vmem [shape: f32[2,4,256], index: 0, kind: input, shape index: {}]
  %s1 = inlined_call_operand.vmem [shape: f32[2048,4], index: 1, kind: input, shape index: {}]
  %s2 = inlined_call_operand.vmem [shape: f32[8,4], index: 2, kind: input, shape index: {}]
  %s3 = inlined_call_operand.vmem [shape: f32[3,1], index: 3, kind: input, shape index: {}]
  %s4 = inlined_call_operand.vmem [shape: f32[512,1], index: 4, kind: input, shape index: {}]
  %s5 = inlined_call_operand.vmem [shape: f32[3,512,1], index: 5, kind: input, shape index: {}]
  %s6 = inlined_call_operand.vmem [shape: f32[2,512], index: 6, kind: input, shape index: {}]
  %s7 = inlined_call_operand.vmem [shape: f32[6,1536], index: 7, kind: input, shape index: {}]
  %s8 = inlined_call_operand.vmem [shape: f32[8,1], index: 8, kind: input, shape index: {}]
  %s9 = inlined_call_operand.vmem [shape: f32[2,8,256], index: 9, kind: output, shape index: {}]
  %s10 = sld [smem:[#allocation0]]
  $region69: #{imageda_forward.1} parent=0
    _
  %s12 = ssub.s32 1, %s10
  %s13 = scalar_select 0, %s12, %s10
  loop: start=0, step=1, limit=4
  $region2: #{imageda_forward.1} parent=0 // loop_pre_header
    _
  $region3: #{imageda_forward.1} parent=0 // loop_header
    %s15 = sphi 0, %s19
    %p16 = scmp.ge.s32.totalorder %s15, 4
    %s22 = sphi 0, %s34
    %s23 = sphi 0, %s30
    %s24 = sphi 0, %s22
    %s25 = sphi 0, %s23
    %s26 = sphi 0, %s24
    %s27 = sphi 0, %s25
    %s39 = sphi 0, %s41
    %s42 = sphi 0, %s39
    %s43 = sphi 0, %s42
    %s59 = sphi 0, %s43
    %s63 = sphi 0, %s63
    %s65 = sphi 0, %s63
    %s66 = sphi 0, %s65
    %s80 = sphi 0, %s66
    %s84 = sphi 0, %s84
    %s86 = sphi 0, %s84
    %s87 = sphi 0, %s86
    %s101 = sphi 0, %s87
    %s105 = sphi 0, %s105
    %s107 = sphi 0, %s105
    %s108 = sphi 0, %s107
    %s122 = sphi 0, %s108
    %s126 = sphi 0, %s126
    %s128 = sphi 0, %s126
    %s129 = sphi 0, %s128
    %s143 = sphi 0, %s129
    %s147 = sphi 0, %s147
    %s149 = sphi 0, %s147
    %s150 = sphi 0, %s149
    %s164 = sphi 0, %s150
    %s168 = sphi 0, %s168
    %s170 = sphi 0, %s168
    %s171 = sphi 0, %s170
    %s185 = sphi 0, %s171
    %s189 = sphi 0, %s189
    %s191 = sphi 0, %s189
    %s192 = sphi 0, %s191
    %s206 = sphi 0, %s192
    %s210 = sphi 0, %s210
    %s212 = sphi 0, %s210
    %s213 = sphi 0, %s212
    %s227 = sphi 0, %s213
    %s235 = sphi 0, %s237
    %s238 = sphi 0, %s235
    %s239 = sphi 0, %s238
    %s255 = sphi 0, %s239
  $region4: #{imageda_forward.1} parent=0 // loop_header_branch
    %18 = sbr.rel (%p16) target = $region8
  $region5: #{imageda_forward.1} parent=0 // loop_body
    %s20 = ssub.s32 %s15, 1
    %s21 = ssub.s32 %s15, 2
    %s28 = sadd.s32 1, %s23
    %p29 = scmp.ge.s32.totalorder %s28, 1
    %s30 = scalar_select %p29, 0, %s28
    %s31 = sadd.s32 1, %s22
    %s32 = scalar_select %p29, %s31, %s22
    %p33 = scmp.ge.s32.totalorder %s32, 2
    %s34 = scalar_select %p33, 0, %s32
    %s35 = ssub.s32 %s22, %s34
    %s36 = ssub.s32 %s23, %s30
    %s37 = sor.u32 %s35, %s36
    %p38 = scmp.eq.s32.totalorder %s37, 0
    %s40 = sadd.s32 %s39, 1
    %s41 = scalar_select %p38, %s39, %s40
    %p44 = pneg %p38
    %p45 = scmp.eq.s32.totalorder %s15, 1
    %p46 = por %p44, %p45
    %p47 = scmp.ne.s32.totalorder %s39, %s42
    %p48 = scmp.eq.s32.totalorder %s15, 0
    %p49 = por %p47, %p48
    %p50 = scmp.ne.s32.totalorder %s39, %s42
    %p51 = scmp.eq.s32.totalorder %s20, 1
    %p52 = por %p50, %p51
    %p53 = scmp.ne.s32.totalorder %s42, %s43
    %p54 = scmp.eq.s32.totalorder %s20, 0
    %p55 = por %p53, %p54
    %p56 = scmp.ne.s32.totalorder %s42, %s43
    %p57 = scmp.eq.s32.totalorder %s21, 1
    %p58 = por %p56, %p57
    %p60 = scmp.ne.s32.totalorder %s43, %s59
    %p61 = scmp.eq.s32.totalorder %s21, 0
    %p62 = por %p60, %p61
    %s64 = sadd.s32 %s63, 1
    %p67 = scmp.eq.s32.totalorder %s15, 1
    %p68 = scmp.ne.s32.totalorder %s63, %s65
    %p69 = scmp.eq.s32.totalorder %s15, 0
    %p70 = por %p68, %p69
    %p71 = scmp.ne.s32.totalorder %s63, %s65
    %p72 = scmp.eq.s32.totalorder %s20, 1
    %p73 = por %p71, %p72
    %p74 = scmp.ne.s32.totalorder %s65, %s66
    %p75 = scmp.eq.s32.totalorder %s20, 0
    %p76 = por %p74, %p75
    %p77 = scmp.ne.s32.totalorder %s65, %s66
    %p78 = scmp.eq.s32.totalorder %s21, 1
    %p79 = por %p77, %p78
    %p81 = scmp.ne.s32.totalorder %s66, %s80
    %p82 = scmp.eq.s32.totalorder %s21, 0
    %p83 = por %p81, %p82
    %s85 = sadd.s32 %s84, 1
    %p88 = scmp.eq.s32.totalorder %s15, 1
    %p89 = scmp.ne.s32.totalorder %s84, %s86
    %p90 = scmp.eq.s32.totalorder %s15, 0
    %p91 = por %p89, %p90
    %p92 = scmp.ne.s32.totalorder %s84, %s86
    %p93 = scmp.eq.s32.totalorder %s20, 1
    %p94 = por %p92, %p93
    %p95 = scmp.ne.s32.totalorder %s86, %s87
    %p96 = scmp.eq.s32.totalorder %s20, 0
    %p97 = por %p95, %p96
    %p98 = scmp.ne.s32.totalorder %s86, %s87
    %p99 = scmp.eq.s32.totalorder %s21, 1
    %p100 = por %p98, %p99
    %p102 = scmp.ne.s32.totalorder %s87, %s101
    %p103 = scmp.eq.s32.totalorder %s21, 0
    %p104 = por %p102, %p103
    %s106 = sadd.s32 %s105, 1
    %p109 = scmp.eq.s32.totalorder %s15, 1
    %p110 = scmp.ne.s32.totalorder %s105, %s107
    %p111 = scmp.eq.s32.totalorder %s15, 0
    %p112 = por %p110, %p111
    %p113 = scmp.ne.s32.totalorder %s105, %s107
    %p114 = scmp.eq.s32.totalorder %s20, 1
    %p115 = por %p113, %p114
    %p116 = scmp.ne.s32.totalorder %s107, %s108
    %p117 = scmp.eq.s32.totalorder %s20, 0
    %p118 = por %p116, %p117
    %p119 = scmp.ne.s32.totalorder %s107, %s108
    %p120 = scmp.eq.s32.totalorder %s21, 1
    %p121 = por %p119, %p120
    %p123 = scmp.ne.s32.totalorder %s108, %s122
    %p124 = scmp.eq.s32.totalorder %s21, 0
    %p125 = por %p123, %p124
    %s127 = sadd.s32 %s126, 1
    %p130 = scmp.eq.s32.totalorder %s15, 1
    %p131 = scmp.ne.s32.totalorder %s126, %s128
    %p132 = scmp.eq.s32.totalorder %s15, 0
    %p133 = por %p131, %p132
    %p134 = scmp.ne.s32.totalorder %s126, %s128
    %p135 = scmp.eq.s32.totalorder %s20, 1
    %p136 = por %p134, %p135
    %p137 = scmp.ne.s32.totalorder %s128, %s129
    %p138 = scmp.eq.s32.totalorder %s20, 0
    %p139 = por %p137, %p138
    %p140 = scmp.ne.s32.totalorder %s128, %s129
    %p141 = scmp.eq.s32.totalorder %s21, 1
    %p142 = por %p140, %p141
    %p144 = scmp.ne.s32.totalorder %s129, %s143
    %p145 = scmp.eq.s32.totalorder %s21, 0
    %p146 = por %p144, %p145
    %s148 = sadd.s32 %s147, 1
    %p151 = scmp.eq.s32.totalorder %s15, 1
    %p152 = scmp.ne.s32.totalorder %s147, %s149
    %p153 = scmp.eq.s32.totalorder %s15, 0
    %p154 = por %p152, %p153
    %p155 = scmp.ne.s32.totalorder %s147, %s149
    %p156 = scmp.eq.s32.totalorder %s20, 1
    %p157 = por %p155, %p156
    %p158 = scmp.ne.s32.totalorder %s149, %s150
    %p159 = scmp.eq.s32.totalorder %s20, 0
    %p160 = por %p158, %p159
    %p161 = scmp.ne.s32.totalorder %s149, %s150
    %p162 = scmp.eq.s32.totalorder %s21, 1
    %p163 = por %p161, %p162
    %p165 = scmp.ne.s32.totalorder %s150, %s164
    %p166 = scmp.eq.s32.totalorder %s21, 0
    %p167 = por %p165, %p166
    %s169 = sadd.s32 %s168, 1
    %p172 = scmp.eq.s32.totalorder %s15, 1
    %p173 = scmp.ne.s32.totalorder %s168, %s170
    %p174 = scmp.eq.s32.totalorder %s15, 0
    %p175 = por %p173, %p174
    %p176 = scmp.ne.s32.totalorder %s168, %s170
    %p177 = scmp.eq.s32.totalorder %s20, 1
    %p178 = por %p176, %p177
    %p179 = scmp.ne.s32.totalorder %s170, %s171
    %p180 = scmp.eq.s32.totalorder %s20, 0
    %p181 = por %p179, %p180
    %p182 = scmp.ne.s32.totalorder %s170, %s171
    %p183 = scmp.eq.s32.totalorder %s21, 1
    %p184 = por %p182, %p183
    %p186 = scmp.ne.s32.totalorder %s171, %s185
    %p187 = scmp.eq.s32.totalorder %s21, 0
    %p188 = por %p186, %p187
    %s190 = sadd.s32 %s189, 1
    %p193 = scmp.eq.s32.totalorder %s15, 1
    %p194 = scmp.ne.s32.totalorder %s189, %s191
    %p195 = scmp.eq.s32.totalorder %s15, 0
    %p196 = por %p194, %p195
    %p197 = scmp.ne.s32.totalorder %s189, %s191
    %p198 = scmp.eq.s32.totalorder %s20, 1
    %p199 = por %p197, %p198
    %p200 = scmp.ne.s32.totalorder %s191, %s192
    %p201 = scmp.eq.s32.totalorder %s20, 0
    %p202 = por %p200, %p201
    %p203 = scmp.ne.s32.totalorder %s191, %s192
    %p204 = scmp.eq.s32.totalorder %s21, 1
    %p205 = por %p203, %p204
    %p207 = scmp.ne.s32.totalorder %s192, %s206
    %p208 = scmp.eq.s32.totalorder %s21, 0
    %p209 = por %p207, %p208
    %s211 = sadd.s32 %s210, 1
    %p214 = scmp.eq.s32.totalorder %s15, 1
    %p215 = scmp.ne.s32.totalorder %s210, %s212
    %p216 = scmp.eq.s32.totalorder %s15, 0
    %p217 = por %p215, %p216
    %p218 = scmp.ne.s32.totalorder %s210, %s212
    %p219 = scmp.eq.s32.totalorder %s20, 1
    %p220 = por %p218, %p219
    %p221 = scmp.ne.s32.totalorder %s212, %s213
    %p222 = scmp.eq.s32.totalorder %s20, 0
    %p223 = por %p221, %p222
    %p224 = scmp.ne.s32.totalorder %s212, %s213
    %p225 = scmp.eq.s32.totalorder %s21, 1
    %p226 = por %p224, %p225
    %p228 = scmp.ne.s32.totalorder %s213, %s227
    %p229 = scmp.eq.s32.totalorder %s21, 0
    %p230 = por %p228, %p229
    %s231 = ssub.s32 %s22, %s34
    %s232 = ssub.s32 %s23, %s30
    %s233 = sor.u32 %s231, %s232
    %p234 = scmp.eq.s32.totalorder %s233, 0
    %s236 = sadd.s32 %s235, 1
    %s237 = scalar_select %p234, %s235, %s236
    %p240 = pneg %p234
    %p241 = scmp.eq.s32.totalorder %s15, 1
    %p242 = por %p240, %p241
    %p243 = scmp.ne.s32.totalorder %s235, %s238
    %p244 = scmp.eq.s32.totalorder %s15, 0
    %p245 = por %p243, %p244
    %p246 = scmp.ne.s32.totalorder %s235, %s238
    %p247 = scmp.eq.s32.totalorder %s20, 1
    %p248 = por %p246, %p247
    %p249 = scmp.ne.s32.totalorder %s238, %s239
    %p250 = scmp.eq.s32.totalorder %s20, 0
    %p251 = por %p249, %p250
    %p252 = scmp.ne.s32.totalorder %s238, %s239
    %p253 = scmp.eq.s32.totalorder %s21, 1
    %p254 = por %p252, %p253
    %p256 = scmp.ne.s32.totalorder %s239, %s255
    %p257 = scmp.eq.s32.totalorder %s21, 0
    %p258 = por %p256, %p257
    %p259 = scmp.le.s32.totalorder 1, %s15
    %p260 = scmp.lt.s32.totalorder %s15, 3
    %p261 = pnand %p259, %p260
    %p262 = pneg %p261
    // Predicated region
    $region9: #{imageda_forward.1} parent=5 // pred_check
      _
    $region10: #{imageda_forward.1} parent=5 // pred_check_branch
      %264 = sbr.rel (%p261) target = $region12
    $region11: #{imageda_forward.1} parent=5 // pred_region
      %s265 = ssub.s32 %s15, 1
      // Predicated region
      $region13: #{imageda_forward.1} parent=11 // pred_check
        %p266 = pneg %p76
      $region14: #{imageda_forward.1} parent=11 // pred_check_branch
        %268 = sbr.rel (%p266) target = $region16
      $region15: #{imageda_forward.1} parent=11 // pred_region
        _
      $region16: #{imageda_forward.1} parent=11 // pred_fallthru
        _
      // Predicated region
      $region17: #{imageda_forward.1} parent=11 // pred_check
        %p269 = pneg %p97
      $region18: #{imageda_forward.1} parent=11 // pred_check_branch
        %271 = sbr.rel (%p269) target = $region20
      $region19: #{imageda_forward.1} parent=11 // pred_region
        _
      $region20: #{imageda_forward.1} parent=11 // pred_fallthru
        _
      // Predicated region
      $region21: #{imageda_forward.1} parent=11 // pred_check
        %p272 = pneg %p118
      $region22: #{imageda_forward.1} parent=11 // pred_check_branch
        %274 = sbr.rel (%p272) target = $region24
      $region23: #{imageda_forward.1} parent=11 // pred_region
        _
      $region24: #{imageda_forward.1} parent=11 // pred_fallthru
        _
      // Predicated region
      $region25: #{imageda_forward.1} parent=11 // pred_check
        %p275 = pneg %p139
      $region26: #{imageda_forward.1} parent=11 // pred_check_branch
        %277 = sbr.rel (%p275) target = $region28
      $region27: #{imageda_forward.1} parent=11 // pred_region
        _
      $region28: #{imageda_forward.1} parent=11 // pred_fallthru
        _
      // Predicated region
      $region29: #{imageda_forward.1} parent=11 // pred_check
        %p278 = pneg %p160
      $region30: #{imageda_forward.1} parent=11 // pred_check_branch
        %280 = sbr.rel (%p278) target = $region32
      $region31: #{imageda_forward.1} parent=11 // pred_region
        _
      $region32: #{imageda_forward.1} parent=11 // pred_fallthru
        _
      // Predicated region
      $region33: #{imageda_forward.1} parent=11 // pred_check
        %p281 = pneg %p181
      $region34: #{imageda_forward.1} parent=11 // pred_check_branch
        %283 = sbr.rel (%p281) target = $region36
      $region35: #{imageda_forward.1} parent=11 // pred_region
        _
      $region36: #{imageda_forward.1} parent=11 // pred_fallthru
        _
      // Predicated region
      $region37: #{imageda_forward.1} parent=11 // pred_check
        %p284 = pneg %p202
      $region38: #{imageda_forward.1} parent=11 // pred_check_branch
        %286 = sbr.rel (%p284) target = $region40
      $region39: #{imageda_forward.1} parent=11 // pred_region
        _
      $region40: #{imageda_forward.1} parent=11 // pred_fallthru
        _
      // Predicated region
      $region41: #{imageda_forward.1} parent=11 // pred_check
        %p287 = pneg %p223
      $region42: #{imageda_forward.1} parent=11 // pred_check_branch
        %289 = sbr.rel (%p287) target = $region44
      $region43: #{imageda_forward.1} parent=11 // pred_region
        _
      $region44: #{imageda_forward.1} parent=11 // pred_fallthru
        _
    $region12: #{imageda_forward.1} parent=5 // pred_fallthru
      _
    %p290 = scmp.lt.s32.totalorder %s15, 2
    // Predicated region
    $region45: #{imageda_forward.1} parent=5 // pred_check
      %p291 = pneg %p290
    $region46: #{imageda_forward.1} parent=5 // pred_check_branch
      %293 = sbr.rel (%p291) target = $region48
    $region47: #{imageda_forward.1} parent=5 // pred_region
      // Predicated region
      $region49: #{imageda_forward.1} parent=47 // pred_check
        %p294 = pneg %p49
      $region50: #{imageda_forward.1} parent=47 // pred_check_branch
        %296 = sbr.rel (%p294) target = $region52
      $region51: #{imageda_forward.1} parent=47 // pred_region
        %s297 = smul.u32 2, %s23
        %p298 = scmp.lt.s32.totalorder %s22, 1
        %s299 = scalar_select %p298, %s22, 1
        %p300 = scmp.lt.s32.totalorder %s297, 1
        %s301 = scalar_select %p300, %s297, 1
        %s302 = smul.addr %s299, 2
        %s303 = sadd.s32 %s301, %s302
        %s304 = smul.addr %s303, 4
        %s305 = scalar_lea.vmem %s0, %s304
        %s306 = smul.u32 2, %s23
      $region52: #{imageda_forward.1} parent=47 // pred_fallthru
        _
    $region48: #{imageda_forward.1} parent=5 // pred_fallthru
      _
    %p307 = scmp.le.s32.totalorder 1, %s15
    %p308 = scmp.lt.s32.totalorder %s15, 3
    %p309 = pnand %p307, %p308
    %p310 = pneg %p309
    // Predicated region
    $region53: #{imageda_forward.1} parent=5 // pred_check
      _
    $region54: #{imageda_forward.1} parent=5 // pred_check_branch
      %312 = sbr.rel (%p309) target = $region56
    $region55: #{imageda_forward.1} parent=5 // pred_region
      %s313 = ssub.s32 %s15, 1
      %s314 = smul.u32 2, %s25
      %p315 = scmp.lt.s32.totalorder %s24, 1
      %s316 = scalar_select %p315, %s24, 1
      %p317 = scmp.lt.s32.totalorder %s314, 1
      %s318 = scalar_select %p317, %s314, 1
      %s319 = smul.addr %s316, 2
      %s320 = sadd.s32 %s318, %s319
      %s321 = smul.addr %s320, 4
      %s322 = scalar_lea.vmem %s0, %s321
      %p323 = pneg %p55
      %p324 = pneg %p52
      %p325 = pneg %p76
      %p326 = pneg %p73
      %p327 = pneg %p97
      %p328 = pneg %p94
      %p329 = pneg %p118
      %p330 = pneg %p115
      %p331 = pneg %p139
      %p332 = pneg %p136
      %p333 = pneg %p160
      %p334 = pneg %p157
      %p335 = pneg %p181
      %p336 = pneg %p178
      %p337 = pneg %p202
      %p338 = pneg %p199
      %p339 = pneg %p223
      %p340 = pneg %p220
      %p341 = pneg %p251
      %p342 = pneg %p248
      %s343 = smul.u32 2, %s25
      %p344 = scmp.lt.s32.totalorder %s24, 1
      %s345 = scalar_select %p344, %s24, 1
      %p346 = scmp.lt.s32.totalorder %s343, 1
      %s347 = scalar_select %p346, %s343, 1
      %s348 = smul.addr %s345, 2
      %s349 = sadd.s32 %s347, %s348
      %s350 = smul.addr %s349, 8
      %s351 = scalar_lea.vmem %s9, %s350
      %s352 = smul.u32 2, %s25
      %p353 = scmp.lt.s32.totalorder %s24, 1
      %s354 = scalar_select %p353, %s24, 1
      %p355 = scmp.lt.s32.totalorder %s352, 1
      %s356 = scalar_select %p355, %s352, 1
      %s357 = smul.addr %s354, 2
      %s358 = sadd.s32 %s356, %s357
      %s359 = smul.addr %s358, 4
      %s360 = scalar_lea.vmem %s0, %s359
      %s361 = smul.u32 2, %s25
      %s362 = smul.u32 2, %s25
      %p363 = scmp.lt.s32.totalorder %s24, 1
      %s364 = scalar_select %p363, %s24, 1
      %p365 = scmp.lt.s32.totalorder %s362, 1
      %s366 = scalar_select %p365, %s362, 1
      %s367 = smul.addr %s364, 2
      %s368 = sadd.s32 %s366, %s367
      %s369 = smul.addr %s368, 8
      %s370 = scalar_lea.vmem %s9, %s369
      %s371 = smul.u32 2, %s25
      %v372 = vld [vmem:[%s360] sm:$0xff]
      %v373 = vld [vmem:[%s1] sm:$0xff]
      %v374 = vld [vmem:[%s1 + $0x8] sm:$0xff]
      %v375 = vld [vmem:[%s1 + $0x10] sm:$0xff]
      %v376 = vld [vmem:[%s1 + $0x18] sm:$0xff]
      %v377 = vld [vmem:[%s1 + $0x20] sm:$0xff]
      %v378 = vld [vmem:[%s1 + $0x28] sm:$0xff]
      %v379 = vld [vmem:[%s1 + $0x30] sm:$0xff]
      %v380 = vld [vmem:[%s1 + $0x38] sm:$0xff]
      %v381 = vld [vmem:[%s1 + $0x40] sm:$0xff]
      %v382 = vld [vmem:[%s1 + $0x48] sm:$0xff]
      %v383 = vld [vmem:[%s1 + $0x50] sm:$0xff]
      %v384 = vld [vmem:[%s1 + $0x58] sm:$0xff]
      %v385 = vld [vmem:[%s1 + $0x60] sm:$0xff]
      %v386 = vld [vmem:[%s1 + $0x68] sm:$0xff]
      %v387 = vld [vmem:[%s1 + $0x70] sm:$0xff]
      %v388 = vld [vmem:[%s1 + $0x78] sm:$0xff]
      %v389 = vld [vmem:[%s1 + $0x80] sm:$0xff]
      %v390 = vld [vmem:[%s1 + $0x88] sm:$0xff]
      %v391 = vld [vmem:[%s1 + $0x90] sm:$0xff]
      %v392 = vld [vmem:[%s1 + $0x98] sm:$0xff]
      %v393 = vld [vmem:[%s1 + $0xa0] sm:$0xff]
      %v394 = vld [vmem:[%s1 + $0xa8] sm:$0xff]
      %v395 = vld [vmem:[%s1 + $0xb0] sm:$0xff]
      %v396 = vld [vmem:[%s1 + $0xb8] sm:$0xff]
      %v397 = vld [vmem:[%s1 + $0xc0] sm:$0xff]
      %v398 = vld [vmem:[%s1 + $0xc8] sm:$0xff]
      %v399 = vld [vmem:[%s1 + $0xd0] sm:$0xff]
      %v400 = vld [vmem:[%s1 + $0xd8] sm:$0xff]
      %v401 = vld [vmem:[%s1 + $0xe0] sm:$0xff]
      %v402 = vld [vmem:[%s1 + $0xe8] sm:$0xff]
      %v403 = vld [vmem:[%s1 + $0xf0] sm:$0xff]
      %v404 = vld [vmem:[%s1 + $0xf8] sm:$0xff]
      %v405 = vld [vmem:[%s1 + $0x100] sm:$0xff]
      %v406 = vld [vmem:[%s1 + $0x108] sm:$0xff]
      %v407 = vld [vmem:[%s1 + $0x110] sm:$0xff]
      %v408 = vld [vmem:[%s1 + $0x118] sm:$0xff]
      %v409 = vld [vmem:[%s1 + $0x120] sm:$0xff]
      %v410 = vld [vmem:[%s1 + $0x128] sm:$0xff]
      %v411 = vld [vmem:[%s1 + $0x130] sm:$0xff]
      %v412 = vld [vmem:[%s1 + $0x138] sm:$0xff]
      %v413 = vld [vmem:[%s1 + $0x140] sm:$0xff]
      %v414 = vld [vmem:[%s1 + $0x148] sm:$0xff]
      %v415 = vld [vmem:[%s1 + $0x150] sm:$0xff]
      %v416 = vld [vmem:[%s1 + $0x158] sm:$0xff]
      %v417 = vld [vmem:[%s1 + $0x160] sm:$0xff]
      %v418 = vld [vmem:[%s1 + $0x168] sm:$0xff]
      %v419 = vld [vmem:[%s1 + $0x170] sm:$0xff]
      %v420 = vld [vmem:[%s1 + $0x178] sm:$0xff]
      %v421 = vld [vmem:[%s1 + $0x180] sm:$0xff]
      %v422 = vld [vmem:[%s1 + $0x188] sm:$0xff]
      %v423 = vld [vmem:[%s1 + $0x190] sm:$0xff]
      %v424 = vld [vmem:[%s1 + $0x198] sm:$0xff]
      %v425 = vld [vmem:[%s1 + $0x1a0] sm:$0xff]
      %v426 = vld [vmem:[%s1 + $0x1a8] sm:$0xff]
      %v427 = vld [vmem:[%s1 + $0x1b0] sm:$0xff]
      %v428 = vld [vmem:[%s1 + $0x1b8] sm:$0xff]
      %v429 = vld [vmem:[%s1 + $0x1c0] sm:$0xff]
      %v430 = vld [vmem:[%s1 + $0x1c8] sm:$0xff]
      %v431 = vld [vmem:[%s1 + $0x1d0] sm:$0xff]
      %v432 = vld [vmem:[%s1 + $0x1d8] sm:$0xff]
      %v433 = vld [vmem:[%s1 + $0x1e0] sm:$0xff]
      %v434 = vld [vmem:[%s1 + $0x1e8] sm:$0xff]
      %v435 = vld [vmem:[%s1 + $0x1f0] sm:$0xff]
      %v436 = vld [vmem:[%s1 + $0x1f8] sm:$0xff]
      %v437 = vld [vmem:[%s1 + $0x200] sm:$0xff]
      %v438 = vld [vmem:[%s1 + $0x208] sm:$0xff]
      %v439 = vld [vmem:[%s1 + $0x210] sm:$0xff]
      %v440 = vld [vmem:[%s1 + $0x218] sm:$0xff]
      %v441 = vld [vmem:[%s1 + $0x220] sm:$0xff]
      %v442 = vld [vmem:[%s1 + $0x228] sm:$0xff]
      %v443 = vld [vmem:[%s1 + $0x230] sm:$0xff]
      %v444 = vld [vmem:[%s1 + $0x238] sm:$0xff]
      %v445 = vld [vmem:[%s1 + $0x240] sm:$0xff]
      %v446 = vld [vmem:[%s1 + $0x248] sm:$0xff]
      %v447 = vld [vmem:[%s1 + $0x250] sm:$0xff]
      %v448 = vld [vmem:[%s1 + $0x258] sm:$0xff]
      %v449 = vld [vmem:[%s1 + $0x260] sm:$0xff]
      %v450 = vld [vmem:[%s1 + $0x268] sm:$0xff]
      %v451 = vld [vmem:[%s1 + $0x270] sm:$0xff]
      %v452 = vld [vmem:[%s1 + $0x278] sm:$0xff]
      %v453 = vld [vmem:[%s1 + $0x280] sm:$0xff]
      %v454 = vld [vmem:[%s1 + $0x288] sm:$0xff]
      %v455 = vld [vmem:[%s1 + $0x290] sm:$0xff]
      %v456 = vld [vmem:[%s1 + $0x298] sm:$0xff]
      %v457 = vld [vmem:[%s1 + $0x2a0] sm:$0xff]
      %v458 = vld [vmem:[%s1 + $0x2a8] sm:$0xff]
      %v459 = vld [vmem:[%s1 + $0x2b0] sm:$0xff]
      %v460 = vld [vmem:[%s1 + $0x2b8] sm:$0xff]
      %v461 = vld [vmem:[%s1 + $0x2c0] sm:$0xff]
      %v462 = vld [vmem:[%s1 + $0x2c8] sm:$0xff]
      %v463 = vld [vmem:[%s1 + $0x2d0] sm:$0xff]
      %v464 = vld [vmem:[%s1 + $0x2d8] sm:$0xff]
      %v465 = vld [vmem:[%s1 + $0x2e0] sm:$0xff]
      %v466 = vld [vmem:[%s1 + $0x2e8] sm:$0xff]
      %v467 = vld [vmem:[%s1 + $0x2f0] sm:$0xff]
      %v468 = vld [vmem:[%s1 + $0x2f8] sm:$0xff]
      %v469 = vld [vmem:[%s1 + $0x300] sm:$0xff]
      %v470 = vld [vmem:[%s1 + $0x308] sm:$0xff]
      %v471 = vld [vmem:[%s1 + $0x310] sm:$0xff]
      %v472 = vld [vmem:[%s1 + $0x318] sm:$0xff]
      %v473 = vld [vmem:[%s1 + $0x320] sm:$0xff]
      %v474 = vld [vmem:[%s1 + $0x328] sm:$0xff]
      %v475 = vld [vmem:[%s1 + $0x330] sm:$0xff]
      %v476 = vld [vmem:[%s1 + $0x338] sm:$0xff]
      %v477 = vld [vmem:[%s1 + $0x340] sm:$0xff]
      %v478 = vld [vmem:[%s1 + $0x348] sm:$0xff]
      %v479 = vld [vmem:[%s1 + $0x350] sm:$0xff]
      %v480 = vld [vmem:[%s1 + $0x358] sm:$0xff]
      %v481 = vld [vmem:[%s1 + $0x360] sm:$0xff]
      %v482 = vld [vmem:[%s1 + $0x368] sm:$0xff]
      %v483 = vld [vmem:[%s1 + $0x370] sm:$0xff]
      %v484 = vld [vmem:[%s1 + $0x378] sm:$0xff]
      %v485 = vld [vmem:[%s1 + $0x380] sm:$0xff]
      %v486 = vld [vmem:[%s1 + $0x388] sm:$0xff]
      %v487 = vld [vmem:[%s1 + $0x390] sm:$0xff]
      %v488 = vld [vmem:[%s1 + $0x398] sm:$0xff]
      %v489 = vld [vmem:[%s1 + $0x3a0] sm:$0xff]
      %v490 = vld [vmem:[%s1 + $0x3a8] sm:$0xff]
      %v491 = vld [vmem:[%s1 + $0x3b0] sm:$0xff]
      %v492 = vld [vmem:[%s1 + $0x3b8] sm:$0xff]
      %v493 = vld [vmem:[%s1 + $0x3c0] sm:$0xff]
      %v494 = vld [vmem:[%s1 + $0x3c8] sm:$0xff]
      %v495 = vld [vmem:[%s1 + $0x3d0] sm:$0xff]
      %v496 = vld [vmem:[%s1 + $0x3d8] sm:$0xff]
      %v497 = vld [vmem:[%s1 + $0x3e0] sm:$0xff]
      %v498 = vld [vmem:[%s1 + $0x3e8] sm:$0xff]
      %v499 = vld [vmem:[%s1 + $0x3f0] sm:$0xff]
      %v500 = vld [vmem:[%s1 + $0x3f8] sm:$0xff]
      %v501 = vld [vmem:[%s1 + $0x400] sm:$0xff]
      %v502 = vld [vmem:[%s1 + $0x408] sm:$0xff]
      %v503 = vld [vmem:[%s1 + $0x410] sm:$0xff]
      %v504 = vld [vmem:[%s1 + $0x418] sm:$0xff]
      %v505 = vld [vmem:[%s1 + $0x420] sm:$0xff]
      %v506 = vld [vmem:[%s1 + $0x428] sm:$0xff]
      %v507 = vld [vmem:[%s1 + $0x430] sm:$0xff]
      %v508 = vld [vmem:[%s1 + $0x438] sm:$0xff]
      %v509 = vld [vmem:[%s1 + $0x440] sm:$0xff]
      %v510 = vld [vmem:[%s1 + $0x448] sm:$0xff]
      %v511 = vld [vmem:[%s1 + $0x450] sm:$0xff]
      %v512 = vld [vmem:[%s1 + $0x458] sm:$0xff]
      %v513 = vld [vmem:[%s1 + $0x460] sm:$0xff]
      %v514 = vld [vmem:[%s1 + $0x468] sm:$0xff]
      %v515 = vld [vmem:[%s1 + $0x470] sm:$0xff]
      %v516 = vld [vmem:[%s1 + $0x478] sm:$0xff]
      %v517 = vld [vmem:[%s1 + $0x480] sm:$0xff]
      %v518 = vld [vmem:[%s1 + $0x488] sm:$0xff]
      %v519 = vld [vmem:[%s1 + $0x490] sm:$0xff]
      %v520 = vld [vmem:[%s1 + $0x498] sm:$0xff]
      %v521 = vld [vmem:[%s1 + $0x4a0] sm:$0xff]
      %v522 = vld [vmem:[%s1 + $0x4a8] sm:$0xff]
      %v523 = vld [vmem:[%s1 + $0x4b0] sm:$0xff]
      %v524 = vld [vmem:[%s1 + $0x4b8] sm:$0xff]
      %v525 = vld [vmem:[%s1 + $0x4c0] sm:$0xff]
      %v526 = vld [vmem:[%s1 + $0x4c8] sm:$0xff]
      %v527 = vld [vmem:[%s1 + $0x4d0] sm:$0xff]
      %v528 = vld [vmem:[%s1 + $0x4d8] sm:$0xff]
      %v529 = vld [vmem:[%s1 + $0x4e0] sm:$0xff]
      %v530 = vld [vmem:[%s1 + $0x4e8] sm:$0xff]
      %v531 = vld [vmem:[%s1 + $0x4f0] sm:$0xff]
      %v532 = vld [vmem:[%s1 + $0x4f8] sm:$0xff]
      %v533 = vld [vmem:[%s1 + $0x500] sm:$0xff]
      %v534 = vld [vmem:[%s1 + $0x508] sm:$0xff]
      %v535 = vld [vmem:[%s1 + $0x510] sm:$0xff]
      %v536 = vld [vmem:[%s1 + $0x518] sm:$0xff]
      %v537 = vld [vmem:[%s1 + $0x520] sm:$0xff]
      %v538 = vld [vmem:[%s1 + $0x528] sm:$0xff]
      %v539 = vld [vmem:[%s1 + $0x530] sm:$0xff]
      %v540 = vld [vmem:[%s1 + $0x538] sm:$0xff]
      %v541 = vld [vmem:[%s1 + $0x540] sm:$0xff]
      %v542 = vld [vmem:[%s1 + $0x548] sm:$0xff]
      %v543 = vld [vmem:[%s1 + $0x550] sm:$0xff]
      %v544 = vld [vmem:[%s1 + $0x558] sm:$0xff]
      %v545 = vld [vmem:[%s1 + $0x560] sm:$0xff]
      %v546 = vld [vmem:[%s1 + $0x568] sm:$0xff]
      %v547 = vld [vmem:[%s1 + $0x570] sm:$0xff]
      %v548 = vld [vmem:[%s1 + $0x578] sm:$0xff]
      %v549 = vld [vmem:[%s1 + $0x580] sm:$0xff]
      %v550 = vld [vmem:[%s1 + $0x588] sm:$0xff]
      %v551 = vld [vmem:[%s1 + $0x590] sm:$0xff]
      %v552 = vld [vmem:[%s1 + $0x598] sm:$0xff]
      %v553 = vld [vmem:[%s1 + $0x5a0] sm:$0xff]
      %v554 = vld [vmem:[%s1 + $0x5a8] sm:$0xff]
      %v555 = vld [vmem:[%s1 + $0x5b0] sm:$0xff]
      %v556 = vld [vmem:[%s1 + $0x5b8] sm:$0xff]
      %v557 = vld [vmem:[%s1 + $0x5c0] sm:$0xff]
      %v558 = vld [vmem:[%s1 + $0x5c8] sm:$0xff]
      %v559 = vld [vmem:[%s1 + $0x5d0] sm:$0xff]
      %v560 = vld [vmem:[%s1 + $0x5d8] sm:$0xff]
      %v561 = vld [vmem:[%s1 + $0x5e0] sm:$0xff]
      %v562 = vld [vmem:[%s1 + $0x5e8] sm:$0xff]
      %v563 = vld [vmem:[%s1 + $0x5f0] sm:$0xff]
      %v564 = vld [vmem:[%s1 + $0x5f8] sm:$0xff]
      %v565 = vld [vmem:[%s1 + $0x600] sm:$0xff]
      %v566 = vld [vmem:[%s1 + $0x608] sm:$0xff]
      %v567 = vld [vmem:[%s1 + $0x610] sm:$0xff]
      %v568 = vld [vmem:[%s1 + $0x618] sm:$0xff]
      %v569 = vld [vmem:[%s1 + $0x620] sm:$0xff]
      %v570 = vld [vmem:[%s1 + $0x628] sm:$0xff]
      %v571 = vld [vmem:[%s1 + $0x630] sm:$0xff]
      %v572 = vld [vmem:[%s1 + $0x638] sm:$0xff]
      %v573 = vld [vmem:[%s1 + $0x640] sm:$0xff]
      %v574 = vld [vmem:[%s1 + $0x648] sm:$0xff]
      %v575 = vld [vmem:[%s1 + $0x650] sm:$0xff]
      %v576 = vld [vmem:[%s1 + $0x658] sm:$0xff]
      %v577 = vld [vmem:[%s1 + $0x660] sm:$0xff]
      %v578 = vld [vmem:[%s1 + $0x668] sm:$0xff]
      %v579 = vld [vmem:[%s1 + $0x670] sm:$0xff]
      %v580 = vld [vmem:[%s1 + $0x678] sm:$0xff]
      %v581 = vld [vmem:[%s1 + $0x680] sm:$0xff]
      %v582 = vld [vmem:[%s1 + $0x688] sm:$0xff]
      %v583 = vld [vmem:[%s1 + $0x690] sm:$0xff]
      %v584 = vld [vmem:[%s1 + $0x698] sm:$0xff]
      %v585 = vld [vmem:[%s1 + $0x6a0] sm:$0xff]
      %v586 = vld [vmem:[%s1 + $0x6a8] sm:$0xff]
      %v587 = vld [vmem:[%s1 + $0x6b0] sm:$0xff]
      %v588 = vld [vmem:[%s1 + $0x6b8] sm:$0xff]
      %v589 = vld [vmem:[%s1 + $0x6c0] sm:$0xff]
      %v590 = vld [vmem:[%s1 + $0x6c8] sm:$0xff]
      %v591 = vld [vmem:[%s1 + $0x6d0] sm:$0xff]
      %v592 = vld [vmem:[%s1 + $0x6d8] sm:$0xff]
      %v593 = vld [vmem:[%s1 + $0x6e0] sm:$0xff]
      %v594 = vld [vmem:[%s1 + $0x6e8] sm:$0xff]
      %v595 = vld [vmem:[%s1 + $0x6f0] sm:$0xff]
      %v596 = vld [vmem:[%s1 + $0x6f8] sm:$0xff]
      %v597 = vld [vmem:[%s1 + $0x700] sm:$0xff]
      %v598 = vld [vmem:[%s1 + $0x708] sm:$0xff]
      %v599 = vld [vmem:[%s1 + $0x710] sm:$0xff]
      %v600 = vld [vmem:[%s1 + $0x718] sm:$0xff]
      %v601 = vld [vmem:[%s1 + $0x720] sm:$0xff]
      %v602 = vld [vmem:[%s1 + $0x728] sm:$0xff]
      %v603 = vld [vmem:[%s1 + $0x730] sm:$0xff]
      %v604 = vld [vmem:[%s1 + $0x738] sm:$0xff]
      %v605 = vld [vmem:[%s1 + $0x740] sm:$0xff]
      %v606 = vld [vmem:[%s1 + $0x748] sm:$0xff]
      %v607 = vld [vmem:[%s1 + $0x750] sm:$0xff]
      %v608 = vld [vmem:[%s1 + $0x758] sm:$0xff]
      %v609 = vld [vmem:[%s1 + $0x760] sm:$0xff]
      %v610 = vld [vmem:[%s1 + $0x768] sm:$0xff]
      %v611 = vld [vmem:[%s1 + $0x770] sm:$0xff]
      %v612 = vld [vmem:[%s1 + $0x778] sm:$0xff]
      %v613 = vld [vmem:[%s1 + $0x780] sm:$0xff]
      %v614 = vld [vmem:[%s1 + $0x788] sm:$0xff]
      %v615 = vld [vmem:[%s1 + $0x790] sm:$0xff]
      %v616 = vld [vmem:[%s1 + $0x798] sm:$0xff]
      %v617 = vld [vmem:[%s1 + $0x7a0] sm:$0xff]
      %v618 = vld [vmem:[%s1 + $0x7a8] sm:$0xff]
      %v619 = vld [vmem:[%s1 + $0x7b0] sm:$0xff]
      %v620 = vld [vmem:[%s1 + $0x7b8] sm:$0xff]
      %v621 = vld [vmem:[%s1 + $0x7c0] sm:$0xff]
      %v622 = vld [vmem:[%s1 + $0x7c8] sm:$0xff]
      %v623 = vld [vmem:[%s1 + $0x7d0] sm:$0xff]
      %v624 = vld [vmem:[%s1 + $0x7d8] sm:$0xff]
      %v625 = vld [vmem:[%s1 + $0x7e0] sm:$0xff]
      %v626 = vld [vmem:[%s1 + $0x7e8] sm:$0xff]
      %v627 = vld [vmem:[%s1 + $0x7f0] sm:$0xff]
      %v628 = vld [vmem:[%s1 + $0x7f8] sm:$0xff]
      %v630 = vcombine.high %v372, %v372
      %vm631 = vcmask 31744
      %v633 = vsel %vm631, %v373, 0
      %v636 = vsel %vm631, %v374, 0
      %v639 = vsel %vm631, %v375, 0
      %v642 = vsel %vm631, %v376, 0
      %v645 = vsel %vm631, %v377, 0
      %v648 = vsel %vm631, %v378, 0
      %v651 = vsel %vm631, %v379, 0
      %v654 = vsel %vm631, %v380, 0
      %v657 = vsel %vm631, %v381, 0
      %v660 = vsel %vm631, %v382, 0
      %v663 = vsel %vm631, %v383, 0
      %v666 = vsel %vm631, %v384, 0
      %v669 = vsel %vm631, %v385, 0
      %v672 = vsel %vm631, %v386, 0
      %v675 = vsel %vm631, %v387, 0
      %v678 = vsel %vm631, %v388, 0
      %v681 = vsel %vm631, %v389, 0
      %v684 = vsel %vm631, %v390, 0
      %v687 = vsel %vm631, %v391, 0
      %v690 = vsel %vm631, %v392, 0
      %v693 = vsel %vm631, %v393, 0
      %v696 = vsel %vm631, %v394, 0
      %v699 = vsel %vm631, %v395, 0
      %v702 = vsel %vm631, %v396, 0
      %v705 = vsel %vm631, %v397, 0
      %v708 = vsel %vm631, %v398, 0
      %v711 = vsel %vm631, %v399, 0
      %v714 = vsel %vm631, %v400, 0
      %v717 = vsel %vm631, %v401, 0
      %v720 = vsel %vm631, %v402, 0
      %v723 = vsel %vm631, %v403, 0
      %v726 = vsel %vm631, %v404, 0
      %v729 = vsel %vm631, %v405, 0
      %v732 = vsel %vm631, %v406, 0
      %v735 = vsel %vm631, %v407, 0
      %v738 = vsel %vm631, %v408, 0
      %v741 = vsel %vm631, %v409, 0
      %v744 = vsel %vm631, %v410, 0
      %v747 = vsel %vm631, %v411, 0
      %v750 = vsel %vm631, %v412, 0
      %v753 = vsel %vm631, %v413, 0
      %v756 = vsel %vm631, %v414, 0
      %v759 = vsel %vm631, %v415, 0
      %v762 = vsel %vm631, %v416, 0
      %v765 = vsel %vm631, %v417, 0
      %v768 = vsel %vm631, %v418, 0
      %v771 = vsel %vm631, %v419, 0
      %v774 = vsel %vm631, %v420, 0
      %v777 = vsel %vm631, %v421, 0
      %v780 = vsel %vm631, %v422, 0
      %v783 = vsel %vm631, %v423, 0
      %v786 = vsel %vm631, %v424, 0
      %v789 = vsel %vm631, %v425, 0
      %v792 = vsel %vm631, %v426, 0
      %v795 = vsel %vm631, %v427, 0
      %v798 = vsel %vm631, %v428, 0
      %v801 = vsel %vm631, %v429, 0
      %v804 = vsel %vm631, %v430, 0
      %v807 = vsel %vm631, %v431, 0
      %v810 = vsel %vm631, %v432, 0
      %v813 = vsel %vm631, %v433, 0
      %v816 = vsel %vm631, %v434, 0
      %v819 = vsel %vm631, %v435, 0
      %v822 = vsel %vm631, %v436, 0
      %v825 = vsel %vm631, %v437, 0
      %v828 = vsel %vm631, %v438, 0
      %v831 = vsel %vm631, %v439, 0
      %v834 = vsel %vm631, %v440, 0
      %v837 = vsel %vm631, %v441, 0
      %v840 = vsel %vm631, %v442, 0
      %v843 = vsel %vm631, %v443, 0
      %v846 = vsel %vm631, %v444, 0
      %v849 = vsel %vm631, %v445, 0
      %v852 = vsel %vm631, %v446, 0
      %v855 = vsel %vm631, %v447, 0
      %v858 = vsel %vm631, %v448, 0
      %v861 = vsel %vm631, %v449, 0
      %v864 = vsel %vm631, %v450, 0
      %v867 = vsel %vm631, %v451, 0
      %v870 = vsel %vm631, %v452, 0
      %v873 = vsel %vm631, %v453, 0
      %v876 = vsel %vm631, %v454, 0
      %v879 = vsel %vm631, %v455, 0
      %v882 = vsel %vm631, %v456, 0
      %v885 = vsel %vm631, %v457, 0
      %v888 = vsel %vm631, %v458, 0
      %v891 = vsel %vm631, %v459, 0
      %v894 = vsel %vm631, %v460, 0
      %v897 = vsel %vm631, %v461, 0
      %v900 = vsel %vm631, %v462, 0
      %v903 = vsel %vm631, %v463, 0
      %v906 = vsel %vm631, %v464, 0
      %v909 = vsel %vm631, %v465, 0
      %v912 = vsel %vm631, %v466, 0
      %v915 = vsel %vm631, %v467, 0
      %v918 = vsel %vm631, %v468, 0
      %v921 = vsel %vm631, %v469, 0
      %v924 = vsel %vm631, %v470, 0
      %v927 = vsel %vm631, %v471, 0
      %v930 = vsel %vm631, %v472, 0
      %v933 = vsel %vm631, %v473, 0
      %v936 = vsel %vm631, %v474, 0
      %v939 = vsel %vm631, %v475, 0
      %v942 = vsel %vm631, %v476, 0
      %v945 = vsel %vm631, %v477, 0
      %v948 = vsel %vm631, %v478, 0
      %v951 = vsel %vm631, %v479, 0
      %v954 = vsel %vm631, %v480, 0
      %v957 = vsel %vm631, %v481, 0
      %v960 = vsel %vm631, %v482, 0
      %v963 = vsel %vm631, %v483, 0
      %v966 = vsel %vm631, %v484, 0
      %v969 = vsel %vm631, %v485, 0
      %v972 = vsel %vm631, %v486, 0
      %v975 = vsel %vm631, %v487, 0
      %v978 = vsel %vm631, %v488, 0
      %v981 = vsel %vm631, %v489, 0
      %v984 = vsel %vm631, %v490, 0
      %v987 = vsel %vm631, %v491, 0
      %v990 = vsel %vm631, %v492, 0
      %v993 = vsel %vm631, %v493, 0
      %v996 = vsel %vm631, %v494, 0
      %v999 = vsel %vm631, %v495, 0
      %v1002 = vsel %vm631, %v496, 0
      %v1005 = vsel %vm631, %v497, 0
      %v1008 = vsel %vm631, %v498, 0
      %v1011 = vsel %vm631, %v499, 0
      %v1014 = vsel %vm631, %v500, 0
      %v1017 = vsel %vm631, %v501, 0
      %v1020 = vsel %vm631, %v502, 0
      %v1023 = vsel %vm631, %v503, 0
      %v1026 = vsel %vm631, %v504, 0
      %v1029 = vsel %vm631, %v505, 0
      %v1032 = vsel %vm631, %v506, 0
      %v1035 = vsel %vm631, %v507, 0
      %v1038 = vsel %vm631, %v508, 0
      %v1041 = vsel %vm631, %v509, 0
      %v1044 = vsel %vm631, %v510, 0
      %v1047 = vsel %vm631, %v511, 0
      %v1050 = vsel %vm631, %v512, 0
      %v1053 = vsel %vm631, %v513, 0
      %v1056 = vsel %vm631, %v514, 0
      %v1059 = vsel %vm631, %v515, 0
      %v1062 = vsel %vm631, %v516, 0
      %v1065 = vsel %vm631, %v517, 0
      %v1068 = vsel %vm631, %v518, 0
      %v1071 = vsel %vm631, %v519, 0
      %v1074 = vsel %vm631, %v520, 0
      %v1077 = vsel %vm631, %v521, 0
      %v1080 = vsel %vm631, %v522, 0
      %v1083 = vsel %vm631, %v523, 0
      %v1086 = vsel %vm631, %v524, 0
      %v1089 = vsel %vm631, %v525, 0
      %v1092 = vsel %vm631, %v526, 0
      %v1095 = vsel %vm631, %v527, 0
      %v1098 = vsel %vm631, %v528, 0
      %v1101 = vsel %vm631, %v529, 0
      %v1104 = vsel %vm631, %v530, 0
      %v1107 = vsel %vm631, %v531, 0
      %v1110 = vsel %vm631, %v532, 0
      %v1113 = vsel %vm631, %v533, 0
      %v1116 = vsel %vm631, %v534, 0
      %v1119 = vsel %vm631, %v535, 0
      %v1122 = vsel %vm631, %v536, 0
      %v1125 = vsel %vm631, %v537, 0
      %v1128 = vsel %vm631, %v538, 0
      %v1131 = vsel %vm631, %v539, 0
      %v1134 = vsel %vm631, %v540, 0
      %v1137 = vsel %vm631, %v541, 0
      %v1140 = vsel %vm631, %v542, 0
      %v1143 = vsel %vm631, %v543, 0
      %v1146 = vsel %vm631, %v544, 0
      %v1149 = vsel %vm631, %v545, 0
      %v1152 = vsel %vm631, %v546, 0
      %v1155 = vsel %vm631, %v547, 0
      %v1158 = vsel %vm631, %v548, 0
      %v1161 = vsel %vm631, %v549, 0
      %v1164 = vsel %vm631, %v550, 0
      %v1167 = vsel %vm631, %v551, 0
      %v1170 = vsel %vm631, %v552, 0
      %v1173 = vsel %vm631, %v553, 0
      %v1176 = vsel %vm631, %v554, 0
      %v1179 = vsel %vm631, %v555, 0
      %v1182 = vsel %vm631, %v556, 0
      %v1185 = vsel %vm631, %v557, 0
      %v1188 = vsel %vm631, %v558, 0
      %v1191 = vsel %vm631, %v559, 0
      %v1194 = vsel %vm631, %v560, 0
      %v1197 = vsel %vm631, %v561, 0
      %v1200 = vsel %vm631, %v562, 0
      %v1203 = vsel %vm631, %v563, 0
      %v1206 = vsel %vm631, %v564, 0
      %v1209 = vsel %vm631, %v565, 0
      %v1212 = vsel %vm631, %v566, 0
      %v1215 = vsel %vm631, %v567, 0
      %v1218 = vsel %vm631, %v568, 0
      %v1221 = vsel %vm631, %v569, 0
      %v1224 = vsel %vm631, %v570, 0
      %v1227 = vsel %vm631, %v571, 0
      %v1230 = vsel %vm631, %v572, 0
      %v1233 = vsel %vm631, %v573, 0
      %v1236 = vsel %vm631, %v574, 0
      %v1239 = vsel %vm631, %v575, 0
      %v1242 = vsel %vm631, %v576, 0
      %v1245 = vsel %vm631, %v577, 0
      %v1248 = vsel %vm631, %v578, 0
      %v1251 = vsel %vm631, %v579, 0
      %v1254 = vsel %vm631, %v580, 0
      %v1257 = vsel %vm631, %v581, 0
      %v1260 = vsel %vm631, %v582, 0
      %v1263 = vsel %vm631, %v583, 0
      %v1266 = vsel %vm631, %v584, 0
      %v1269 = vsel %vm631, %v585, 0
      %v1272 = vsel %vm631, %v586, 0
      %v1275 = vsel %vm631, %v587, 0
      %v1278 = vsel %vm631, %v588, 0
      %v1281 = vsel %vm631, %v589, 0
      %v1284 = vsel %vm631, %v590, 0
      %v1287 = vsel %vm631, %v591, 0
      %v1290 = vsel %vm631, %v592, 0
      %v1293 = vsel %vm631, %v593, 0
      %v1296 = vsel %vm631, %v594, 0
      %v1299 = vsel %vm631, %v595, 0
      %v1302 = vsel %vm631, %v596, 0
      %v1305 = vsel %vm631, %v597, 0
      %v1308 = vsel %vm631, %v598, 0
      %v1311 = vsel %vm631, %v599, 0
      %v1314 = vsel %vm631, %v600, 0
      %v1317 = vsel %vm631, %v601, 0
      %v1320 = vsel %vm631, %v602, 0
      %v1323 = vsel %vm631, %v603, 0
      %v1326 = vsel %vm631, %v604, 0
      %v1329 = vsel %vm631, %v605, 0
      %v1332 = vsel %vm631, %v606, 0
      %v1335 = vsel %vm631, %v607, 0
      %v1338 = vsel %vm631, %v608, 0
      %v1341 = vsel %vm631, %v609, 0
      %v1344 = vsel %vm631, %v610, 0
      %v1347 = vsel %vm631, %v611, 0
      %v1350 = vsel %vm631, %v612, 0
      %v1353 = vsel %vm631, %v613, 0
      %v1356 = vsel %vm631, %v614, 0
      %v1359 = vsel %vm631, %v615, 0
      %v1362 = vsel %vm631, %v616, 0
      %v1365 = vsel %vm631, %v617, 0
      %v1368 = vsel %vm631, %v618, 0
      %v1371 = vsel %vm631, %v619, 0
      %v1374 = vsel %vm631, %v620, 0
      %v1377 = vsel %vm631, %v621, 0
      %v1380 = vsel %vm631, %v622, 0
      %v1383 = vsel %vm631, %v623, 0
      %v1386 = vsel %vm631, %v624, 0
      %v1389 = vsel %vm631, %v625, 0
      %v1392 = vsel %vm631, %v626, 0
      %v1395 = vsel %vm631, %v627, 0
      %v1398 = vsel %vm631, %v628, 0
      %vm1400 = vcmask 1043456
      %v1401 = vsel %vm1400, %v372, 0
      %v1403 = vsel %vm1400, %v630, 0
      %1405 = vmatprep.subr.mxu0 %v1403
      %1406 = vmatpush1.msra.mxu0 %v1401
      %1407 = vmatprep.subr.mxu0 0.0
      %1408 = vmatpush1.msra.mxu0 0.0
      %1409 = vmatprep.subr.mxu0 0.0
      %1410 = vmatpush1.msra.mxu0 0.0
      %1411 = vmatprep.subr.mxu0 0.0
      %1412 = vmatpush1.msra.mxu0 0.0
      %1413 = vmatprep.subr.mxu0 0.0
      %1414 = vmatpush1.msra.mxu0 0.0
      %1415 = vmatprep.subr.mxu0 0.0
      %1416 = vmatpush1.msra.mxu0 0.0
      %1417 = vmatprep.subr.mxu0 0.0
      %1418 = vmatpush1.msra.mxu0 0.0
      %1419 = vmatprep.subr.mxu0 0.0
      %1420 = vmatpush1.msra.mxu0 0.0
      %1421 = vmatprep.subr.mxu0 0.0
      %1422 = vmatpush1.msra.mxu0 0.0
      %1423 = vmatprep.subr.mxu0 0.0
      %1424 = vmatpush1.msra.mxu0 0.0
      %1425 = vmatprep.subr.mxu0 0.0
      %1426 = vmatpush1.msra.mxu0 0.0
      %1427 = vmatprep.subr.mxu0 0.0
      %1428 = vmatpush1.msra.mxu0 0.0
      %1429 = vmatprep.subr.mxu0 0.0
      %1430 = vmatpush1.msra.mxu0 0.0
      %1431 = vmatprep.subr.mxu0 0.0
      %1432 = vmatpush1.msra.mxu0 0.0
      %1433 = vmatprep.subr.mxu0 0.0
      %1434 = vmatpush1.msra.mxu0 0.0
      %1435 = vmatprep.subr.mxu0 0.0
      %1436 = vmatpush1.msra.mxu0 0.0
      %1437 = vmatprep.subr.mxu0 0.0
      %1438 = vmatpush1.msra.mxu0 0.0
      %1439 = vmatprep.subr.mxu0 0.0
      %1440 = vmatpush1.msra.mxu0 0.0
      %1441 = vmatprep.subr.mxu0 0.0
      %1442 = vmatpush1.msra.mxu0 0.0
      %1443 = vmatprep.subr.mxu0 0.0
      %1444 = vmatpush1.msra.mxu0 0.0
      %1445 = vmatprep.subr.mxu0 0.0
      %1446 = vmatpush1.msra.mxu0 0.0
      %1447 = vmatprep.subr.mxu0 0.0
      %1448 = vmatpush1.msra.mxu0 0.0
      %1449 = vmatprep.subr.mxu0 0.0
      %1450 = vmatpush1.msra.mxu0 0.0
      %1451 = vmatprep.subr.mxu0 0.0
      %1452 = vmatpush1.msra.mxu0 0.0
      %1453 = vmatprep.subr.mxu0 0.0
      %1454 = vmatpush1.msra.mxu0 0.0
      %1455 = vmatprep.subr.mxu0 0.0
      %1456 = vmatpush1.msra.mxu0 0.0
      %1457 = vmatprep.subr.mxu0 0.0
      %1458 = vmatpush1.msra.mxu0 0.0
      %1459 = vmatprep.subr.mxu0 0.0
      %1460 = vmatpush1.msra.mxu0 0.0
      %1461 = vmatprep.subr.mxu0 0.0
      %1462 = vmatpush1.msra.mxu0 0.0
      %1463 = vmatprep.subr.mxu0 0.0
      %1464 = vmatpush1.msra.mxu0 0.0
      %1465 = vmatprep.subr.mxu0 0.0
      %1466 = vmatpush1.msra.mxu0 0.0
      %1467 = vmatprep.subr.mxu0 0.0
      %1468 = vmatpush1.msra.mxu0 0.0
      %1469 = vmatprep.mubr.f32.mxu0 0.0
      %1470 = vmatmul.mubr.f32.gmra.mrb[0].mxu0 %v633
      %v1471 = vpop.f32.mrb[0].mxu0
      %v1472 = vadd.f32 0.0, %v1471
      %v1473 = vpop.f32.mrb[0].mxu0
      %v1474 = vadd.f32 0.0, %v1473
      %1475 = vmatprep.mubr.f32.mxu0 0.0
      %1476 = vmatmul.mubr.f32.gmra.mrb[0].mxu0 %v636
      %v1477 = vpop.f32.mrb[0].mxu0
      %v1478 = vadd.f32 0.0, %v1477
      %v1479 = vpop.f32.mrb[0].mxu0
      %v1480 = vadd.f32 0.0, %v1479
      %1481 = vmatprep.mubr.f32.mxu0 0.0
      %1482 = vmatmul.mubr.f32.gmra.mrb[0].mxu0 %v639
      %v1483 = vpop.f32.mrb[0].mxu0
      %v1484 = vadd.f32 0.0, %v1483
      %v1485 = vpop.f32.mrb[0].mxu0
      %v1486 = vadd.f32 0.0, %v1485
      %1487 = vmatprep.mubr.f32.mxu0 0.0
      %1488 = vmatmul.mubr.f32.gmra.mrb[0].mxu0 %v642
      %v1489 = vpop.f32.mrb[0].mxu0
      %v1490 = vadd.f32 0.0, %v1489
      %v1491 = vpop.f32.mrb[0].mxu0
      %v1492 = vadd.f32 0.0, %v1491
      %1493 = vmatprep.mubr.f32.mxu0 0.0
      %1494 = vmatmul.mubr.f32.gmra.mrb[0].mxu0 %v645
      %v1495 = vpop.f32.mrb[0].mxu0
      %v1496 = vadd.f32 0.0, %v1495
      %v1497 = vpop.f32.mrb[0].mxu0
      %v1498 = vadd.f32 0.0, %v1497
      %1499 = vmatprep.mubr.f32.mxu0 0.0
      %1500 = vmatmul.mubr.f32.gmra.mrb[0].mxu0 %v648
      %v1501 = vpop.f32.mrb[0].mxu0
      %v1502 = vadd.f32 0.0, %v1501
      %v1503 = vpop.f32.mrb[0].mxu0
      %v1504 = vadd.f32 0.0, %v1503
      %1505 = vmatprep.mubr.f32.mxu0 0.0
      %1506 = vmatmul.mubr.f32.gmra.mrb[0].mxu0 %v651
      %v1507 = vpop.f32.mrb[0].mxu0
      %v1508 = vadd.f32 0.0, %v1507
      %v1509 = vpop.f32.mrb[0].mxu0
      %v1510 = vadd.f32 0.0, %v1509
      %1511 = vmatprep.mubr.f32.mxu0 0.0
      %1512 = vmatmul.mubr.f32.gmra.mrb[0].mxu0 %v654
      %v1513 = vpop.f32.mrb[0].mxu0
      %v1514 = vadd.f32 0.0, %v1513
      %v1515 = vpop.f32.mrb[0].mxu0
      %v1516 = vadd.f32 0.0, %v1515
      %1517 = vmatprep.mubr.f32.mxu0 0.0
      %1518 = vmatmul.mubr.f32.gmra.mrb[0].mxu0 %v657
      %v1519 = vpop.f32.mrb[0].mxu0
      %v1520 = vadd.f32 0.0, %v1519
      %v1521 = vpop.f32.mrb[0].mxu0
      %v1522 = vadd.f32 0.0, %v1521
      %1523 = vmatprep.mubr.f32.mxu0 0.0
      %1524 = vmatmul.mubr.f32.gmra.mrb[0].mxu0 %v660
      %v1525 = vpop.f32.mrb[0].mxu0
      %v1526 = vadd.f32 0.0, %v1525
      %v1527 = vpop.f32.mrb[0].mxu0
      %v1528 = vadd.f32 0.0, %v1527
      %1529 = vmatprep.mubr.f32.mxu0 0.0
      %1530 = vmatmul.mubr.f32.gmra.mrb[0].mxu0 %v663
      %v1531 = vpop.f32.mrb[0].mxu0
      %v1532 = vadd.f32 0.0, %v1531
      %v1533 = vpop.f32.mrb[0].mxu0
      %v1534 = vadd.f32 0.0, %v1533
      %1535 = vmatprep.mubr.f32.mxu0 0.0
      %1536 = vmatmul.mubr.f32.gmra.mrb[0].mxu0 %v666
      %v1537 = vpop.f32.mrb[0].mxu0
      %v1538 = vadd.f32 0.0, %v1537
      %v1539 = vpop.f32.mrb[0].mxu0
      %v1540 = vadd.f32 0.0, %v1539
      %1541 = vmatprep.mubr.f32.mxu0 0.0
      %1542 = vmatmul.mubr.f32.gmra.mrb[0].mxu0 %v669
      %v1543 = vpop.f32.mrb[0].mxu0
      %v1544 = vadd.f32 0.0, %v1543
      %v1545 = vpop.f32.mrb[0].mxu0
      %v1546 = vadd.f32 0.0, %v1545
      %1547 = vmatprep.mubr.f32.mxu0 0.0
      %1548 = vmatmul.mubr.f32.gmra.mrb[0].mxu0 %v672
      %v1549 = vpop.f32.mrb[0].mxu0
      %v1550 = vadd.f32 0.0, %v1549
      %v1551 = vpop.f32.mrb[0].mxu0
      %v1552 = vadd.f32 0.0, %v1551
      %1553 = vmatprep.mubr.f32.mxu0 0.0
      %1554 = vmatmul.mubr.f32.gmra.mrb[0].mxu0 %v675
      %v1555 = vpop.f32.mrb[0].mxu0
      %v1556 = vadd.f32 0.0, %v1555
      %v1557 = vpop.f32.mrb[0].mxu0
      %v1558 = vadd.f32 0.0, %v1557
      %1559 = vmatprep.mubr.f32.mxu0 0.0
      %1560 = vmatmul.mubr.f32.gmra.mrb[0].mxu0 %v678
      %v1561 = vpop.f32.mrb[0].mxu0
      %v1562 = vadd.f32 0.0, %v1561
      %v1563 = vpop.f32.mrb[0].mxu0
      %v1564 = vadd.f32 0.0, %v1563
      %1565 = vmatprep.mubr.f32.mxu0 0.0
      %1566 = vmatmul.mubr.f32.gmra.mrb[0].mxu0 %v681
      %v1567 = vpop.f32.mrb[0].mxu0
      %v1568 = vadd.f32 0.0, %v1567
      %v1569 = vpop.f32.mrb[0].mxu0
      %v1570 = vadd.f32 0.0, %v1569
      %1571 = vmatprep.mubr.f32.mxu0 0.0
      %1572 = vmatmul.mubr.f32.gmra.mrb[0].mxu0 %v684
      %v1573 = vpop.f32.mrb[0].mxu0
      %v1574 = vadd.f32 0.0, %v1573
      %v1575 = vpop.f32.mrb[0].mxu0
      %v1576 = vadd.f32 0.0, %v1575
      %1577 = vmatprep.mubr.f32.mxu0 0.0
      %1578 = vmatmul.mubr.f32.gmra.mrb[0].mxu0 %v687
      %v1579 = vpop.f32.mrb[0].mxu0
      %v1580 = vadd.f32 0.0, %v1579
      %v1581 = vpop.f32.mrb[0].mxu0
      %v1582 = vadd.f32 0.0, %v1581
      %1583 = vmatprep.mubr.f32.mxu0 0.0
      %1584 = vmatmul.mubr.f32.gmra.mrb[0].mxu0 %v690
      %v1585 = vpop.f32.mrb[0].mxu0
      %v1586 = vadd.f32 0.0, %v1585
      %v1587 = vpop.f32.mrb[0].mxu0
      %v1588 = vadd.f32 0.0, %v1587
      %1589 = vmatprep.mubr.f32.mxu0 0.0
      %1590 = vmatmul.mubr.f32.gmra.mrb[0].mxu0 %v693
      %v1591 = vpop.f32.mrb[0].mxu0
      %v1592 = vadd.f32 0.0, %v1591
      %v1593 = vpop.f32.mrb[0].mxu0
      %v1594 = vadd.f32 0.0, %v1593
      %1595 = vmatprep.mubr.f32.mxu0 0.0
      %1596 = vmatmul.mubr.f32.gmra.mrb[0].mxu0 %v696
      %v1597 = vpop.f32.mrb[0].mxu0
      %v1598 = vadd.f32 0.0, %v1597
      %v1599 = vpop.f32.mrb[0].mxu0
      %v1600 = vadd.f32 0.0, %v1599
      %1601 = vmatprep.mubr.f32.mxu0 0.0
      %1602 = vmatmul.mubr.f32.gmra.mrb[0].mxu0 %v699
      %v1603 = vpop.f32.mrb[0].mxu0
      %v1604 = vadd.f32 0.0, %v1603
      %v1605 = vpop.f32.mrb[0].mxu0
      %v1606 = vadd.f32 0.0, %v1605
      %1607 = vmatprep.mubr.f32.mxu0 0.0
      %1608 = vmatmul.mubr.f32.gmra.mrb[0].mxu0 %v702
      %v1609 = vpop.f32.mrb[0].mxu0
      %v1610 = vadd.f32 0.0, %v1609
      %v1611 = vpop.f32.mrb[0].mxu0
      %v1612 = vadd.f32 0.0, %v1611
      %1613 = vmatprep.mubr.f32.mxu0 0.0
      %1614 = vmatmul.mubr.f32.gmra.mrb[0].mxu0 %v705
      %v1615 = vpop.f32.mrb[0].mxu0
      %v1616 = vadd.f32 0.0, %v1615
      %v1617 = vpop.f32.mrb[0].mxu0
      %v1618 = vadd.f32 0.0, %v1617
      %1619 = vmatprep.mubr.f32.mxu0 0.0
      %1620 = vmatmul.mubr.f32.gmra.mrb[0].mxu0 %v708
      %v1621 = vpop.f32.mrb[0].mxu0
      %v1622 = vadd.f32 0.0, %v1621
      %v1623 = vpop.f32.mrb[0].mxu0
      %v1624 = vadd.f32 0.0, %v1623
      %1625 = vmatprep.mubr.f32.mxu0 0.0
      %1626 = vmatmul.mubr.f32.gmra.mrb[0].mxu0 %v711
      %v1627 = vpop.f32.mrb[0].mxu0
      %v1628 = vadd.f32 0.0, %v1627
      %v1629 = vpop.f32.mrb[0].mxu0
      %v1630 = vadd.f32 0.0, %v1629
      %1631 = vmatprep.mubr.f32.mxu0 0.0
      %1632 = vmatmul.mubr.f32.gmra.mrb[0].mxu0 %v714
      %v1633 = vpop.f32.mrb[0].mxu0
      %v1634 = vadd.f32 0.0, %v1633
      %v1635 = vpop.f32.mrb[0].mxu0
      %v1636 = vadd.f32 0.0, %v1635
      %1637 = vmatprep.mubr.f32.mxu0 0.0
      %1638 = vmatmul.mubr.f32.gmra.mrb[0].mxu0 %v717
      %v1639 = vpop.f32.mrb[0].mxu0
      %v1640 = vadd.f32 0.0, %v1639
      %v1641 = vpop.f32.mrb[0].mxu0
      %v1642 = vadd.f32 0.0, %v1641
      %1643 = vmatprep.mubr.f32.mxu0 0.0
      %1644 = vmatmul.mubr.f32.gmra.mrb[0].mxu0 %v720
      %v1645 = vpop.f32.mrb[0].mxu0
      %v1646 = vadd.f32 0.0, %v1645
      %v1647 = vpop.f32.mrb[0].mxu0
      %v1648 = vadd.f32 0.0, %v1647
      %1649 = vmatprep.mubr.f32.mxu0 0.0
      %1650 = vmatmul.mubr.f32.gmra.mrb[0].mxu0 %v723
      %v1651 = vpop.f32.mrb[0].mxu0
      %v1652 = vadd.f32 0.0, %v1651
      %v1653 = vpop.f32.mrb[0].mxu0
      %v1654 = vadd.f32 0.0, %v1653
      %1655 = vmatprep.mubr.f32.mxu0 0.0
      %1656 = vmatmul.mubr.f32.gmra.mrb[0].mxu0 %v726
      %v1657 = vpop.f32.mrb[0].mxu0
      %v1658 = vadd.f32 0.0, %v1657
      %v1659 = vpop.f32.mrb[0].mxu0
      %v1660 = vadd.f32 0.0, %v1659
      %1661 = vmatprep.mubr.f32.mxu0 0.0
      %1662 = vmatmul.mubr.f32.gmra.mrb[0].mxu0 %v729
      %v1663 = vpop.f32.mrb[0].mxu0
      %v1664 = vadd.f32 0.0, %v1663
      %v1665 = vpop.f32.mrb[0].mxu0
      %v1666 = vadd.f32 0.0, %v1665
      %1667 = vmatprep.mubr.f32.mxu0 0.0
      %1668 = vmatmul.mubr.f32.gmra.mrb[0].mxu0 %v732
      %v1669 = vpop.f32.mrb[0].mxu0
      %v1670 = vadd.f32 0.0, %v1669
      %v1671 = vpop.f32.mrb[0].mxu0
      %v1672 = vadd.f32 0.0, %v1671
      %1673 = vmatprep.mubr.f32.mxu0 0.0
      %1674 = vmatmul.mubr.f32.gmra.mrb[0].mxu0 %v735
      %v1675 = vpop.f32.mrb[0].mxu0
      %v1676 = vadd.f32 0.0, %v1675
      %v1677 = vpop.f32.mrb[0].mxu0
      %v1678 = vadd.f32 0.0, %v1677
      %1679 = vmatprep.mubr.f32.mxu0 0.0
      %1680 = vmatmul.mubr.f32.gmra.mrb[0].mxu0 %v738
      %v1681 = vpop.f32.mrb[0].mxu0
      %v1682 = vadd.f32 0.0, %v1681
      %v1683 = vpop.f32.mrb[0].mxu0
      %v1684 = vadd.f32 0.0, %v1683
      %1685 = vmatprep.mubr.f32.mxu0 0.0
      %1686 = vmatmul.mubr.f32.gmra.mrb[0].mxu0 %v741
      %v1687 = vpop.f32.mrb[0].mxu0
      %v1688 = vadd.f32 0.0, %v1687
      %v1689 = vpop.f32.mrb[0].mxu0
      %v1690 = vadd.f32 0.0, %v1689
      %1691 = vmatprep.mubr.f32.mxu0 0.0
      %1692 = vmatmul.mubr.f32.gmra.mrb[0].mxu0 %v744
      %v1693 = vpop.f32.mrb[0].mxu0
      %v1694 = vadd.f32 0.0, %v1693
      %v1695 = vpop.f32.mrb[0].mxu0
      %v1696 = vadd.f32 0.0, %v1695
      %1697 = vmatprep.mubr.f32.mxu0 0.0
      %1698 = vmatmul.mubr.f32.gmra.mrb[0].mxu0 %v747
      %v1699 = vpop.f32.mrb[0].mxu0
      %v1700 = vadd.f32 0.0, %v1699
      %v1701 = vpop.f32.mrb[0].mxu0
      %v1702 = vadd.f32 0.0, %v1701
      %1703 = vmatprep.mubr.f32.mxu0 0.0
      %1704 = vmatmul.mubr.f32.gmra.mrb[0].mxu0 %v750
      %v1705 = vpop.f32.mrb[0].mxu0
      %v1706 = vadd.f32 0.0, %v1705
      %v1707 = vpop.f32.mrb[0].mxu0
      %v1708 = vadd.f32 0.0, %v1707
      %1709 = vmatprep.mubr.f32.mxu0 0.0
      %1710 = vmatmul.mubr.f32.gmra.mrb[0].mxu0 %v753
      %v1711 = vpop.f32.mrb[0].mxu0
      %v1712 = vadd.f32 0.0, %v1711
      %v1713 = vpop.f32.mrb[0].mxu0
      %v1714 = vadd.f32 0.0, %v1713
      %1715 = vmatprep.mubr.f32.mxu0 0.0
      %1716 = vmatmul.mubr.f32.gmra.mrb[0].mxu0 %v756
      %v1717 = vpop.f32.mrb[0].mxu0
      %v1718 = vadd.f32 0.0, %v1717
      %v1719 = vpop.f32.mrb[0].mxu0
      %v1720 = vadd.f32 0.0, %v1719
      %1721 = vmatprep.mubr.f32.mxu0 0.0
      %1722 = vmatmul.mubr.f32.gmra.mrb[0].mxu0 %v759
      %v1723 = vpop.f32.mrb[0].mxu0
      %v1724 = vadd.f32 0.0, %v1723
      %v1725 = vpop.f32.mrb[0].mxu0
      %v1726 = vadd.f32 0.0, %v1725
      %1727 = vmatprep.mubr.f32.mxu0 0.0
      %1728 = vmatmul.mubr.f32.gmra.mrb[0].mxu0 %v762
      %v1729 = vpop.f32.mrb[0].mxu0
      %v1730 = vadd.f32 0.0, %v1729
      %v1731 = vpop.f32.mrb[0].mxu0
      %v1732 = vadd.f32 0.0, %v1731
      %1733 = vmatprep.mubr.f32.mxu0 0.0
      %1734 = vmatmul.mubr.f32.gmra.mrb[0].mxu0 %v765
      %v1735 = vpop.f32.mrb[0].mxu0
      %v1736 = vadd.f32 0.0, %v1735
      %v1737 = vpop.f32.mrb[0].mxu0
      %v1738 = vadd.f32 0.0, %v1737
      %1739 = vmatprep.mubr.f32.mxu0 0.0
      %1740 = vmatmul.mubr.f32.gmra.mrb[0].mxu0 %v768
      %v1741 = vpop.f32.mrb[0].mxu0
      %v1742 = vadd.f32 0.0, %v1741
      %v1743 = vpop.f32.mrb[0].mxu0
      %v1744 = vadd.f32 0.0, %v1743
      %1745 = vmatprep.mubr.f32.mxu0 0.0
      %1746 = vmatmul.mubr.f32.gmra.mrb[0].mxu0 %v771
      %v1747 = vpop.f32.mrb[0].mxu0
      %v1748 = vadd.f32 0.0, %v1747
      %v1749 = vpop.f32.mrb[0].mxu0
      %v1750 = vadd.f32 0.0, %v1749
      %1751 = vmatprep.mubr.f32.mxu0 0.0
      %1752 = vmatmul.mubr.f32.gmra.mrb[0].mxu0 %v774
      %v1753 = vpop.f32.mrb[0].mxu0
      %v1754 = vadd.f32 0.0, %v1753
      %v1755 = vpop.f32.mrb[0].mxu0
      %v1756 = vadd.f32 0.0, %v1755
      %1757 = vmatprep.mubr.f32.mxu0 0.0
      %1758 = vmatmul.mubr.f32.gmra.mrb[0].mxu0 %v777
      %v1759 = vpop.f32.mrb[0].mxu0
      %v1760 = vadd.f32 0.0, %v1759
      %v1761 = vpop.f32.mrb[0].mxu0
      %v1762 = vadd.f32 0.0, %v1761
      %1763 = vmatprep.mubr.f32.mxu0 0.0
      %1764 = vmatmul.mubr.f32.gmra.mrb[0].mxu0 %v780
      %v1765 = vpop.f32.mrb[0].mxu0
      %v1766 = vadd.f32 0.0, %v1765
      %v1767 = vpop.f32.mrb[0].mxu0
      %v1768 = vadd.f32 0.0, %v1767
      %1769 = vmatprep.mubr.f32.mxu0 0.0
      %1770 = vmatmul.mubr.f32.gmra.mrb[0].mxu0 %v783
      %v1771 = vpop.f32.mrb[0].mxu0
      %v1772 = vadd.f32 0.0, %v1771
      %v1773 = vpop.f32.mrb[0].mxu0
      %v1774 = vadd.f32 0.0, %v1773
      %1775 = vmatprep.mubr.f32.mxu0 0.0
      %1776 = vmatmul.mubr.f32.gmra.mrb[0].mxu0 %v786
      %v1777 = vpop.f32.mrb[0].mxu0
      %v1778 = vadd.f32 0.0, %v1777
      %v1779 = vpop.f32.mrb[0].mxu0
      %v1780 = vadd.f32 0.0, %v1779
      %1781 = vmatprep.mubr.f32.mxu0 0.0
      %1782 = vmatmul.mubr.f32.gmra.mrb[0].mxu0 %v789
      %v1783 = vpop.f32.mrb[0].mxu0
      %v1784 = vadd.f32 0.0, %v1783
      %v1785 = vpop.f32.mrb[0].mxu0
      %v1786 = vadd.f32 0.0, %v1785
      %1787 = vmatprep.mubr.f32.mxu0 0.0
      %1788 = vmatmul.mubr.f32.gmra.mrb[0].mxu0 %v792
      %v1789 = vpop.f32.mrb[0].mxu0
      %v1790 = vadd.f32 0.0, %v1789
      %v1791 = vpop.f32.mrb[0].mxu0
      %v1792 = vadd.f32 0.0, %v1791
      %1793 = vmatprep.mubr.f32.mxu0 0.0
      %1794 = vmatmul.mubr.f32.gmra.mrb[0].mxu0 %v795
      %v1795 = vpop.f32.mrb[0].mxu0
      %v1796 = vadd.f32 0.0, %v1795
      %v1797 = vpop.f32.mrb[0].mxu0
      %v1798 = vadd.f32 0.0, %v1797
      %1799 = vmatprep.mubr.f32.mxu0 0.0
      %1800 = vmatmul.mubr.f32.gmra.mrb[0].mxu0 %v798
      %v1801 = vpop.f32.mrb[0].mxu0
      %v1802 = vadd.f32 0.0, %v1801
      %v1803 = vpop.f32.mrb[0].mxu0
      %v1804 = vadd.f32 0.0, %v1803
      %1805 = vmatprep.mubr.f32.mxu0 0.0
      %1806 = vmatmul.mubr.f32.gmra.mrb[0].mxu0 %v801
      %v1807 = vpop.f32.mrb[0].mxu0
      %v1808 = vadd.f32 0.0, %v1807
      %v1809 = vpop.f32.mrb[0].mxu0
      %v1810 = vadd.f32 0.0, %v1809
      %1811 = vmatprep.mubr.f32.mxu0 0.0
      %1812 = vmatmul.mubr.f32.gmra.mrb[0].mxu0 %v804
      %v1813 = vpop.f32.mrb[0].mxu0
      %v1814 = vadd.f32 0.0, %v1813
      %v1815 = vpop.f32.mrb[0].mxu0
      %v1816 = vadd.f32 0.0, %v1815
      %1817 = vmatprep.mubr.f32.mxu0 0.0
      %1818 = vmatmul.mubr.f32.gmra.mrb[0].mxu0 %v807
      %v1819 = vpop.f32.mrb[0].mxu0
      %v1820 = vadd.f32 0.0, %v1819
      %v1821 = vpop.f32.mrb[0].mxu0
      %v1822 = vadd.f32 0.0, %v1821
      %1823 = vmatprep.mubr.f32.mxu0 0.0
      %1824 = vmatmul.mubr.f32.gmra.mrb[0].mxu0 %v810
      %v1825 = vpop.f32.mrb[0].mxu0
      %v1826 = vadd.f32 0.0, %v1825
      %v1827 = vpop.f32.mrb[0].mxu0
      %v1828 = vadd.f32 0.0, %v1827
      %1829 = vmatprep.mubr.f32.mxu0 0.0
      %1830 = vmatmul.mubr.f32.gmra.mrb[0].mxu0 %v813
      %v1831 = vpop.f32.mrb[0].mxu0
      %v1832 = vadd.f32 0.0, %v1831
      %v1833 = vpop.f32.mrb[0].mxu0
      %v1834 = vadd.f32 0.0, %v1833
      %1835 = vmatprep.mubr.f32.mxu0 0.0
      %1836 = vmatmul.mubr.f32.gmra.mrb[0].mxu0 %v816
      %v1837 = vpop.f32.mrb[0].mxu0
      %v1838 = vadd.f32 0.0, %v1837
      %v1839 = vpop.f32.mrb[0].mxu0
      %v1840 = vadd.f32 0.0, %v1839
      %1841 = vmatprep.mubr.f32.mxu0 0.0
      %1842 = vmatmul.mubr.f32.gmra.mrb[0].mxu0 %v819
      %v1843 = vpop.f32.mrb[0].mxu0
      %v1844 = vadd.f32 0.0, %v1843
      %v1845 = vpop.f32.mrb[0].mxu0
      %v1846 = vadd.f32 0.0, %v1845
      %1847 = vmatprep.mubr.f32.mxu0 0.0
      %1848 = vmatmul.mubr.f32.gmra.mrb[0].mxu0 %v822
      %v1849 = vpop.f32.mrb[0].mxu0
      %v1850 = vadd.f32 0.0, %v1849
      %v1851 = vpop.f32.mrb[0].mxu0
      %v1852 = vadd.f32 0.0, %v1851
      %1853 = vmatprep.mubr.f32.mxu0 0.0
      %1854 = vmatmul.mubr.f32.gmra.mrb[0].mxu0 %v825
      %v1855 = vpop.f32.mrb[0].mxu0
      %v1856 = vadd.f32 0.0, %v1855
      %v1857 = vpop.f32.mrb[0].mxu0
      %v1858 = vadd.f32 0.0, %v1857
      %1859 = vmatprep.mubr.f32.mxu0 0.0
      %1860 = vmatmul.mubr.f32.gmra.mrb[0].mxu0 %v828
      %v1861 = vpop.f32.mrb[0].mxu0
      %v1862 = vadd.f32 0.0, %v1861
      %v1863 = vpop.f32.mrb[0].mxu0
      %v1864 = vadd.f32 0.0, %v1863
      %1865 = vmatprep.mubr.f32.mxu0 0.0
      %1866 = vmatmul.mubr.f32.gmra.mrb[0].mxu0 %v831
      %v1867 = vpop.f32.mrb[0].mxu0
      %v1868 = vadd.f32 0.0, %v1867
      %v1869 = vpop.f32.mrb[0].mxu0
      %v1870 = vadd.f32 0.0, %v1869
      %1871 = vmatprep.mubr.f32.mxu0 0.0
      %1872 = vmatmul.mubr.f32.gmra.mrb[0].mxu0 %v834
      %v1873 = vpop.f32.mrb[0].mxu0
      %v1874 = vadd.f32 0.0, %v1873
      %v1875 = vpop.f32.mrb[0].mxu0
      %v1876 = vadd.f32 0.0, %v1875
      %1877 = vmatprep.mubr.f32.mxu0 0.0
      %1878 = vmatmul.mubr.f32.gmra.mrb[0].mxu0 %v837
      %v1879 = vpop.f32.mrb[0].mxu0
      %v1880 = vadd.f32 0.0, %v1879
      %v1881 = vpop.f32.mrb[0].mxu0
      %v1882 = vadd.f32 0.0, %v1881
      %1883 = vmatprep.mubr.f32.mxu0 0.0
      %1884 = vmatmul.mubr.f32.gmra.mrb[0].mxu0 %v840
      %v1885 = vpop.f32.mrb[0].mxu0
      %v1886 = vadd.f32 0.0, %v1885
      %v1887 = vpop.f32.mrb[0].mxu0
      %v1888 = vadd.f32 0.0, %v1887
      %1889 = vmatprep.mubr.f32.mxu0 0.0
      %1890 = vmatmul.mubr.f32.gmra.mrb[0].mxu0 %v843
      %v1891 = vpop.f32.mrb[0].mxu0
      %v1892 = vadd.f32 0.0, %v1891
      %v1893 = vpop.f32.mrb[0].mxu0
      %v1894 = vadd.f32 0.0, %v1893
      %1895 = vmatprep.mubr.f32.mxu0 0.0
      %1896 = vmatmul.mubr.f32.gmra.mrb[0].mxu0 %v846
      %v1897 = vpop.f32.mrb[0].mxu0
      %v1898 = vadd.f32 0.0, %v1897
      %v1899 = vpop.f32.mrb[0].mxu0
      %v1900 = vadd.f32 0.0, %v1899
      %1901 = vmatprep.mubr.f32.mxu0 0.0
      %1902 = vmatmul.mubr.f32.gmra.mrb[0].mxu0 %v849
      %v1903 = vpop.f32.mrb[0].mxu0
      %v1904 = vadd.f32 0.0, %v1903
      %v1905 = vpop.f32.mrb[0].mxu0
      %v1906 = vadd.f32 0.0, %v1905
      %1907 = vmatprep.mubr.f32.mxu0 0.0
      %1908 = vmatmul.mubr.f32.gmra.mrb[0].mxu0 %v852
      %v1909 = vpop.f32.mrb[0].mxu0
      %v1910 = vadd.f32 0.0, %v1909
      %v1911 = vpop.f32.mrb[0].mxu0
      %v1912 = vadd.f32 0.0, %v1911
      %1913 = vmatprep.mubr.f32.mxu0 0.0
      %1914 = vmatmul.mubr.f32.gmra.mrb[0].mxu0 %v855
      %v1915 = vpop.f32.mrb[0].mxu0
      %v1916 = vadd.f32 0.0, %v1915
      %v1917 = vpop.f32.mrb[0].mxu0
      %v1918 = vadd.f32 0.0, %v1917
      %1919 = vmatprep.mubr.f32.mxu0 0.0
      %1920 = vmatmul.mubr.f32.gmra.mrb[0].mxu0 %v858
      %v1921 = vpop.f32.mrb[0].mxu0
      %v1922 = vadd.f32 0.0, %v1921
      %v1923 = vpop.f32.mrb[0].mxu0
      %v1924 = vadd.f32 0.0, %v1923
      %1925 = vmatprep.mubr.f32.mxu0 0.0
      %1926 = vmatmul.mubr.f32.gmra.mrb[0].mxu0 %v861
      %v1927 = vpop.f32.mrb[0].mxu0
      %v1928 = vadd.f32 0.0, %v1927
      %v1929 = vpop.f32.mrb[0].mxu0
      %v1930 = vadd.f32 0.0, %v1929
      %1931 = vmatprep.mubr.f32.mxu0 0.0
      %1932 = vmatmul.mubr.f32.gmra.mrb[0].mxu0 %v864
      %v1933 = vpop.f32.mrb[0].mxu0
      %v1934 = vadd.f32 0.0, %v1933
      %v1935 = vpop.f32.mrb[0].mxu0
      %v1936 = vadd.f32 0.0, %v1935
      %1937 = vmatprep.mubr.f32.mxu0 0.0
      %1938 = vmatmul.mubr.f32.gmra.mrb[0].mxu0 %v867
      %v1939 = vpop.f32.mrb[0].mxu0
      %v1940 = vadd.f32 0.0, %v1939
      %v1941 = vpop.f32.mrb[0].mxu0
      %v1942 = vadd.f32 0.0, %v1941
      %1943 = vmatprep.mubr.f32.mxu0 0.0
      %1944 = vmatmul.mubr.f32.gmra.mrb[0].mxu0 %v870
      %v1945 = vpop.f32.mrb[0].mxu0
      %v1946 = vadd.f32 0.0, %v1945
      %v1947 = vpop.f32.mrb[0].mxu0
      %v1948 = vadd.f32 0.0, %v1947
      %1949 = vmatprep.mubr.f32.mxu0 0.0
      %1950 = vmatmul.mubr.f32.gmra.mrb[0].mxu0 %v873
      %v1951 = vpop.f32.mrb[0].mxu0
      %v1952 = vadd.f32 0.0, %v1951
      %v1953 = vpop.f32.mrb[0].mxu0
      %v1954 = vadd.f32 0.0, %v1953
      %1955 = vmatprep.mubr.f32.mxu0 0.0
      %1956 = vmatmul.mubr.f32.gmra.mrb[0].mxu0 %v876
      %v1957 = vpop.f32.mrb[0].mxu0
      %v1958 = vadd.f32 0.0, %v1957
      %v1959 = vpop.f32.mrb[0].mxu0
      %v1960 = vadd.f32 0.0, %v1959
      %1961 = vmatprep.mubr.f32.mxu0 0.0
      %1962 = vmatmul.mubr.f32.gmra.mrb[0].mxu0 %v879
      %v1963 = vpop.f32.mrb[0].mxu0
      %v1964 = vadd.f32 0.0, %v1963
      %v1965 = vpop.f32.mrb[0].mxu0
      %v1966 = vadd.f32 0.0, %v1965
      %1967 = vmatprep.mubr.f32.mxu0 0.0
      %1968 = vmatmul.mubr.f32.gmra.mrb[0].mxu0 %v882
      %v1969 = vpop.f32.mrb[0].mxu0
      %v1970 = vadd.f32 0.0, %v1969
      %v1971 = vpop.f32.mrb[0].mxu0
      %v1972 = vadd.f32 0.0, %v1971
      %1973 = vmatprep.mubr.f32.mxu0 0.0
      %1974 = vmatmul.mubr.f32.gmra.mrb[0].mxu0 %v885
      %v1975 = vpop.f32.mrb[0].mxu0
      %v1976 = vadd.f32 0.0, %v1975
      %v1977 = vpop.f32.mrb[0].mxu0
      %v1978 = vadd.f32 0.0, %v1977
      %1979 = vmatprep.mubr.f32.mxu0 0.0
      %1980 = vmatmul.mubr.f32.gmra.mrb[0].mxu0 %v888
      %v1981 = vpop.f32.mrb[0].mxu0
      %v1982 = vadd.f32 0.0, %v1981
      %v1983 = vpop.f32.mrb[0].mxu0
      %v1984 = vadd.f32 0.0, %v1983
      %1985 = vmatprep.mubr.f32.mxu0 0.0
      %1986 = vmatmul.mubr.f32.gmra.mrb[0].mxu0 %v891
      %v1987 = vpop.f32.mrb[0].mxu0
      %v1988 = vadd.f32 0.0, %v1987
      %v1989 = vpop.f32.mrb[0].mxu0
      %v1990 = vadd.f32 0.0, %v1989
      %1991 = vmatprep.mubr.f32.mxu0 0.0
      %1992 = vmatmul.mubr.f32.gmra.mrb[0].mxu0 %v894
      %v1993 = vpop.f32.mrb[0].mxu0
      %v1994 = vadd.f32 0.0, %v1993
      %v1995 = vpop.f32.mrb[0].mxu0
      %v1996 = vadd.f32 0.0, %v1995
      %1997 = vmatprep.mubr.f32.mxu0 0.0
      %1998 = vmatmul.mubr.f32.gmra.mrb[0].mxu0 %v897
      %v1999 = vpop.f32.mrb[0].mxu0
      %v2000 = vadd.f32 0.0, %v1999
      %v2001 = vpop.f32.mrb[0].mxu0
      %v2002 = vadd.f32 0.0, %v2001
      %2003 = vmatprep.mubr.f32.mxu0 0.0
      %2004 = vmatmul.mubr.f32.gmra.mrb[0].mxu0 %v900
      %v2005 = vpop.f32.mrb[0].mxu0
      %v2006 = vadd.f32 0.0, %v2005
      %v2007 = vpop.f32.mrb[0].mxu0
      %v2008 = vadd.f32 0.0, %v2007
      %2009 = vmatprep.mubr.f32.mxu0 0.0
      %2010 = vmatmul.mubr.f32.gmra.mrb[0].mxu0 %v903
      %v2011 = vpop.f32.mrb[0].mxu0
      %v2012 = vadd.f32 0.0, %v2011
      %v2013 = vpop.f32.mrb[0].mxu0
      %v2014 = vadd.f32 0.0, %v2013
      %2015 = vmatprep.mubr.f32.mxu0 0.0
      %2016 = vmatmul.mubr.f32.gmra.mrb[0].mxu0 %v906
      %v2017 = vpop.f32.mrb[0].mxu0
      %v2018 = vadd.f32 0.0, %v2017
      %v2019 = vpop.f32.mrb[0].mxu0
      %v2020 = vadd.f32 0.0, %v2019
      %2021 = vmatprep.mubr.f32.mxu0 0.0
      %2022 = vmatmul.mubr.f32.gmra.mrb[0].mxu0 %v909
      %v2023 = vpop.f32.mrb[0].mxu0
      %v2024 = vadd.f32 0.0, %v2023
      %v2025 = vpop.f32.mrb[0].mxu0
      %v2026 = vadd.f32 0.0, %v2025
      %2027 = vmatprep.mubr.f32.mxu0 0.0
      %2028 = vmatmul.mubr.f32.gmra.mrb[0].mxu0 %v912
      %v2029 = vpop.f32.mrb[0].mxu0
      %v2030 = vadd.f32 0.0, %v2029
      %v2031 = vpop.f32.mrb[0].mxu0
      %v2032 = vadd.f32 0.0, %v2031
      %2033 = vmatprep.mubr.f32.mxu0 0.0
      %2034 = vmatmul.mubr.f32.gmra.mrb[0].mxu0 %v915
      %v2035 = vpop.f32.mrb[0].mxu0
      %v2036 = vadd.f32 0.0, %v2035
      %v2037 = vpop.f32.mrb[0].mxu0
      %v2038 = vadd.f32 0.0, %v2037
      %2039 = vmatprep.mubr.f32.mxu0 0.0
      %2040 = vmatmul.mubr.f32.gmra.mrb[0].mxu0 %v918
      %v2041 = vpop.f32.mrb[0].mxu0
      %v2042 = vadd.f32 0.0, %v2041
      %v2043 = vpop.f32.mrb[0].mxu0
      %v2044 = vadd.f32 0.0, %v2043
      %2045 = vmatprep.mubr.f32.mxu0 0.0
      %2046 = vmatmul.mubr.f32.gmra.mrb[0].mxu0 %v921
      %v2047 = vpop.f32.mrb[0].mxu0
      %v2048 = vadd.f32 0.0, %v2047
      %v2049 = vpop.f32.mrb[0].mxu0
      %v2050 = vadd.f32 0.0, %v2049
      %2051 = vmatprep.mubr.f32.mxu0 0.0
      %2052 = vmatmul.mubr.f32.gmra.mrb[0].mxu0 %v924
      %v2053 = vpop.f32.mrb[0].mxu0
      %v2054 = vadd.f32 0.0, %v2053
      %v2055 = vpop.f32.mrb[0].mxu0
      %v2056 = vadd.f32 0.0, %v2055
      %2057 = vmatprep.mubr.f32.mxu0 0.0
      %2058 = vmatmul.mubr.f32.gmra.mrb[0].mxu0 %v927
      %v2059 = vpop.f32.mrb[0].mxu0
      %v2060 = vadd.f32 0.0, %v2059
      %v2061 = vpop.f32.mrb[0].mxu0
      %v2062 = vadd.f32 0.0, %v2061
      %2063 = vmatprep.mubr.f32.mxu0 0.0
      %2064 = vmatmul.mubr.f32.gmra.mrb[0].mxu0 %v930
      %v2065 = vpop.f32.mrb[0].mxu0
      %v2066 = vadd.f32 0.0, %v2065
      %v2067 = vpop.f32.mrb[0].mxu0
      %v2068 = vadd.f32 0.0, %v2067
      %2069 = vmatprep.mubr.f32.mxu0 0.0
      %2070 = vmatmul.mubr.f32.gmra.mrb[0].mxu0 %v933
      %v2071 = vpop.f32.mrb[0].mxu0
      %v2072 = vadd.f32 0.0, %v2071
      %v2073 = vpop.f32.mrb[0].mxu0
      %v2074 = vadd.f32 0.0, %v2073
      %2075 = vmatprep.mubr.f32.mxu0 0.0
      %2076 = vmatmul.mubr.f32.gmra.mrb[0].mxu0 %v936
      %v2077 = vpop.f32.mrb[0].mxu0
      %v2078 = vadd.f32 0.0, %v2077
      %v2079 = vpop.f32.mrb[0].mxu0
      %v2080 = vadd.f32 0.0, %v2079
      %2081 = vmatprep.mubr.f32.mxu0 0.0
      %2082 = vmatmul.mubr.f32.gmra.mrb[0].mxu0 %v939
      %v2083 = vpop.f32.mrb[0].mxu0
      %v2084 = vadd.f32 0.0, %v2083
      %v2085 = vpop.f32.mrb[0].mxu0
      %v2086 = vadd.f32 0.0, %v2085
      %2087 = vmatprep.mubr.f32.mxu0 0.0
      %2088 = vmatmul.mubr.f32.gmra.mrb[0].mxu0 %v942
      %v2089 = vpop.f32.mrb[0].mxu0
      %v2090 = vadd.f32 0.0, %v2089
      %v2091 = vpop.f32.mrb[0].mxu0
      %v2092 = vadd.f32 0.0, %v2091
      %2093 = vmatprep.mubr.f32.mxu0 0.0
      %2094 = vmatmul.mubr.f32.gmra.mrb[0].mxu0 %v945
      %v2095 = vpop.f32.mrb[0].mxu0
      %v2096 = vadd.f32 0.0, %v2095
      %v2097 = vpop.f32.mrb[0].mxu0
      %v2098 = vadd.f32 0.0, %v2097
      %2099 = vmatprep.mubr.f32.mxu0 0.0
      %2100 = vmatmul.mubr.f32.gmra.mrb[0].mxu0 %v948
      %v2101 = vpop.f32.mrb[0].mxu0
      %v2102 = vadd.f32 0.0, %v2101
      %v2103 = vpop.f32.mrb[0].mxu0
      %v2104 = vadd.f32 0.0, %v2103
      %2105 = vmatprep.mubr.f32.mxu0 0.0
      %2106 = vmatmul.mubr.f32.gmra.mrb[0].mxu0 %v951
      %v2107 = vpop.f32.mrb[0].mxu0
      %v2108 = vadd.f32 0.0, %v2107
      %v2109 = vpop.f32.mrb[0].mxu0
      %v2110 = vadd.f32 0.0, %v2109
      %2111 = vmatprep.mubr.f32.mxu0 0.0
      %2112 = vmatmul.mubr.f32.gmra.mrb[0].mxu0 %v954
      %v2113 = vpop.f32.mrb[0].mxu0
      %v2114 = vadd.f32 0.0, %v2113
      %v2115 = vpop.f32.mrb[0].mxu0
      %v2116 = vadd.f32 0.0, %v2115
      %2117 = vmatprep.mubr.f32.mxu0 0.0
      %2118 = vmatmul.mubr.f32.gmra.mrb[0].mxu0 %v957
      %v2119 = vpop.f32.mrb[0].mxu0
      %v2120 = vadd.f32 0.0, %v2119
      %v2121 = vpop.f32.mrb[0].mxu0
      %v2122 = vadd.f32 0.0, %v2121
      %2123 = vmatprep.mubr.f32.mxu0 0.0
      %2124 = vmatmul.mubr.f32.gmra.mrb[0].mxu0 %v960
      %v2125 = vpop.f32.mrb[0].mxu0
      %v2126 = vadd.f32 0.0, %v2125
      %v2127 = vpop.f32.mrb[0].mxu0
      %v2128 = vadd.f32 0.0, %v2127
      %2129 = vmatprep.mubr.f32.mxu0 0.0
      %2130 = vmatmul.mubr.f32.gmra.mrb[0].mxu0 %v963
      %v2131 = vpop.f32.mrb[0].mxu0
      %v2132 = vadd.f32 0.0, %v2131
      %v2133 = vpop.f32.mrb[0].mxu0
      %v2134 = vadd.f32 0.0, %v2133
      %2135 = vmatprep.mubr.f32.mxu0 0.0
      %2136 = vmatmul.mubr.f32.gmra.mrb[0].mxu0 %v966
      %v2137 = vpop.f32.mrb[0].mxu0
      %v2138 = vadd.f32 0.0, %v2137
      %v2139 = vpop.f32.mrb[0].mxu0
      %v2140 = vadd.f32 0.0, %v2139
      %2141 = vmatprep.mubr.f32.mxu0 0.0
      %2142 = vmatmul.mubr.f32.gmra.mrb[0].mxu0 %v969
      %v2143 = vpop.f32.mrb[0].mxu0
      %v2144 = vadd.f32 0.0, %v2143
      %v2145 = vpop.f32.mrb[0].mxu0
      %v2146 = vadd.f32 0.0, %v2145
      %2147 = vmatprep.mubr.f32.mxu0 0.0
      %2148 = vmatmul.mubr.f32.gmra.mrb[0].mxu0 %v972
      %v2149 = vpop.f32.mrb[0].mxu0
      %v2150 = vadd.f32 0.0, %v2149
      %v2151 = vpop.f32.mrb[0].mxu0
      %v2152 = vadd.f32 0.0, %v2151
      %2153 = vmatprep.mubr.f32.mxu0 0.0
      %2154 = vmatmul.mubr.f32.gmra.mrb[0].mxu0 %v975
      %v2155 = vpop.f32.mrb[0].mxu0
      %v2156 = vadd.f32 0.0, %v2155
      %v2157 = vpop.f32.mrb[0].mxu0
      %v2158 = vadd.f32 0.0, %v2157
      %2159 = vmatprep.mubr.f32.mxu0 0.0
      %2160 = vmatmul.mubr.f32.gmra.mrb[0].mxu0 %v978
      %v2161 = vpop.f32.mrb[0].mxu0
      %v2162 = vadd.f32 0.0, %v2161
      %v2163 = vpop.f32.mrb[0].mxu0
      %v2164 = vadd.f32 0.0, %v2163
      %2165 = vmatprep.mubr.f32.mxu0 0.0
      %2166 = vmatmul.mubr.f32.gmra.mrb[0].mxu0 %v981
      %v2167 = vpop.f32.mrb[0].mxu0
      %v2168 = vadd.f32 0.0, %v2167
      %v2169 = vpop.f32.mrb[0].mxu0
      %v2170 = vadd.f32 0.0, %v2169
      %2171 = vmatprep.mubr.f32.mxu0 0.0
      %2172 = vmatmul.mubr.f32.gmra.mrb[0].mxu0 %v984
      %v2173 = vpop.f32.mrb[0].mxu0
      %v2174 = vadd.f32 0.0, %v2173
      %v2175 = vpop.f32.mrb[0].mxu0
      %v2176 = vadd.f32 0.0, %v2175
      %2177 = vmatprep.mubr.f32.mxu0 0.0
      %2178 = vmatmul.mubr.f32.gmra.mrb[0].mxu0 %v987
      %v2179 = vpop.f32.mrb[0].mxu0
      %v2180 = vadd.f32 0.0, %v2179
      %v2181 = vpop.f32.mrb[0].mxu0
      %v2182 = vadd.f32 0.0, %v2181
      %2183 = vmatprep.mubr.f32.mxu0 0.0
      %2184 = vmatmul.mubr.f32.gmra.mrb[0].mxu0 %v990
      %v2185 = vpop.f32.mrb[0].mxu0
      %v2186 = vadd.f32 0.0, %v2185
      %v2187 = vpop.f32.mrb[0].mxu0
      %v2188 = vadd.f32 0.0, %v2187
      %2189 = vmatprep.mubr.f32.mxu0 0.0
      %2190 = vmatmul.mubr.f32.gmra.mrb[0].mxu0 %v993
      %v2191 = vpop.f32.mrb[0].mxu0
      %v2192 = vadd.f32 0.0, %v2191
      %v2193 = vpop.f32.mrb[0].mxu0
      %v2194 = vadd.f32 0.0, %v2193
      %2195 = vmatprep.mubr.f32.mxu0 0.0
      %2196 = vmatmul.mubr.f32.gmra.mrb[0].mxu0 %v996
      %v2197 = vpop.f32.mrb[0].mxu0
      %v2198 = vadd.f32 0.0, %v2197
      %v2199 = vpop.f32.mrb[0].mxu0
      %v2200 = vadd.f32 0.0, %v2199
      %2201 = vmatprep.mubr.f32.mxu0 0.0
      %2202 = vmatmul.mubr.f32.gmra.mrb[0].mxu0 %v999
      %v2203 = vpop.f32.mrb[0].mxu0
      %v2204 = vadd.f32 0.0, %v2203
      %v2205 = vpop.f32.mrb[0].mxu0
      %v2206 = vadd.f32 0.0, %v2205
      %2207 = vmatprep.mubr.f32.mxu0 0.0
      %2208 = vmatmul.mubr.f32.gmra.mrb[0].mxu0 %v1002
      %v2209 = vpop.f32.mrb[0].mxu0
      %v2210 = vadd.f32 0.0, %v2209
      %v2211 = vpop.f32.mrb[0].mxu0
      %v2212 = vadd.f32 0.0, %v2211
      %2213 = vmatprep.mubr.f32.mxu0 0.0
      %2214 = vmatmul.mubr.f32.gmra.mrb[0].mxu0 %v1005
      %v2215 = vpop.f32.mrb[0].mxu0
      %v2216 = vadd.f32 0.0, %v2215
      %v2217 = vpop.f32.mrb[0].mxu0
      %v2218 = vadd.f32 0.0, %v2217
      %2219 = vmatprep.mubr.f32.mxu0 0.0
      %2220 = vmatmul.mubr.f32.gmra.mrb[0].mxu0 %v1008
      %v2221 = vpop.f32.mrb[0].mxu0
      %v2222 = vadd.f32 0.0, %v2221
      %v2223 = vpop.f32.mrb[0].mxu0
      %v2224 = vadd.f32 0.0, %v2223
      %2225 = vmatprep.mubr.f32.mxu0 0.0
      %2226 = vmatmul.mubr.f32.gmra.mrb[0].mxu0 %v1011
      %v2227 = vpop.f32.mrb[0].mxu0
      %v2228 = vadd.f32 0.0, %v2227
      %v2229 = vpop.f32.mrb[0].mxu0
      %v2230 = vadd.f32 0.0, %v2229
      %2231 = vmatprep.mubr.f32.mxu0 0.0
      %2232 = vmatmul.mubr.f32.gmra.mrb[0].mxu0 %v1014
      %v2233 = vpop.f32.mrb[0].mxu0
      %v2234 = vadd.f32 0.0, %v2233
      %v2235 = vpop.f32.mrb[0].mxu0
      %v2236 = vadd.f32 0.0, %v2235
      %2237 = vmatprep.mubr.f32.mxu0 0.0
      %2238 = vmatmul.mubr.f32.gmra.mrb[0].mxu0 %v1017
      %v2239 = vpop.f32.mrb[0].mxu0
      %v2240 = vadd.f32 0.0, %v2239
      %v2241 = vpop.f32.mrb[0].mxu0
      %v2242 = vadd.f32 0.0, %v2241
      %2243 = vmatprep.mubr.f32.mxu0 0.0
      %2244 = vmatmul.mubr.f32.gmra.mrb[0].mxu0 %v1020
      %v2245 = vpop.f32.mrb[0].mxu0
      %v2246 = vadd.f32 0.0, %v2245
      %v2247 = vpop.f32.mrb[0].mxu0
      %v2248 = vadd.f32 0.0, %v2247
      %2249 = vmatprep.mubr.f32.mxu0 0.0
      %2250 = vmatmul.mubr.f32.gmra.mrb[0].mxu0 %v1023
      %v2251 = vpop.f32.mrb[0].mxu0
      %v2252 = vadd.f32 0.0, %v2251
      %v2253 = vpop.f32.mrb[0].mxu0
      %v2254 = vadd.f32 0.0, %v2253
      %2255 = vmatprep.mubr.f32.mxu0 0.0
      %2256 = vmatmul.mubr.f32.gmra.mrb[0].mxu0 %v1026
      %v2257 = vpop.f32.mrb[0].mxu0
      %v2258 = vadd.f32 0.0, %v2257
      %v2259 = vpop.f32.mrb[0].mxu0
      %v2260 = vadd.f32 0.0, %v2259
      %2261 = vmatprep.mubr.f32.mxu0 0.0
      %2262 = vmatmul.mubr.f32.gmra.mrb[0].mxu0 %v1029
      %v2263 = vpop.f32.mrb[0].mxu0
      %v2264 = vadd.f32 0.0, %v2263
      %v2265 = vpop.f32.mrb[0].mxu0
      %v2266 = vadd.f32 0.0, %v2265
      %2267 = vmatprep.mubr.f32.mxu0 0.0
      %2268 = vmatmul.mubr.f32.gmra.mrb[0].mxu0 %v1032
      %v2269 = vpop.f32.mrb[0].mxu0
      %v2270 = vadd.f32 0.0, %v2269
      %v2271 = vpop.f32.mrb[0].mxu0
      %v2272 = vadd.f32 0.0, %v2271
      %2273 = vmatprep.mubr.f32.mxu0 0.0
      %2274 = vmatmul.mubr.f32.gmra.mrb[0].mxu0 %v1035
      %v2275 = vpop.f32.mrb[0].mxu0
      %v2276 = vadd.f32 0.0, %v2275
      %v2277 = vpop.f32.mrb[0].mxu0
      %v2278 = vadd.f32 0.0, %v2277
      %2279 = vmatprep.mubr.f32.mxu0 0.0
      %2280 = vmatmul.mubr.f32.gmra.mrb[0].mxu0 %v1038
      %v2281 = vpop.f32.mrb[0].mxu0
      %v2282 = vadd.f32 0.0, %v2281
      %v2283 = vpop.f32.mrb[0].mxu0
      %v2284 = vadd.f32 0.0, %v2283
      %2285 = vmatprep.mubr.f32.mxu0 0.0
      %2286 = vmatmul.mubr.f32.gmra.mrb[0].mxu0 %v1041
      %v2287 = vpop.f32.mrb[0].mxu0
      %v2288 = vadd.f32 0.0, %v2287
      %v2289 = vpop.f32.mrb[0].mxu0
      %v2290 = vadd.f32 0.0, %v2289
      %2291 = vmatprep.mubr.f32.mxu0 0.0
      %2292 = vmatmul.mubr.f32.gmra.mrb[0].mxu0 %v1044
      %v2293 = vpop.f32.mrb[0].mxu0
      %v2294 = vadd.f32 0.0, %v2293
      %v2295 = vpop.f32.mrb[0].mxu0
      %v2296 = vadd.f32 0.0, %v2295
      %2297 = vmatprep.mubr.f32.mxu0 0.0
      %2298 = vmatmul.mubr.f32.gmra.mrb[0].mxu0 %v1047
      %v2299 = vpop.f32.mrb[0].mxu0
      %v2300 = vadd.f32 0.0, %v2299
      %v2301 = vpop.f32.mrb[0].mxu0
      %v2302 = vadd.f32 0.0, %v2301
      %2303 = vmatprep.mubr.f32.mxu0 0.0
      %2304 = vmatmul.mubr.f32.gmra.mrb[0].mxu0 %v1050
      %v2305 = vpop.f32.mrb[0].mxu0
      %v2306 = vadd.f32 0.0, %v2305
      %v2307 = vpop.f32.mrb[0].mxu0
      %v2308 = vadd.f32 0.0, %v2307
      %2309 = vmatprep.mubr.f32.mxu0 0.0
      %2310 = vmatmul.mubr.f32.gmra.mrb[0].mxu0 %v1053
      %v2311 = vpop.f32.mrb[0].mxu0
      %v2312 = vadd.f32 0.0, %v2311
      %v2313 = vpop.f32.mrb[0].mxu0
      %v2314 = vadd.f32 0.0, %v2313
      %2315 = vmatprep.mubr.f32.mxu0 0.0
      %2316 = vmatmul.mubr.f32.gmra.mrb[0].mxu0 %v1056
      %v2317 = vpop.f32.mrb[0].mxu0
      %v2318 = vadd.f32 0.0, %v2317
      %v2319 = vpop.f32.mrb[0].mxu0
      %v2320 = vadd.f32 0.0, %v2319
      %2321 = vmatprep.mubr.f32.mxu0 0.0
      %2322 = vmatmul.mubr.f32.gmra.mrb[0].mxu0 %v1059
      %v2323 = vpop.f32.mrb[0].mxu0
      %v2324 = vadd.f32 0.0, %v2323
      %v2325 = vpop.f32.mrb[0].mxu0
      %v2326 = vadd.f32 0.0, %v2325
      %2327 = vmatprep.mubr.f32.mxu0 0.0
      %2328 = vmatmul.mubr.f32.gmra.mrb[0].mxu0 %v1062
      %v2329 = vpop.f32.mrb[0].mxu0
      %v2330 = vadd.f32 0.0, %v2329
      %v2331 = vpop.f32.mrb[0].mxu0
      %v2332 = vadd.f32 0.0, %v2331
      %2333 = vmatprep.mubr.f32.mxu0 0.0
      %2334 = vmatmul.mubr.f32.gmra.mrb[0].mxu0 %v1065
      %v2335 = vpop.f32.mrb[0].mxu0
      %v2336 = vadd.f32 0.0, %v2335
      %v2337 = vpop.f32.mrb[0].mxu0
      %v2338 = vadd.f32 0.0, %v2337
      %2339 = vmatprep.mubr.f32.mxu0 0.0
      %2340 = vmatmul.mubr.f32.gmra.mrb[0].mxu0 %v1068
      %v2341 = vpop.f32.mrb[0].mxu0
      %v2342 = vadd.f32 0.0, %v2341
      %v2343 = vpop.f32.mrb[0].mxu0
      %v2344 = vadd.f32 0.0, %v2343
      %2345 = vmatprep.mubr.f32.mxu0 0.0
      %2346 = vmatmul.mubr.f32.gmra.mrb[0].mxu0 %v1071
      %v2347 = vpop.f32.mrb[0].mxu0
      %v2348 = vadd.f32 0.0, %v2347
      %v2349 = vpop.f32.mrb[0].mxu0
      %v2350 = vadd.f32 0.0, %v2349
      %2351 = vmatprep.mubr.f32.mxu0 0.0
      %2352 = vmatmul.mubr.f32.gmra.mrb[0].mxu0 %v1074
      %v2353 = vpop.f32.mrb[0].mxu0
      %v2354 = vadd.f32 0.0, %v2353
      %v2355 = vpop.f32.mrb[0].mxu0
      %v2356 = vadd.f32 0.0, %v2355
      %2357 = vmatprep.mubr.f32.mxu0 0.0
      %2358 = vmatmul.mubr.f32.gmra.mrb[0].mxu0 %v1077
      %v2359 = vpop.f32.mrb[0].mxu0
      %v2360 = vadd.f32 0.0, %v2359
      %v2361 = vpop.f32.mrb[0].mxu0
      %v2362 = vadd.f32 0.0, %v2361
      %2363 = vmatprep.mubr.f32.mxu0 0.0
      %2364 = vmatmul.mubr.f32.gmra.mrb[0].mxu0 %v1080
      %v2365 = vpop.f32.mrb[0].mxu0
      %v2366 = vadd.f32 0.0, %v2365
      %v2367 = vpop.f32.mrb[0].mxu0
      %v2368 = vadd.f32 0.0, %v2367
      %2369 = vmatprep.mubr.f32.mxu0 0.0
      %2370 = vmatmul.mubr.f32.gmra.mrb[0].mxu0 %v1083
      %v2371 = vpop.f32.mrb[0].mxu0
      %v2372 = vadd.f32 0.0, %v2371
      %v2373 = vpop.f32.mrb[0].mxu0
      %v2374 = vadd.f32 0.0, %v2373
      %2375 = vmatprep.mubr.f32.mxu0 0.0
      %2376 = vmatmul.mubr.f32.gmra.mrb[0].mxu0 %v1086
      %v2377 = vpop.f32.mrb[0].mxu0
      %v2378 = vadd.f32 0.0, %v2377
      %v2379 = vpop.f32.mrb[0].mxu0
      %v2380 = vadd.f32 0.0, %v2379
      %2381 = vmatprep.mubr.f32.mxu0 0.0
      %2382 = vmatmul.mubr.f32.gmra.mrb[0].mxu0 %v1089
      %v2383 = vpop.f32.mrb[0].mxu0
      %v2384 = vadd.f32 0.0, %v2383
      %v2385 = vpop.f32.mrb[0].mxu0
      %v2386 = vadd.f32 0.0, %v2385
      %2387 = vmatprep.mubr.f32.mxu0 0.0
      %2388 = vmatmul.mubr.f32.gmra.mrb[0].mxu0 %v1092
      %v2389 = vpop.f32.mrb[0].mxu0
      %v2390 = vadd.f32 0.0, %v2389
      %v2391 = vpop.f32.mrb[0].mxu0
      %v2392 = vadd.f32 0.0, %v2391
      %2393 = vmatprep.mubr.f32.mxu0 0.0
      %2394 = vmatmul.mubr.f32.gmra.mrb[0].mxu0 %v1095
      %v2395 = vpop.f32.mrb[0].mxu0
      %v2396 = vadd.f32 0.0, %v2395
      %v2397 = vpop.f32.mrb[0].mxu0
      %v2398 = vadd.f32 0.0, %v2397
      %2399 = vmatprep.mubr.f32.mxu0 0.0
      %2400 = vmatmul.mubr.f32.gmra.mrb[0].mxu0 %v1098
      %v2401 = vpop.f32.mrb[0].mxu0
      %v2402 = vadd.f32 0.0, %v2401
      %v2403 = vpop.f32.mrb[0].mxu0
      %v2404 = vadd.f32 0.0, %v2403
      %2405 = vmatprep.mubr.f32.mxu0 0.0
      %2406 = vmatmul.mubr.f32.gmra.mrb[0].mxu0 %v1101
      %v2407 = vpop.f32.mrb[0].mxu0
      %v2408 = vadd.f32 0.0, %v2407
      %v2409 = vpop.f32.mrb[0].mxu0
      %v2410 = vadd.f32 0.0, %v2409
      %2411 = vmatprep.mubr.f32.mxu0 0.0
      %2412 = vmatmul.mubr.f32.gmra.mrb[0].mxu0 %v1104
      %v2413 = vpop.f32.mrb[0].mxu0
      %v2414 = vadd.f32 0.0, %v2413
      %v2415 = vpop.f32.mrb[0].mxu0
      %v2416 = vadd.f32 0.0, %v2415
      %2417 = vmatprep.mubr.f32.mxu0 0.0
      %2418 = vmatmul.mubr.f32.gmra.mrb[0].mxu0 %v1107
      %v2419 = vpop.f32.mrb[0].mxu0
      %v2420 = vadd.f32 0.0, %v2419
      %v2421 = vpop.f32.mrb[0].mxu0
      %v2422 = vadd.f32 0.0, %v2421
      %2423 = vmatprep.mubr.f32.mxu0 0.0
      %2424 = vmatmul.mubr.f32.gmra.mrb[0].mxu0 %v1110
      %v2425 = vpop.f32.mrb[0].mxu0
      %v2426 = vadd.f32 0.0, %v2425
      %v2427 = vpop.f32.mrb[0].mxu0
      %v2428 = vadd.f32 0.0, %v2427
      %2429 = vmatprep.mubr.f32.mxu0 0.0
      %2430 = vmatmul.mubr.f32.gmra.mrb[0].mxu0 %v1113
      %v2431 = vpop.f32.mrb[0].mxu0
      %v2432 = vadd.f32 0.0, %v2431
      %v2433 = vpop.f32.mrb[0].mxu0
      %v2434 = vadd.f32 0.0, %v2433
      %2435 = vmatprep.mubr.f32.mxu0 0.0
      %2436 = vmatmul.mubr.f32.gmra.mrb[0].mxu0 %v1116
      %v2437 = vpop.f32.mrb[0].mxu0
      %v2438 = vadd.f32 0.0, %v2437
      %v2439 = vpop.f32.mrb[0].mxu0
      %v2440 = vadd.f32 0.0, %v2439
      %2441 = vmatprep.mubr.f32.mxu0 0.0
      %2442 = vmatmul.mubr.f32.gmra.mrb[0].mxu0 %v1119
      %v2443 = vpop.f32.mrb[0].mxu0
      %v2444 = vadd.f32 0.0, %v2443
      %v2445 = vpop.f32.mrb[0].mxu0
      %v2446 = vadd.f32 0.0, %v2445
      %2447 = vmatprep.mubr.f32.mxu0 0.0
      %2448 = vmatmul.mubr.f32.gmra.mrb[0].mxu0 %v1122
      %v2449 = vpop.f32.mrb[0].mxu0
      %v2450 = vadd.f32 0.0, %v2449
      %v2451 = vpop.f32.mrb[0].mxu0
      %v2452 = vadd.f32 0.0, %v2451
      %2453 = vmatprep.mubr.f32.mxu0 0.0
      %2454 = vmatmul.mubr.f32.gmra.mrb[0].mxu0 %v1125
      %v2455 = vpop.f32.mrb[0].mxu0
      %v2456 = vadd.f32 0.0, %v2455
      %v2457 = vpop.f32.mrb[0].mxu0
      %v2458 = vadd.f32 0.0, %v2457
      %2459 = vmatprep.mubr.f32.mxu0 0.0
      %2460 = vmatmul.mubr.f32.gmra.mrb[0].mxu0 %v1128
      %v2461 = vpop.f32.mrb[0].mxu0
      %v2462 = vadd.f32 0.0, %v2461
      %v2463 = vpop.f32.mrb[0].mxu0
      %v2464 = vadd.f32 0.0, %v2463
      %2465 = vmatprep.mubr.f32.mxu0 0.0
      %2466 = vmatmul.mubr.f32.gmra.mrb[0].mxu0 %v1131
      %v2467 = vpop.f32.mrb[0].mxu0
      %v2468 = vadd.f32 0.0, %v2467
      %v2469 = vpop.f32.mrb[0].mxu0
      %v2470 = vadd.f32 0.0, %v2469
      %2471 = vmatprep.mubr.f32.mxu0 0.0
      %2472 = vmatmul.mubr.f32.gmra.mrb[0].mxu0 %v1134
      %v2473 = vpop.f32.mrb[0].mxu0
      %v2474 = vadd.f32 0.0, %v2473
      %v2475 = vpop.f32.mrb[0].mxu0
      %v2476 = vadd.f32 0.0, %v2475
      %2477 = vmatprep.mubr.f32.mxu0 0.0
      %2478 = vmatmul.mubr.f32.gmra.mrb[0].mxu0 %v1137
      %v2479 = vpop.f32.mrb[0].mxu0
      %v2480 = vadd.f32 0.0, %v2479
      %v2481 = vpop.f32.mrb[0].mxu0
      %v2482 = vadd.f32 0.0, %v2481
      %2483 = vmatprep.mubr.f32.mxu0 0.0
      %2484 = vmatmul.mubr.f32.gmra.mrb[0].mxu0 %v1140
      %v2485 = vpop.f32.mrb[0].mxu0
      %v2486 = vadd.f32 0.0, %v2485
      %v2487 = vpop.f32.mrb[0].mxu0
      %v2488 = vadd.f32 0.0, %v2487
      %2489 = vmatprep.mubr.f32.mxu0 0.0
      %2490 = vmatmul.mubr.f32.gmra.mrb[0].mxu0 %v1143
      %v2491 = vpop.f32.mrb[0].mxu0
      %v2492 = vadd.f32 0.0, %v2491
      %v2493 = vpop.f32.mrb[0].mxu0
      %v2494 = vadd.f32 0.0, %v2493
      %2495 = vmatprep.mubr.f32.mxu0 0.0
      %2496 = vmatmul.mubr.f32.gmra.mrb[0].mxu0 %v1146
      %v2497 = vpop.f32.mrb[0].mxu0
      %v2498 = vadd.f32 0.0, %v2497
      %v2499 = vpop.f32.mrb[0].mxu0
      %v2500 = vadd.f32 0.0, %v2499
      %2501 = vmatprep.mubr.f32.mxu0 0.0
      %2502 = vmatmul.mubr.f32.gmra.mrb[0].mxu0 %v1149
      %v2503 = vpop.f32.mrb[0].mxu0
      %v2504 = vadd.f32 0.0, %v2503
      %v2505 = vpop.f32.mrb[0].mxu0
      %v2506 = vadd.f32 0.0, %v2505
      %2507 = vmatprep.mubr.f32.mxu0 0.0
      %2508 = vmatmul.mubr.f32.gmra.mrb[0].mxu0 %v1152
      %v2509 = vpop.f32.mrb[0].mxu0
      %v2510 = vadd.f32 0.0, %v2509
      %v2511 = vpop.f32.mrb[0].mxu0
      %v2512 = vadd.f32 0.0, %v2511
      %2513 = vmatprep.mubr.f32.mxu0 0.0
      %2514 = vmatmul.mubr.f32.gmra.mrb[0].mxu0 %v1155
      %v2515 = vpop.f32.mrb[0].mxu0
      %v2516 = vadd.f32 0.0, %v2515
      %v2517 = vpop.f32.mrb[0].mxu0
      %v2518 = vadd.f32 0.0, %v2517
      %2519 = vmatprep.mubr.f32.mxu0 0.0
      %2520 = vmatmul.mubr.f32.gmra.mrb[0].mxu0 %v1158
      %v2521 = vpop.f32.mrb[0].mxu0
      %v2522 = vadd.f32 0.0, %v2521
      %v2523 = vpop.f32.mrb[0].mxu0
      %v2524 = vadd.f32 0.0, %v2523
      %2525 = vmatprep.mubr.f32.mxu0 0.0
      %2526 = vmatmul.mubr.f32.gmra.mrb[0].mxu0 %v1161
      %v2527 = vpop.f32.mrb[0].mxu0
      %v2528 = vadd.f32 0.0, %v2527
      %v2529 = vpop.f32.mrb[0].mxu0
      %v2530 = vadd.f32 0.0, %v2529
      %2531 = vmatprep.mubr.f32.mxu0 0.0
      %2532 = vmatmul.mubr.f32.gmra.mrb[0].mxu0 %v1164
      %v2533 = vpop.f32.mrb[0].mxu0
      %v2534 = vadd.f32 0.0, %v2533
      %v2535 = vpop.f32.mrb[0].mxu0
      %v2536 = vadd.f32 0.0, %v2535
      %2537 = vmatprep.mubr.f32.mxu0 0.0
      %2538 = vmatmul.mubr.f32.gmra.mrb[0].mxu0 %v1167
      %v2539 = vpop.f32.mrb[0].mxu0
      %v2540 = vadd.f32 0.0, %v2539
      %v2541 = vpop.f32.mrb[0].mxu0
      %v2542 = vadd.f32 0.0, %v2541
      %2543 = vmatprep.mubr.f32.mxu0 0.0
      %2544 = vmatmul.mubr.f32.gmra.mrb[0].mxu0 %v1170
      %v2545 = vpop.f32.mrb[0].mxu0
      %v2546 = vadd.f32 0.0, %v2545
      %v2547 = vpop.f32.mrb[0].mxu0
      %v2548 = vadd.f32 0.0, %v2547
      %2549 = vmatprep.mubr.f32.mxu0 0.0
      %2550 = vmatmul.mubr.f32.gmra.mrb[0].mxu0 %v1173
      %v2551 = vpop.f32.mrb[0].mxu0
      %v2552 = vadd.f32 0.0, %v2551
      %v2553 = vpop.f32.mrb[0].mxu0
      %v2554 = vadd.f32 0.0, %v2553
      %2555 = vmatprep.mubr.f32.mxu0 0.0
      %2556 = vmatmul.mubr.f32.gmra.mrb[0].mxu0 %v1176
      %v2557 = vpop.f32.mrb[0].mxu0
      %v2558 = vadd.f32 0.0, %v2557
      %v2559 = vpop.f32.mrb[0].mxu0
      %v2560 = vadd.f32 0.0, %v2559
      %2561 = vmatprep.mubr.f32.mxu0 0.0
      %2562 = vmatmul.mubr.f32.gmra.mrb[0].mxu0 %v1179
      %v2563 = vpop.f32.mrb[0].mxu0
      %v2564 = vadd.f32 0.0, %v2563
      %v2565 = vpop.f32.mrb[0].mxu0
      %v2566 = vadd.f32 0.0, %v2565
      %2567 = vmatprep.mubr.f32.mxu0 0.0
      %2568 = vmatmul.mubr.f32.gmra.mrb[0].mxu0 %v1182
      %v2569 = vpop.f32.mrb[0].mxu0
      %v2570 = vadd.f32 0.0, %v2569
      %v2571 = vpop.f32.mrb[0].mxu0
      %v2572 = vadd.f32 0.0, %v2571
      %2573 = vmatprep.mubr.f32.mxu0 0.0
      %2574 = vmatmul.mubr.f32.gmra.mrb[0].mxu0 %v1185
      %v2575 = vpop.f32.mrb[0].mxu0
      %v2576 = vadd.f32 0.0, %v2575
      %v2577 = vpop.f32.mrb[0].mxu0
      %v2578 = vadd.f32 0.0, %v2577
      %2579 = vmatprep.mubr.f32.mxu0 0.0
      %2580 = vmatmul.mubr.f32.gmra.mrb[0].mxu0 %v1188
      %v2581 = vpop.f32.mrb[0].mxu0
      %v2582 = vadd.f32 0.0, %v2581
      %v2583 = vpop.f32.mrb[0].mxu0
      %v2584 = vadd.f32 0.0, %v2583
      %2585 = vmatprep.mubr.f32.mxu0 0.0
      %2586 = vmatmul.mubr.f32.gmra.mrb[0].mxu0 %v1191
      %v2587 = vpop.f32.mrb[0].mxu0
      %v2588 = vadd.f32 0.0, %v2587
      %v2589 = vpop.f32.mrb[0].mxu0
      %v2590 = vadd.f32 0.0, %v2589
      %2591 = vmatprep.mubr.f32.mxu0 0.0
      %2592 = vmatmul.mubr.f32.gmra.mrb[0].mxu0 %v1194
      %v2593 = vpop.f32.mrb[0].mxu0
      %v2594 = vadd.f32 0.0, %v2593
      %v2595 = vpop.f32.mrb[0].mxu0
      %v2596 = vadd.f32 0.0, %v2595
      %2597 = vmatprep.mubr.f32.mxu0 0.0
      %2598 = vmatmul.mubr.f32.gmra.mrb[0].mxu0 %v1197
      %v2599 = vpop.f32.mrb[0].mxu0
      %v2600 = vadd.f32 0.0, %v2599
      %v2601 = vpop.f32.mrb[0].mxu0
      %v2602 = vadd.f32 0.0, %v2601
      %2603 = vmatprep.mubr.f32.mxu0 0.0
      %2604 = vmatmul.mubr.f32.gmra.mrb[0].mxu0 %v1200
      %v2605 = vpop.f32.mrb[0].mxu0
      %v2606 = vadd.f32 0.0, %v2605
      %v2607 = vpop.f32.mrb[0].mxu0
      %v2608 = vadd.f32 0.0, %v2607
      %2609 = vmatprep.mubr.f32.mxu0 0.0
      %2610 = vmatmul.mubr.f32.gmra.mrb[0].mxu0 %v1203
      %v2611 = vpop.f32.mrb[0].mxu0
      %v2612 = vadd.f32 0.0, %v2611
      %v2613 = vpop.f32.mrb[0].mxu0
      %v2614 = vadd.f32 0.0, %v2613
      %2615 = vmatprep.mubr.f32.mxu0 0.0
      %2616 = vmatmul.mubr.f32.gmra.mrb[0].mxu0 %v1206
      %v2617 = vpop.f32.mrb[0].mxu0
      %v2618 = vadd.f32 0.0, %v2617
      %v2619 = vpop.f32.mrb[0].mxu0
      %v2620 = vadd.f32 0.0, %v2619
      %2621 = vmatprep.mubr.f32.mxu0 0.0
      %2622 = vmatmul.mubr.f32.gmra.mrb[0].mxu0 %v1209
      %v2623 = vpop.f32.mrb[0].mxu0
      %v2624 = vadd.f32 0.0, %v2623
      %v2625 = vpop.f32.mrb[0].mxu0
      %v2626 = vadd.f32 0.0, %v2625
      %2627 = vmatprep.mubr.f32.mxu0 0.0
      %2628 = vmatmul.mubr.f32.gmra.mrb[0].mxu0 %v1212
      %v2629 = vpop.f32.mrb[0].mxu0
      %v2630 = vadd.f32 0.0, %v2629
      %v2631 = vpop.f32.mrb[0].mxu0
      %v2632 = vadd.f32 0.0, %v2631
      %2633 = vmatprep.mubr.f32.mxu0 0.0
      %2634 = vmatmul.mubr.f32.gmra.mrb[0].mxu0 %v1215
      %v2635 = vpop.f32.mrb[0].mxu0
      %v2636 = vadd.f32 0.0, %v2635
      %v2637 = vpop.f32.mrb[0].mxu0
      %v2638 = vadd.f32 0.0, %v2637
      %2639 = vmatprep.mubr.f32.mxu0 0.0
      %2640 = vmatmul.mubr.f32.gmra.mrb[0].mxu0 %v1218
      %v2641 = vpop.f32.mrb[0].mxu0
      %v2642 = vadd.f32 0.0, %v2641
      %v2643 = vpop.f32.mrb[0].mxu0
      %v2644 = vadd.f32 0.0, %v2643
      %2645 = vmatprep.mubr.f32.mxu0 0.0
      %2646 = vmatmul.mubr.f32.gmra.mrb[0].mxu0 %v1221
      %v2647 = vpop.f32.mrb[0].mxu0
      %v2648 = vadd.f32 0.0, %v2647
      %v2649 = vpop.f32.mrb[0].mxu0
      %v2650 = vadd.f32 0.0, %v2649
      %2651 = vmatprep.mubr.f32.mxu0 0.0
      %2652 = vmatmul.mubr.f32.gmra.mrb[0].mxu0 %v1224
      %v2653 = vpop.f32.mrb[0].mxu0
      %v2654 = vadd.f32 0.0, %v2653
      %v2655 = vpop.f32.mrb[0].mxu0
      %v2656 = vadd.f32 0.0, %v2655
      %2657 = vmatprep.mubr.f32.mxu0 0.0
      %2658 = vmatmul.mubr.f32.gmra.mrb[0].mxu0 %v1227
      %v2659 = vpop.f32.mrb[0].mxu0
      %v2660 = vadd.f32 0.0, %v2659
      %v2661 = vpop.f32.mrb[0].mxu0
      %v2662 = vadd.f32 0.0, %v2661
      %2663 = vmatprep.mubr.f32.mxu0 0.0
      %2664 = vmatmul.mubr.f32.gmra.mrb[0].mxu0 %v1230
      %v2665 = vpop.f32.mrb[0].mxu0
      %v2666 = vadd.f32 0.0, %v2665
      %v2667 = vpop.f32.mrb[0].mxu0
      %v2668 = vadd.f32 0.0, %v2667
      %2669 = vmatprep.mubr.f32.mxu0 0.0
      %2670 = vmatmul.mubr.f32.gmra.mrb[0].mxu0 %v1233
      %v2671 = vpop.f32.mrb[0].mxu0
      %v2672 = vadd.f32 0.0, %v2671
      %v2673 = vpop.f32.mrb[0].mxu0
      %v2674 = vadd.f32 0.0, %v2673
      %2675 = vmatprep.mubr.f32.mxu0 0.0
      %2676 = vmatmul.mubr.f32.gmra.mrb[0].mxu0 %v1236
      %v2677 = vpop.f32.mrb[0].mxu0
      %v2678 = vadd.f32 0.0, %v2677
      %v2679 = vpop.f32.mrb[0].mxu0
      %v2680 = vadd.f32 0.0, %v2679
      %2681 = vmatprep.mubr.f32.mxu0 0.0
      %2682 = vmatmul.mubr.f32.gmra.mrb[0].mxu0 %v1239
      %v2683 = vpop.f32.mrb[0].mxu0
      %v2684 = vadd.f32 0.0, %v2683
      %v2685 = vpop.f32.mrb[0].mxu0
      %v2686 = vadd.f32 0.0, %v2685
      %2687 = vmatprep.mubr.f32.mxu0 0.0
      %2688 = vmatmul.mubr.f32.gmra.mrb[0].mxu0 %v1242
      %v2689 = vpop.f32.mrb[0].mxu0
      %v2690 = vadd.f32 0.0, %v2689
      %v2691 = vpop.f32.mrb[0].mxu0
      %v2692 = vadd.f32 0.0, %v2691
      %2693 = vmatprep.mubr.f32.mxu0 0.0
      %2694 = vmatmul.mubr.f32.gmra.mrb[0].mxu0 %v1245
      %v2695 = vpop.f32.mrb[0].mxu0
      %v2696 = vadd.f32 0.0, %v2695
      %v2697 = vpop.f32.mrb[0].mxu0
      %v2698 = vadd.f32 0.0, %v2697
      %2699 = vmatprep.mubr.f32.mxu0 0.0
      %2700 = vmatmul.mubr.f32.gmra.mrb[0].mxu0 %v1248
      %v2701 = vpop.f32.mrb[0].mxu0
      %v2702 = vadd.f32 0.0, %v2701
      %v2703 = vpop.f32.mrb[0].mxu0
      %v2704 = vadd.f32 0.0, %v2703
      %2705 = vmatprep.mubr.f32.mxu0 0.0
      %2706 = vmatmul.mubr.f32.gmra.mrb[0].mxu0 %v1251
      %v2707 = vpop.f32.mrb[0].mxu0
      %v2708 = vadd.f32 0.0, %v2707
      %v2709 = vpop.f32.mrb[0].mxu0
      %v2710 = vadd.f32 0.0, %v2709
      %2711 = vmatprep.mubr.f32.mxu0 0.0
      %2712 = vmatmul.mubr.f32.gmra.mrb[0].mxu0 %v1254
      %v2713 = vpop.f32.mrb[0].mxu0
      %v2714 = vadd.f32 0.0, %v2713
      %v2715 = vpop.f32.mrb[0].mxu0
      %v2716 = vadd.f32 0.0, %v2715
      %2717 = vmatprep.mubr.f32.mxu0 0.0
      %2718 = vmatmul.mubr.f32.gmra.mrb[0].mxu0 %v1257
      %v2719 = vpop.f32.mrb[0].mxu0
      %v2720 = vadd.f32 0.0, %v2719
      %v2721 = vpop.f32.mrb[0].mxu0
      %v2722 = vadd.f32 0.0, %v2721
      %2723 = vmatprep.mubr.f32.mxu0 0.0
      %2724 = vmatmul.mubr.f32.gmra.mrb[0].mxu0 %v1260
      %v2725 = vpop.f32.mrb[0].mxu0
      %v2726 = vadd.f32 0.0, %v2725
      %v2727 = vpop.f32.mrb[0].mxu0
      %v2728 = vadd.f32 0.0, %v2727
      %2729 = vmatprep.mubr.f32.mxu0 0.0
      %2730 = vmatmul.mubr.f32.gmra.mrb[0].mxu0 %v1263
      %v2731 = vpop.f32.mrb[0].mxu0
      %v2732 = vadd.f32 0.0, %v2731
      %v2733 = vpop.f32.mrb[0].mxu0
      %v2734 = vadd.f32 0.0, %v2733
      %2735 = vmatprep.mubr.f32.mxu0 0.0
      %2736 = vmatmul.mubr.f32.gmra.mrb[0].mxu0 %v1266
      %v2737 = vpop.f32.mrb[0].mxu0
      %v2738 = vadd.f32 0.0, %v2737
      %v2739 = vpop.f32.mrb[0].mxu0
      %v2740 = vadd.f32 0.0, %v2739
      %2741 = vmatprep.mubr.f32.mxu0 0.0
      %2742 = vmatmul.mubr.f32.gmra.mrb[0].mxu0 %v1269
      %v2743 = vpop.f32.mrb[0].mxu0
      %v2744 = vadd.f32 0.0, %v2743
      %v2745 = vpop.f32.mrb[0].mxu0
      %v2746 = vadd.f32 0.0, %v2745
      %2747 = vmatprep.mubr.f32.mxu0 0.0
      %2748 = vmatmul.mubr.f32.gmra.mrb[0].mxu0 %v1272
      %v2749 = vpop.f32.mrb[0].mxu0
      %v2750 = vadd.f32 0.0, %v2749
      %v2751 = vpop.f32.mrb[0].mxu0
      %v2752 = vadd.f32 0.0, %v2751
      %2753 = vmatprep.mubr.f32.mxu0 0.0
      %2754 = vmatmul.mubr.f32.gmra.mrb[0].mxu0 %v1275
      %v2755 = vpop.f32.mrb[0].mxu0
      %v2756 = vadd.f32 0.0, %v2755
      %v2757 = vpop.f32.mrb[0].mxu0
      %v2758 = vadd.f32 0.0, %v2757
      %2759 = vmatprep.mubr.f32.mxu0 0.0
      %2760 = vmatmul.mubr.f32.gmra.mrb[0].mxu0 %v1278
      %v2761 = vpop.f32.mrb[0].mxu0
      %v2762 = vadd.f32 0.0, %v2761
      %v2763 = vpop.f32.mrb[0].mxu0
      %v2764 = vadd.f32 0.0, %v2763
      %2765 = vmatprep.mubr.f32.mxu0 0.0
      %2766 = vmatmul.mubr.f32.gmra.mrb[0].mxu0 %v1281
      %v2767 = vpop.f32.mrb[0].mxu0
      %v2768 = vadd.f32 0.0, %v2767
      %v2769 = vpop.f32.mrb[0].mxu0
      %v2770 = vadd.f32 0.0, %v2769
      %2771 = vmatprep.mubr.f32.mxu0 0.0
      %2772 = vmatmul.mubr.f32.gmra.mrb[0].mxu0 %v1284
      %v2773 = vpop.f32.mrb[0].mxu0
      %v2774 = vadd.f32 0.0, %v2773
      %v2775 = vpop.f32.mrb[0].mxu0
      %v2776 = vadd.f32 0.0, %v2775
      %2777 = vmatprep.mubr.f32.mxu0 0.0
      %2778 = vmatmul.mubr.f32.gmra.mrb[0].mxu0 %v1287
      %v2779 = vpop.f32.mrb[0].mxu0
      %v2780 = vadd.f32 0.0, %v2779
      %v2781 = vpop.f32.mrb[0].mxu0
      %v2782 = vadd.f32 0.0, %v2781
      %2783 = vmatprep.mubr.f32.mxu0 0.0
      %2784 = vmatmul.mubr.f32.gmra.mrb[0].mxu0 %v1290
      %v2785 = vpop.f32.mrb[0].mxu0
      %v2786 = vadd.f32 0.0, %v2785
      %v2787 = vpop.f32.mrb[0].mxu0
      %v2788 = vadd.f32 0.0, %v2787
      %2789 = vmatprep.mubr.f32.mxu0 0.0
      %2790 = vmatmul.mubr.f32.gmra.mrb[0].mxu0 %v1293
      %v2791 = vpop.f32.mrb[0].mxu0
      %v2792 = vadd.f32 0.0, %v2791
      %v2793 = vpop.f32.mrb[0].mxu0
      %v2794 = vadd.f32 0.0, %v2793
      %2795 = vmatprep.mubr.f32.mxu0 0.0
      %2796 = vmatmul.mubr.f32.gmra.mrb[0].mxu0 %v1296
      %v2797 = vpop.f32.mrb[0].mxu0
      %v2798 = vadd.f32 0.0, %v2797
      %v2799 = vpop.f32.mrb[0].mxu0
      %v2800 = vadd.f32 0.0, %v2799
      %2801 = vmatprep.mubr.f32.mxu0 0.0
      %2802 = vmatmul.mubr.f32.gmra.mrb[0].mxu0 %v1299
      %v2803 = vpop.f32.mrb[0].mxu0
      %v2804 = vadd.f32 0.0, %v2803
      %v2805 = vpop.f32.mrb[0].mxu0
      %v2806 = vadd.f32 0.0, %v2805
      %2807 = vmatprep.mubr.f32.mxu0 0.0
      %2808 = vmatmul.mubr.f32.gmra.mrb[0].mxu0 %v1302
      %v2809 = vpop.f32.mrb[0].mxu0
      %v2810 = vadd.f32 0.0, %v2809
      %v2811 = vpop.f32.mrb[0].mxu0
      %v2812 = vadd.f32 0.0, %v2811
      %2813 = vmatprep.mubr.f32.mxu0 0.0
      %2814 = vmatmul.mubr.f32.gmra.mrb[0].mxu0 %v1305
      %v2815 = vpop.f32.mrb[0].mxu0
      %v2816 = vadd.f32 0.0, %v2815
      %v2817 = vpop.f32.mrb[0].mxu0
      %v2818 = vadd.f32 0.0, %v2817
      %2819 = vmatprep.mubr.f32.mxu0 0.0
      %2820 = vmatmul.mubr.f32.gmra.mrb[0].mxu0 %v1308
      %v2821 = vpop.f32.mrb[0].mxu0
      %v2822 = vadd.f32 0.0, %v2821
      %v2823 = vpop.f32.mrb[0].mxu0
      %v2824 = vadd.f32 0.0, %v2823
      %2825 = vmatprep.mubr.f32.mxu0 0.0
      %2826 = vmatmul.mubr.f32.gmra.mrb[0].mxu0 %v1311
      %v2827 = vpop.f32.mrb[0].mxu0
      %v2828 = vadd.f32 0.0, %v2827
      %v2829 = vpop.f32.mrb[0].mxu0
      %v2830 = vadd.f32 0.0, %v2829
      %2831 = vmatprep.mubr.f32.mxu0 0.0
      %2832 = vmatmul.mubr.f32.gmra.mrb[0].mxu0 %v1314
      %v2833 = vpop.f32.mrb[0].mxu0
      %v2834 = vadd.f32 0.0, %v2833
      %v2835 = vpop.f32.mrb[0].mxu0
      %v2836 = vadd.f32 0.0, %v2835
      %2837 = vmatprep.mubr.f32.mxu0 0.0
      %2838 = vmatmul.mubr.f32.gmra.mrb[0].mxu0 %v1317
      %v2839 = vpop.f32.mrb[0].mxu0
      %v2840 = vadd.f32 0.0, %v2839
      %v2841 = vpop.f32.mrb[0].mxu0
      %v2842 = vadd.f32 0.0, %v2841
      %2843 = vmatprep.mubr.f32.mxu0 0.0
      %2844 = vmatmul.mubr.f32.gmra.mrb[0].mxu0 %v1320
      %v2845 = vpop.f32.mrb[0].mxu0
      %v2846 = vadd.f32 0.0, %v2845
      %v2847 = vpop.f32.mrb[0].mxu0
      %v2848 = vadd.f32 0.0, %v2847
      %2849 = vmatprep.mubr.f32.mxu0 0.0
      %2850 = vmatmul.mubr.f32.gmra.mrb[0].mxu0 %v1323
      %v2851 = vpop.f32.mrb[0].mxu0
      %v2852 = vadd.f32 0.0, %v2851
      %v2853 = vpop.f32.mrb[0].mxu0
      %v2854 = vadd.f32 0.0, %v2853
      %2855 = vmatprep.mubr.f32.mxu0 0.0
      %2856 = vmatmul.mubr.f32.gmra.mrb[0].mxu0 %v1326
      %v2857 = vpop.f32.mrb[0].mxu0
      %v2858 = vadd.f32 0.0, %v2857
      %v2859 = vpop.f32.mrb[0].mxu0
      %v2860 = vadd.f32 0.0, %v2859
      %2861 = vmatprep.mubr.f32.mxu0 0.0
      %2862 = vmatmul.mubr.f32.gmra.mrb[0].mxu0 %v1329
      %v2863 = vpop.f32.mrb[0].mxu0
      %v2864 = vadd.f32 0.0, %v2863
      %v2865 = vpop.f32.mrb[0].mxu0
      %v2866 = vadd.f32 0.0, %v2865
      %2867 = vmatprep.mubr.f32.mxu0 0.0
      %2868 = vmatmul.mubr.f32.gmra.mrb[0].mxu0 %v1332
      %v2869 = vpop.f32.mrb[0].mxu0
      %v2870 = vadd.f32 0.0, %v2869
      %v2871 = vpop.f32.mrb[0].mxu0
      %v2872 = vadd.f32 0.0, %v2871
      %2873 = vmatprep.mubr.f32.mxu0 0.0
      %2874 = vmatmul.mubr.f32.gmra.mrb[0].mxu0 %v1335
      %v2875 = vpop.f32.mrb[0].mxu0
      %v2876 = vadd.f32 0.0, %v2875
      %v2877 = vpop.f32.mrb[0].mxu0
      %v2878 = vadd.f32 0.0, %v2877
      %2879 = vmatprep.mubr.f32.mxu0 0.0
      %2880 = vmatmul.mubr.f32.gmra.mrb[0].mxu0 %v1338
      %v2881 = vpop.f32.mrb[0].mxu0
      %v2882 = vadd.f32 0.0, %v2881
      %v2883 = vpop.f32.mrb[0].mxu0
      %v2884 = vadd.f32 0.0, %v2883
      %2885 = vmatprep.mubr.f32.mxu0 0.0
      %2886 = vmatmul.mubr.f32.gmra.mrb[0].mxu0 %v1341
      %v2887 = vpop.f32.mrb[0].mxu0
      %v2888 = vadd.f32 0.0, %v2887
      %v2889 = vpop.f32.mrb[0].mxu0
      %v2890 = vadd.f32 0.0, %v2889
      %2891 = vmatprep.mubr.f32.mxu0 0.0
      %2892 = vmatmul.mubr.f32.gmra.mrb[0].mxu0 %v1344
      %v2893 = vpop.f32.mrb[0].mxu0
      %v2894 = vadd.f32 0.0, %v2893
      %v2895 = vpop.f32.mrb[0].mxu0
      %v2896 = vadd.f32 0.0, %v2895
      %2897 = vmatprep.mubr.f32.mxu0 0.0
      %2898 = vmatmul.mubr.f32.gmra.mrb[0].mxu0 %v1347
      %v2899 = vpop.f32.mrb[0].mxu0
      %v2900 = vadd.f32 0.0, %v2899
      %v2901 = vpop.f32.mrb[0].mxu0
      %v2902 = vadd.f32 0.0, %v2901
      %2903 = vmatprep.mubr.f32.mxu0 0.0
      %2904 = vmatmul.mubr.f32.gmra.mrb[0].mxu0 %v1350
      %v2905 = vpop.f32.mrb[0].mxu0
      %v2906 = vadd.f32 0.0, %v2905
      %v2907 = vpop.f32.mrb[0].mxu0
      %v2908 = vadd.f32 0.0, %v2907
      %2909 = vmatprep.mubr.f32.mxu0 0.0
      %2910 = vmatmul.mubr.f32.gmra.mrb[0].mxu0 %v1353
      %v2911 = vpop.f32.mrb[0].mxu0
      %v2912 = vadd.f32 0.0, %v2911
      %v2913 = vpop.f32.mrb[0].mxu0
      %v2914 = vadd.f32 0.0, %v2913
      %2915 = vmatprep.mubr.f32.mxu0 0.0
      %2916 = vmatmul.mubr.f32.gmra.mrb[0].mxu0 %v1356
      %v2917 = vpop.f32.mrb[0].mxu0
      %v2918 = vadd.f32 0.0, %v2917
      %v2919 = vpop.f32.mrb[0].mxu0
      %v2920 = vadd.f32 0.0, %v2919
      %2921 = vmatprep.mubr.f32.mxu0 0.0
      %2922 = vmatmul.mubr.f32.gmra.mrb[0].mxu0 %v1359
      %v2923 = vpop.f32.mrb[0].mxu0
      %v2924 = vadd.f32 0.0, %v2923
      %v2925 = vpop.f32.mrb[0].mxu0
      %v2926 = vadd.f32 0.0, %v2925
      %2927 = vmatprep.mubr.f32.mxu0 0.0
      %2928 = vmatmul.mubr.f32.gmra.mrb[0].mxu0 %v1362
      %v2929 = vpop.f32.mrb[0].mxu0
      %v2930 = vadd.f32 0.0, %v2929
      %v2931 = vpop.f32.mrb[0].mxu0
      %v2932 = vadd.f32 0.0, %v2931
      %2933 = vmatprep.mubr.f32.mxu0 0.0
      %2934 = vmatmul.mubr.f32.gmra.mrb[0].mxu0 %v1365
      %v2935 = vpop.f32.mrb[0].mxu0
      %v2936 = vadd.f32 0.0, %v2935
      %v2937 = vpop.f32.mrb[0].mxu0
      %v2938 = vadd.f32 0.0, %v2937
      %2939 = vmatprep.mubr.f32.mxu0 0.0
      %2940 = vmatmul.mubr.f32.gmra.mrb[0].mxu0 %v1368
      %v2941 = vpop.f32.mrb[0].mxu0
      %v2942 = vadd.f32 0.0, %v2941
      %v2943 = vpop.f32.mrb[0].mxu0
      %v2944 = vadd.f32 0.0, %v2943
      %2945 = vmatprep.mubr.f32.mxu0 0.0
      %2946 = vmatmul.mubr.f32.gmra.mrb[0].mxu0 %v1371
      %v2947 = vpop.f32.mrb[0].mxu0
      %v2948 = vadd.f32 0.0, %v2947
      %v2949 = vpop.f32.mrb[0].mxu0
      %v2950 = vadd.f32 0.0, %v2949
      %2951 = vmatprep.mubr.f32.mxu0 0.0
      %2952 = vmatmul.mubr.f32.gmra.mrb[0].mxu0 %v1374
      %v2953 = vpop.f32.mrb[0].mxu0
      %v2954 = vadd.f32 0.0, %v2953
      %v2955 = vpop.f32.mrb[0].mxu0
      %v2956 = vadd.f32 0.0, %v2955
      %2957 = vmatprep.mubr.f32.mxu0 0.0
      %2958 = vmatmul.mubr.f32.gmra.mrb[0].mxu0 %v1377
      %v2959 = vpop.f32.mrb[0].mxu0
      %v2960 = vadd.f32 0.0, %v2959
      %v2961 = vpop.f32.mrb[0].mxu0
      %v2962 = vadd.f32 0.0, %v2961
      %2963 = vmatprep.mubr.f32.mxu0 0.0
      %2964 = vmatmul.mubr.f32.gmra.mrb[0].mxu0 %v1380
      %v2965 = vpop.f32.mrb[0].mxu0
      %v2966 = vadd.f32 0.0, %v2965
      %v2967 = vpop.f32.mrb[0].mxu0
      %v2968 = vadd.f32 0.0, %v2967
      %2969 = vmatprep.mubr.f32.mxu0 0.0
      %2970 = vmatmul.mubr.f32.gmra.mrb[0].mxu0 %v1383
      %v2971 = vpop.f32.mrb[0].mxu0
      %v2972 = vadd.f32 0.0, %v2971
      %v2973 = vpop.f32.mrb[0].mxu0
      %v2974 = vadd.f32 0.0, %v2973
      %2975 = vmatprep.mubr.f32.mxu0 0.0
      %2976 = vmatmul.mubr.f32.gmra.mrb[0].mxu0 %v1386
      %v2977 = vpop.f32.mrb[0].mxu0
      %v2978 = vadd.f32 0.0, %v2977
      %v2979 = vpop.f32.mrb[0].mxu0
      %v2980 = vadd.f32 0.0, %v2979
      %2981 = vmatprep.mubr.f32.mxu0 0.0
      %2982 = vmatmul.mubr.f32.gmra.mrb[0].mxu0 %v1389
      %v2983 = vpop.f32.mrb[0].mxu0
      %v2984 = vadd.f32 0.0, %v2983
      %v2985 = vpop.f32.mrb[0].mxu0
      %v2986 = vadd.f32 0.0, %v2985
      %2987 = vmatprep.mubr.f32.mxu0 0.0
      %2988 = vmatmul.mubr.f32.gmra.mrb[0].mxu0 %v1392
      %v2989 = vpop.f32.mrb[0].mxu0
      %v2990 = vadd.f32 0.0, %v2989
      %v2991 = vpop.f32.mrb[0].mxu0
      %v2992 = vadd.f32 0.0, %v2991
      %2993 = vmatprep.mubr.f32.mxu0 0.0
      %2994 = vmatmul.mubr.f32.gmra.mrb[0].mxu0 %v1395
      %v2995 = vpop.f32.mrb[0].mxu0
      %v2996 = vadd.f32 0.0, %v2995
      %v2997 = vpop.f32.mrb[0].mxu0
      %v2998 = vadd.f32 0.0, %v2997
      %2999 = vmatprep.mubr.f32.mxu0 0.0
      %3000 = vmatmul.mubr.f32.gmra.mrb[0].mxu0 %v1398
      %v3001 = vpop.f32.mrb[0].mxu0
      %v3002 = vadd.f32 0.0, %v3001
      %v3003 = vpop.f32.mrb[0].mxu0
      %v3004 = vadd.f32 0.0, %v3003
      %3005 = vdwg.mxu0
      %v3006 = vld [vmem:[%s2] sm:$0xff]
      %v3008 = vsel %vm631, %v3006, 0
      %3010 = vmatprep.subr.mxu0 %v1403
      %3011 = vmatpush1.msra.mxu0 %v1401
      %3012 = vmatprep.subr.mxu0 0.0
      %3013 = vmatpush1.msra.mxu0 0.0
      %3014 = vmatprep.subr.mxu0 0.0
      %3015 = vmatpush1.msra.mxu0 0.0
      %3016 = vmatprep.subr.mxu0 0.0
      %3017 = vmatpush1.msra.mxu0 0.0
      %3018 = vmatprep.subr.mxu0 0.0
      %3019 = vmatpush1.msra.mxu0 0.0
      %3020 = vmatprep.subr.mxu0 0.0
      %3021 = vmatpush1.msra.mxu0 0.0
      %3022 = vmatprep.subr.mxu0 0.0
      %3023 = vmatpush1.msra.mxu0 0.0
      %3024 = vmatprep.subr.mxu0 0.0
      %3025 = vmatpush1.msra.mxu0 0.0
      %3026 = vmatprep.subr.mxu0 0.0
      %3027 = vmatpush1.msra.mxu0 0.0
      %3028 = vmatprep.subr.mxu0 0.0
      %3029 = vmatpush1.msra.mxu0 0.0
      %3030 = vmatprep.subr.mxu0 0.0
      %3031 = vmatpush1.msra.mxu0 0.0
      %3032 = vmatprep.subr.mxu0 0.0
      %3033 = vmatpush1.msra.mxu0 0.0
      %3034 = vmatprep.subr.mxu0 0.0
      %3035 = vmatpush1.msra.mxu0 0.0
      %3036 = vmatprep.subr.mxu0 0.0
      %3037 = vmatpush1.msra.mxu0 0.0
      %3038 = vmatprep.subr.mxu0 0.0
      %3039 = vmatpush1.msra.mxu0 0.0
      %3040 = vmatprep.subr.mxu0 0.0
      %3041 = vmatpush1.msra.mxu0 0.0
      %3042 = vmatprep.subr.mxu0 0.0
      %3043 = vmatpush1.msra.mxu0 0.0
      %3044 = vmatprep.subr.mxu0 0.0
      %3045 = vmatpush1.msra.mxu0 0.0
      %3046 = vmatprep.subr.mxu0 0.0
      %3047 = vmatpush1.msra.mxu0 0.0
      %3048 = vmatprep.subr.mxu0 0.0
      %3049 = vmatpush1.msra.mxu0 0.0
      %3050 = vmatprep.subr.mxu0 0.0
      %3051 = vmatpush1.msra.mxu0 0.0
      %3052 = vmatprep.subr.mxu0 0.0
      %3053 = vmatpush1.msra.mxu0 0.0
      %3054 = vmatprep.subr.mxu0 0.0
      %3055 = vmatpush1.msra.mxu0 0.0
      %3056 = vmatprep.subr.mxu0 0.0
      %3057 = vmatpush1.msra.mxu0 0.0
      %3058 = vmatprep.subr.mxu0 0.0
      %3059 = vmatpush1.msra.mxu0 0.0
      %3060 = vmatprep.subr.mxu0 0.0
      %3061 = vmatpush1.msra.mxu0 0.0
      %3062 = vmatprep.subr.mxu0 0.0
      %3063 = vmatpush1.msra.mxu0 0.0
      %3064 = vmatprep.subr.mxu0 0.0
      %3065 = vmatpush1.msra.mxu0 0.0
      %3066 = vmatprep.subr.mxu0 0.0
      %3067 = vmatpush1.msra.mxu0 0.0
      %3068 = vmatprep.subr.mxu0 0.0
      %3069 = vmatpush1.msra.mxu0 0.0
      %3070 = vmatprep.subr.mxu0 0.0
      %3071 = vmatpush1.msra.mxu0 0.0
      %3072 = vmatprep.subr.mxu0 0.0
      %3073 = vmatpush1.msra.mxu0 0.0
      %3074 = vmatprep.mubr.f32.mxu0 0.0
      %3075 = vmatmul.mubr.f32.gmra.mrb[0].mxu0 %v3008
      %v3076 = vpop.f32.mrb[0].mxu0
      %v3077 = vadd.f32 0.0, %v3076
      %v3078 = vpop.f32.mrb[0].mxu0
      %v3079 = vadd.f32 0.0, %v3078
      %3080 = vdwg.mxu0
      %v3081 = vld [vmem:[%s3] sm:$0x7]
      %3083 = vset.pattern.permute.xlu0 0
      %3084 = vperm.xlu0 %3083, %v3081
      %v3085 = vpop.permute.xlu0 %3084
      %v3087 = vadd.f32 %v3077, %v3085
      %v3088 = vadd.f32 %v3079, %v3085
      %vm3089 = vcmask 1042432
      %v3090 = vsel %vm3089, %v3087, -inf
      %v3091 = vrot.slane %v3090, 4
      %v3092 = vmax.f32 %v3090, %v3091
      %v3093 = vrot.slane %v3092, 2
      %v3094 = vmax.f32 %v3092, %v3093
      %v3095 = vrot.slane %v3094, 1
      %v3096 = vmax.f32 %v3094, %v3095
      %v3097 = vsel %vm3089, %v3088, -inf
      %v3098 = vrot.slane %v3097, 4
      %v3099 = vmax.f32 %v3097, %v3098
      %v3100 = vrot.slane %v3099, 2
      %v3101 = vmax.f32 %v3099, %v3100
      %v3102 = vrot.slane %v3101, 1
      %v3103 = vmax.f32 %v3101, %v3102
      %v3104 = vsub.f32 %v3087, %v3096
      %v3105 = vsub.f32 %v3088, %v3103
      %v3106 = vmul.f32 %v3104, 1.442695
      %v3107 = vpow.pop %v3106
      %v3108 = vmul.f32 %v3105, 1.442695
      %v3109 = vpow.pop %v3108
      %v3110 = vsel %vm3089, %v3107, 0.0
      %v3111 = vrot.slane %v3110, 4
      %v3112 = vadd.f32 %v3110, %v3111
      %v3113 = vrot.slane %v3112, 2
      %v3114 = vadd.f32 %v3112, %v3113
      %v3115 = vrot.slane %v3114, 1
      %v3116 = vadd.f32 %v3114, %v3115
      %v3117 = vsel %vm3089, %v3109, 0.0
      %v3118 = vrot.slane %v3117, 4
      %v3119 = vadd.f32 %v3117, %v3118
      %v3120 = vrot.slane %v3119, 2
      %v3121 = vadd.f32 %v3119, %v3120
      %v3122 = vrot.slane %v3121, 1
      %v3123 = vadd.f32 %v3121, %v3122
      %v3124 = vrcp.pop %v3116
      %v3125 = vrcp.pop %v3123
      %v3126 = vmul.f32 %v3107, %v3124
      %v3127 = vmul.f32 %v3109, %v3125
      %v3128 = vld [vmem:[%s4] sm:$0xff]
      %v3129 = vld [vmem:[%s4 + $0x8] sm:$0xff]
      %v3130 = vld [vmem:[%s4 + $0x10] sm:$0xff]
      %v3131 = vld [vmem:[%s4 + $0x18] sm:$0xff]
      %v3132 = vld [vmem:[%s4 + $0x20] sm:$0xff]
      %v3133 = vld [vmem:[%s4 + $0x28] sm:$0xff]
      %v3134 = vld [vmem:[%s4 + $0x30] sm:$0xff]
      %v3135 = vld [vmem:[%s4 + $0x38] sm:$0xff]
      %v3136 = vld [vmem:[%s4 + $0x40] sm:$0xff]
      %v3137 = vld [vmem:[%s4 + $0x48] sm:$0xff]
      %v3138 = vld [vmem:[%s4 + $0x50] sm:$0xff]
      %v3139 = vld [vmem:[%s4 + $0x58] sm:$0xff]
      %v3140 = vld [vmem:[%s4 + $0x60] sm:$0xff]
      %v3141 = vld [vmem:[%s4 + $0x68] sm:$0xff]
      %v3142 = vld [vmem:[%s4 + $0x70] sm:$0xff]
      %v3143 = vld [vmem:[%s4 + $0x78] sm:$0xff]
      %v3144 = vld [vmem:[%s4 + $0x80] sm:$0xff]
      %v3145 = vld [vmem:[%s4 + $0x88] sm:$0xff]
      %v3146 = vld [vmem:[%s4 + $0x90] sm:$0xff]
      %v3147 = vld [vmem:[%s4 + $0x98] sm:$0xff]
      %v3148 = vld [vmem:[%s4 + $0xa0] sm:$0xff]
      %v3149 = vld [vmem:[%s4 + $0xa8] sm:$0xff]
      %v3150 = vld [vmem:[%s4 + $0xb0] sm:$0xff]
      %v3151 = vld [vmem:[%s4 + $0xb8] sm:$0xff]
      %v3152 = vld [vmem:[%s4 + $0xc0] sm:$0xff]
      %v3153 = vld [vmem:[%s4 + $0xc8] sm:$0xff]
      %v3154 = vld [vmem:[%s4 + $0xd0] sm:$0xff]
      %v3155 = vld [vmem:[%s4 + $0xd8] sm:$0xff]
      %v3156 = vld [vmem:[%s4 + $0xe0] sm:$0xff]
      %v3157 = vld [vmem:[%s4 + $0xe8] sm:$0xff]
      %v3158 = vld [vmem:[%s4 + $0xf0] sm:$0xff]
      %v3159 = vld [vmem:[%s4 + $0xf8] sm:$0xff]
      %v3160 = vld [vmem:[%s4 + $0x100] sm:$0xff]
      %v3161 = vld [vmem:[%s4 + $0x108] sm:$0xff]
      %v3162 = vld [vmem:[%s4 + $0x110] sm:$0xff]
      %v3163 = vld [vmem:[%s4 + $0x118] sm:$0xff]
      %v3164 = vld [vmem:[%s4 + $0x120] sm:$0xff]
      %v3165 = vld [vmem:[%s4 + $0x128] sm:$0xff]
      %v3166 = vld [vmem:[%s4 + $0x130] sm:$0xff]
      %v3167 = vld [vmem:[%s4 + $0x138] sm:$0xff]
      %v3168 = vld [vmem:[%s4 + $0x140] sm:$0xff]
      %v3169 = vld [vmem:[%s4 + $0x148] sm:$0xff]
      %v3170 = vld [vmem:[%s4 + $0x150] sm:$0xff]
      %v3171 = vld [vmem:[%s4 + $0x158] sm:$0xff]
      %v3172 = vld [vmem:[%s4 + $0x160] sm:$0xff]
      %v3173 = vld [vmem:[%s4 + $0x168] sm:$0xff]
      %v3174 = vld [vmem:[%s4 + $0x170] sm:$0xff]
      %v3175 = vld [vmem:[%s4 + $0x178] sm:$0xff]
      %v3176 = vld [vmem:[%s4 + $0x180] sm:$0xff]
      %v3177 = vld [vmem:[%s4 + $0x188] sm:$0xff]
      %v3178 = vld [vmem:[%s4 + $0x190] sm:$0xff]
      %v3179 = vld [vmem:[%s4 + $0x198] sm:$0xff]
      %v3180 = vld [vmem:[%s4 + $0x1a0] sm:$0xff]
      %v3181 = vld [vmem:[%s4 + $0x1a8] sm:$0xff]
      %v3182 = vld [vmem:[%s4 + $0x1b0] sm:$0xff]
      %v3183 = vld [vmem:[%s4 + $0x1b8] sm:$0xff]
      %v3184 = vld [vmem:[%s4 + $0x1c0] sm:$0xff]
      %v3185 = vld [vmem:[%s4 + $0x1c8] sm:$0xff]
      %v3186 = vld [vmem:[%s4 + $0x1d0] sm:$0xff]
      %v3187 = vld [vmem:[%s4 + $0x1d8] sm:$0xff]
      %v3188 = vld [vmem:[%s4 + $0x1e0] sm:$0xff]
      %v3189 = vld [vmem:[%s4 + $0x1e8] sm:$0xff]
      %v3190 = vld [vmem:[%s4 + $0x1f0] sm:$0xff]
      %v3191 = vld [vmem:[%s4 + $0x1f8] sm:$0xff]
      %3193 = vset.pattern.permute.xlu0 0
      %3194 = vperm.xlu0 %3193, %v3128
      %v3195 = vpop.permute.xlu0 %3194
      %3198 = vset.pattern.permute.xlu0 0
      %3199 = vperm.xlu0 %3198, %v3129
      %v3200 = vpop.permute.xlu0 %3199
      %3203 = vset.pattern.permute.xlu0 0
      %3204 = vperm.xlu0 %3203, %v3130
      %v3205 = vpop.permute.xlu0 %3204
      %3208 = vset.pattern.permute.xlu0 0
      %3209 = vperm.xlu0 %3208, %v3131
      %v3210 = vpop.permute.xlu0 %3209
      %3213 = vset.pattern.permute.xlu0 0
      %3214 = vperm.xlu0 %3213, %v3132
      %v3215 = vpop.permute.xlu0 %3214
      %3218 = vset.pattern.permute.xlu0 0
      %3219 = vperm.xlu0 %3218, %v3133
      %v3220 = vpop.permute.xlu0 %3219
      %3223 = vset.pattern.permute.xlu0 0
      %3224 = vperm.xlu0 %3223, %v3134
      %v3225 = vpop.permute.xlu0 %3224
      %3228 = vset.pattern.permute.xlu0 0
      %3229 = vperm.xlu0 %3228, %v3135
      %v3230 = vpop.permute.xlu0 %3229
      %3233 = vset.pattern.permute.xlu0 0
      %3234 = vperm.xlu0 %3233, %v3136
      %v3235 = vpop.permute.xlu0 %3234
      %3238 = vset.pattern.permute.xlu0 0
      %3239 = vperm.xlu0 %3238, %v3137
      %v3240 = vpop.permute.xlu0 %3239
      %3243 = vset.pattern.permute.xlu0 0
      %3244 = vperm.xlu0 %3243, %v3138
      %v3245 = vpop.permute.xlu0 %3244
      %3248 = vset.pattern.permute.xlu0 0
      %3249 = vperm.xlu0 %3248, %v3139
      %v3250 = vpop.permute.xlu0 %3249
      %3253 = vset.pattern.permute.xlu0 0
      %3254 = vperm.xlu0 %3253, %v3140
      %v3255 = vpop.permute.xlu0 %3254
      %3258 = vset.pattern.permute.xlu0 0
      %3259 = vperm.xlu0 %3258, %v3141
      %v3260 = vpop.permute.xlu0 %3259
      %3263 = vset.pattern.permute.xlu0 0
      %3264 = vperm.xlu0 %3263, %v3142
      %v3265 = vpop.permute.xlu0 %3264
      %3268 = vset.pattern.permute.xlu0 0
      %3269 = vperm.xlu0 %3268, %v3143
      %v3270 = vpop.permute.xlu0 %3269
      %3273 = vset.pattern.permute.xlu0 0
      %3274 = vperm.xlu0 %3273, %v3144
      %v3275 = vpop.permute.xlu0 %3274
      %3278 = vset.pattern.permute.xlu0 0
      %3279 = vperm.xlu0 %3278, %v3145
      %v3280 = vpop.permute.xlu0 %3279
      %3283 = vset.pattern.permute.xlu0 0
      %3284 = vperm.xlu0 %3283, %v3146
      %v3285 = vpop.permute.xlu0 %3284
      %3288 = vset.pattern.permute.xlu0 0
      %3289 = vperm.xlu0 %3288, %v3147
      %v3290 = vpop.permute.xlu0 %3289
      %3293 = vset.pattern.permute.xlu0 0
      %3294 = vperm.xlu0 %3293, %v3148
      %v3295 = vpop.permute.xlu0 %3294
      %3298 = vset.pattern.permute.xlu0 0
      %3299 = vperm.xlu0 %3298, %v3149
      %v3300 = vpop.permute.xlu0 %3299
      %3303 = vset.pattern.permute.xlu0 0
      %3304 = vperm.xlu0 %3303, %v3150
      %v3305 = vpop.permute.xlu0 %3304
      %3308 = vset.pattern.permute.xlu0 0
      %3309 = vperm.xlu0 %3308, %v3151
      %v3310 = vpop.permute.xlu0 %3309
      %3313 = vset.pattern.permute.xlu0 0
      %3314 = vperm.xlu0 %3313, %v3152
      %v3315 = vpop.permute.xlu0 %3314
      %3318 = vset.pattern.permute.xlu0 0
      %3319 = vperm.xlu0 %3318, %v3153
      %v3320 = vpop.permute.xlu0 %3319
      %3323 = vset.pattern.permute.xlu0 0
      %3324 = vperm.xlu0 %3323, %v3154
      %v3325 = vpop.permute.xlu0 %3324
      %3328 = vset.pattern.permute.xlu0 0
      %3329 = vperm.xlu0 %3328, %v3155
      %v3330 = vpop.permute.xlu0 %3329
      %3333 = vset.pattern.permute.xlu0 0
      %3334 = vperm.xlu0 %3333, %v3156
      %v3335 = vpop.permute.xlu0 %3334
      %3338 = vset.pattern.permute.xlu0 0
      %3339 = vperm.xlu0 %3338, %v3157
      %v3340 = vpop.permute.xlu0 %3339
      %3343 = vset.pattern.permute.xlu0 0
      %3344 = vperm.xlu0 %3343, %v3158
      %v3345 = vpop.permute.xlu0 %3344
      %3348 = vset.pattern.permute.xlu0 0
      %3349 = vperm.xlu0 %3348, %v3159
      %v3350 = vpop.permute.xlu0 %3349
      %3353 = vset.pattern.permute.xlu0 0
      %3354 = vperm.xlu0 %3353, %v3160
      %v3355 = vpop.permute.xlu0 %3354
      %3358 = vset.pattern.permute.xlu0 0
      %3359 = vperm.xlu0 %3358, %v3161
      %v3360 = vpop.permute.xlu0 %3359
      %3363 = vset.pattern.permute.xlu0 0
      %3364 = vperm.xlu0 %3363, %v3162
      %v3365 = vpop.permute.xlu0 %3364
      %3368 = vset.pattern.permute.xlu0 0
      %3369 = vperm.xlu0 %3368, %v3163
      %v3370 = vpop.permute.xlu0 %3369
      %3373 = vset.pattern.permute.xlu0 0
      %3374 = vperm.xlu0 %3373, %v3164
      %v3375 = vpop.permute.xlu0 %3374
      %3378 = vset.pattern.permute.xlu0 0
      %3379 = vperm.xlu0 %3378, %v3165
      %v3380 = vpop.permute.xlu0 %3379
      %3383 = vset.pattern.permute.xlu0 0
      %3384 = vperm.xlu0 %3383, %v3166
      %v3385 = vpop.permute.xlu0 %3384
      %3388 = vset.pattern.permute.xlu0 0
      %3389 = vperm.xlu0 %3388, %v3167
      %v3390 = vpop.permute.xlu0 %3389
      %3393 = vset.pattern.permute.xlu0 0
      %3394 = vperm.xlu0 %3393, %v3168
      %v3395 = vpop.permute.xlu0 %3394
      %3398 = vset.pattern.permute.xlu0 0
      %3399 = vperm.xlu0 %3398, %v3169
      %v3400 = vpop.permute.xlu0 %3399
      %3403 = vset.pattern.permute.xlu0 0
      %3404 = vperm.xlu0 %3403, %v3170
      %v3405 = vpop.permute.xlu0 %3404
      %3408 = vset.pattern.permute.xlu0 0
      %3409 = vperm.xlu0 %3408, %v3171
      %v3410 = vpop.permute.xlu0 %3409
      %3413 = vset.pattern.permute.xlu0 0
      %3414 = vperm.xlu0 %3413, %v3172
      %v3415 = vpop.permute.xlu0 %3414
      %3418 = vset.pattern.permute.xlu0 0
      %3419 = vperm.xlu0 %3418, %v3173
      %v3420 = vpop.permute.xlu0 %3419
      %3423 = vset.pattern.permute.xlu0 0
      %3424 = vperm.xlu0 %3423, %v3174
      %v3425 = vpop.permute.xlu0 %3424
      %3428 = vset.pattern.permute.xlu0 0
      %3429 = vperm.xlu0 %3428, %v3175
      %v3430 = vpop.permute.xlu0 %3429
      %3433 = vset.pattern.permute.xlu0 0
      %3434 = vperm.xlu0 %3433, %v3176
      %v3435 = vpop.permute.xlu0 %3434
      %3438 = vset.pattern.permute.xlu0 0
      %3439 = vperm.xlu0 %3438, %v3177
      %v3440 = vpop.permute.xlu0 %3439
      %3443 = vset.pattern.permute.xlu0 0
      %3444 = vperm.xlu0 %3443, %v3178
      %v3445 = vpop.permute.xlu0 %3444
      %3448 = vset.pattern.permute.xlu0 0
      %3449 = vperm.xlu0 %3448, %v3179
      %v3450 = vpop.permute.xlu0 %3449
      %3453 = vset.pattern.permute.xlu0 0
      %3454 = vperm.xlu0 %3453, %v3180
      %v3455 = vpop.permute.xlu0 %3454
      %3458 = vset.pattern.permute.xlu0 0
      %3459 = vperm.xlu0 %3458, %v3181
      %v3460 = vpop.permute.xlu0 %3459
      %3463 = vset.pattern.permute.xlu0 0
      %3464 = vperm.xlu0 %3463, %v3182
      %v3465 = vpop.permute.xlu0 %3464
      %3468 = vset.pattern.permute.xlu0 0
      %3469 = vperm.xlu0 %3468, %v3183
      %v3470 = vpop.permute.xlu0 %3469
      %3473 = vset.pattern.permute.xlu0 0
      %3474 = vperm.xlu0 %3473, %v3184
      %v3475 = vpop.permute.xlu0 %3474
      %3478 = vset.pattern.permute.xlu0 0
      %3479 = vperm.xlu0 %3478, %v3185
      %v3480 = vpop.permute.xlu0 %3479
      %3483 = vset.pattern.permute.xlu0 0
      %3484 = vperm.xlu0 %3483, %v3186
      %v3485 = vpop.permute.xlu0 %3484
      %3488 = vset.pattern.permute.xlu0 0
      %3489 = vperm.xlu0 %3488, %v3187
      %v3490 = vpop.permute.xlu0 %3489
      %3493 = vset.pattern.permute.xlu0 0
      %3494 = vperm.xlu0 %3493, %v3188
      %v3495 = vpop.permute.xlu0 %3494
      %3498 = vset.pattern.permute.xlu0 0
      %3499 = vperm.xlu0 %3498, %v3189
      %v3500 = vpop.permute.xlu0 %3499
      %3503 = vset.pattern.permute.xlu0 0
      %3504 = vperm.xlu0 %3503, %v3190
      %v3505 = vpop.permute.xlu0 %3504
      %3508 = vset.pattern.permute.xlu0 0
      %3509 = vperm.xlu0 %3508, %v3191
      %v3510 = vpop.permute.xlu0 %3509
      %v3512 = vadd.f32 %v1472, %v3195
      %v3513 = vadd.f32 %v1474, %v3195
      %v3514 = vadd.f32 %v1478, %v3200
      %v3515 = vadd.f32 %v1480, %v3200
      %v3516 = vadd.f32 %v1484, %v3205
      %v3517 = vadd.f32 %v1486, %v3205
      %v3518 = vadd.f32 %v1490, %v3210
      %v3519 = vadd.f32 %v1492, %v3210
      %v3520 = vadd.f32 %v1496, %v3215
      %v3521 = vadd.f32 %v1498, %v3215
      %v3522 = vadd.f32 %v1502, %v3220
      %v3523 = vadd.f32 %v1504, %v3220
      %v3524 = vadd.f32 %v1508, %v3225
      %v3525 = vadd.f32 %v1510, %v3225
      %v3526 = vadd.f32 %v1514, %v3230
      %v3527 = vadd.f32 %v1516, %v3230
      %v3528 = vadd.f32 %v1520, %v3235
      %v3529 = vadd.f32 %v1522, %v3235
      %v3530 = vadd.f32 %v1526, %v3240
      %v3531 = vadd.f32 %v1528, %v3240
      %v3532 = vadd.f32 %v1532, %v3245
      %v3533 = vadd.f32 %v1534, %v3245
      %v3534 = vadd.f32 %v1538, %v3250
      %v3535 = vadd.f32 %v1540, %v3250
      %v3536 = vadd.f32 %v1544, %v3255
      %v3537 = vadd.f32 %v1546, %v3255
      %v3538 = vadd.f32 %v1550, %v3260
      %v3539 = vadd.f32 %v1552, %v3260
      %v3540 = vadd.f32 %v1556, %v3265
      %v3541 = vadd.f32 %v1558, %v3265
      %v3542 = vadd.f32 %v1562, %v3270
      %v3543 = vadd.f32 %v1564, %v3270
      %v3544 = vadd.f32 %v1568, %v3275
      %v3545 = vadd.f32 %v1570, %v3275
      %v3546 = vadd.f32 %v1574, %v3280
      %v3547 = vadd.f32 %v1576, %v3280
      %v3548 = vadd.f32 %v1580, %v3285
      %v3549 = vadd.f32 %v1582, %v3285
      %v3550 = vadd.f32 %v1586, %v3290
      %v3551 = vadd.f32 %v1588, %v3290
      %v3552 = vadd.f32 %v1592, %v3295
      %v3553 = vadd.f32 %v1594, %v3295
      %v3554 = vadd.f32 %v1598, %v3300
      %v3555 = vadd.f32 %v1600, %v3300
      %v3556 = vadd.f32 %v1604, %v3305
      %v3557 = vadd.f32 %v1606, %v3305
      %v3558 = vadd.f32 %v1610, %v3310
      %v3559 = vadd.f32 %v1612, %v3310
      %v3560 = vadd.f32 %v1616, %v3315
      %v3561 = vadd.f32 %v1618, %v3315
      %v3562 = vadd.f32 %v1622, %v3320
      %v3563 = vadd.f32 %v1624, %v3320
      %v3564 = vadd.f32 %v1628, %v3325
      %v3565 = vadd.f32 %v1630, %v3325
      %v3566 = vadd.f32 %v1634, %v3330
      %v3567 = vadd.f32 %v1636, %v3330
      %v3568 = vadd.f32 %v1640, %v3335
      %v3569 = vadd.f32 %v1642, %v3335
      %v3570 = vadd.f32 %v1646, %v3340
      %v3571 = vadd.f32 %v1648, %v3340
      %v3572 = vadd.f32 %v1652, %v3345
      %v3573 = vadd.f32 %v1654, %v3345
      %v3574 = vadd.f32 %v1658, %v3350
      %v3575 = vadd.f32 %v1660, %v3350
      %v3576 = vadd.f32 %v1664, %v3355
      %v3577 = vadd.f32 %v1666, %v3355
      %v3578 = vadd.f32 %v1670, %v3360
      %v3579 = vadd.f32 %v1672, %v3360
      %v3580 = vadd.f32 %v1676, %v3365
      %v3581 = vadd.f32 %v1678, %v3365
      %v3582 = vadd.f32 %v1682, %v3370
      %v3583 = vadd.f32 %v1684, %v3370
      %v3584 = vadd.f32 %v1688, %v3375
      %v3585 = vadd.f32 %v1690, %v3375
      %v3586 = vadd.f32 %v1694, %v3380
      %v3587 = vadd.f32 %v1696, %v3380
      %v3588 = vadd.f32 %v1700, %v3385
      %v3589 = vadd.f32 %v1702, %v3385
      %v3590 = vadd.f32 %v1706, %v3390
      %v3591 = vadd.f32 %v1708, %v3390
      %v3592 = vadd.f32 %v1712, %v3395
      %v3593 = vadd.f32 %v1714, %v3395
      %v3594 = vadd.f32 %v1718, %v3400
      %v3595 = vadd.f32 %v1720, %v3400
      %v3596 = vadd.f32 %v1724, %v3405
      %v3597 = vadd.f32 %v1726, %v3405
      %v3598 = vadd.f32 %v1730, %v3410
      %v3599 = vadd.f32 %v1732, %v3410
      %v3600 = vadd.f32 %v1736, %v3415
      %v3601 = vadd.f32 %v1738, %v3415
      %v3602 = vadd.f32 %v1742, %v3420
      %v3603 = vadd.f32 %v1744, %v3420
      %v3604 = vadd.f32 %v1748, %v3425
      %v3605 = vadd.f32 %v1750, %v3425
      %v3606 = vadd.f32 %v1754, %v3430
      %v3607 = vadd.f32 %v1756, %v3430
      %v3608 = vadd.f32 %v1760, %v3435
      %v3609 = vadd.f32 %v1762, %v3435
      %v3610 = vadd.f32 %v1766, %v3440
      %v3611 = vadd.f32 %v1768, %v3440
      %v3612 = vadd.f32 %v1772, %v3445
      %v3613 = vadd.f32 %v1774, %v3445
      %v3614 = vadd.f32 %v1778, %v3450
      %v3615 = vadd.f32 %v1780, %v3450
      %v3616 = vadd.f32 %v1784, %v3455
      %v3617 = vadd.f32 %v1786, %v3455
      %v3618 = vadd.f32 %v1790, %v3460
      %v3619 = vadd.f32 %v1792, %v3460
      %v3620 = vadd.f32 %v1796, %v3465
      %v3621 = vadd.f32 %v1798, %v3465
      %v3622 = vadd.f32 %v1802, %v3470
      %v3623 = vadd.f32 %v1804, %v3470
      %v3624 = vadd.f32 %v1808, %v3475
      %v3625 = vadd.f32 %v1810, %v3475
      %v3626 = vadd.f32 %v1814, %v3480
      %v3627 = vadd.f32 %v1816, %v3480
      %v3628 = vadd.f32 %v1820, %v3485
      %v3629 = vadd.f32 %v1822, %v3485
      %v3630 = vadd.f32 %v1826, %v3490
      %v3631 = vadd.f32 %v1828, %v3490
      %v3632 = vadd.f32 %v1832, %v3495
      %v3633 = vadd.f32 %v1834, %v3495
      %v3634 = vadd.f32 %v1838, %v3500
      %v3635 = vadd.f32 %v1840, %v3500
      %v3636 = vadd.f32 %v1844, %v3505
      %v3637 = vadd.f32 %v1846, %v3505
      %v3638 = vadd.f32 %v1850, %v3510
      %v3639 = vadd.f32 %v1852, %v3510
      %v3640 = vmax.f32 %v3512, 0.0
      %v3641 = vmax.f32 %v3513, 0.0
      %v3642 = vmax.f32 %v3514, 0.0
      %v3643 = vmax.f32 %v3515, 0.0
      %v3644 = vmax.f32 %v3516, 0.0
      %v3645 = vmax.f32 %v3517, 0.0
      %v3646 = vmax.f32 %v3518, 0.0
      %v3647 = vmax.f32 %v3519, 0.0
      %v3648 = vmax.f32 %v3520, 0.0
      %v3649 = vmax.f32 %v3521, 0.0
      %v3650 = vmax.f32 %v3522, 0.0
      %v3651 = vmax.f32 %v3523, 0.0
      %v3652 = vmax.f32 %v3524, 0.0
      %v3653 = vmax.f32 %v3525, 0.0
      %v3654 = vmax.f32 %v3526, 0.0
      %v3655 = vmax.f32 %v3527, 0.0
      %v3656 = vmax.f32 %v3528, 0.0
      %v3657 = vmax.f32 %v3529, 0.0
      %v3658 = vmax.f32 %v3530, 0.0
      %v3659 = vmax.f32 %v3531, 0.0
      %v3660 = vmax.f32 %v3532, 0.0
      %v3661 = vmax.f32 %v3533, 0.0
      %v3662 = vmax.f32 %v3534, 0.0
      %v3663 = vmax.f32 %v3535, 0.0
      %v3664 = vmax.f32 %v3536, 0.0
      %v3665 = vmax.f32 %v3537, 0.0
      %v3666 = vmax.f32 %v3538, 0.0
      %v3667 = vmax.f32 %v3539, 0.0
      %v3668 = vmax.f32 %v3540, 0.0
      %v3669 = vmax.f32 %v3541, 0.0
      %v3670 = vmax.f32 %v3542, 0.0
      %v3671 = vmax.f32 %v3543, 0.0
      %v3672 = vmax.f32 %v3544, 0.0
      %v3673 = vmax.f32 %v3545, 0.0
      %v3674 = vmax.f32 %v3546, 0.0
      %v3675 = vmax.f32 %v3547, 0.0
      %v3676 = vmax.f32 %v3548, 0.0
      %v3677 = vmax.f32 %v3549, 0.0
      %v3678 = vmax.f32 %v3550, 0.0
      %v3679 = vmax.f32 %v3551, 0.0
      %v3680 = vmax.f32 %v3552, 0.0
      %v3681 = vmax.f32 %v3553, 0.0
      %v3682 = vmax.f32 %v3554, 0.0
      %v3683 = vmax.f32 %v3555, 0.0
      %v3684 = vmax.f32 %v3556, 0.0
      %v3685 = vmax.f32 %v3557, 0.0
      %v3686 = vmax.f32 %v3558, 0.0
      %v3687 = vmax.f32 %v3559, 0.0
      %v3688 = vmax.f32 %v3560, 0.0
      %v3689 = vmax.f32 %v3561, 0.0
      %v3690 = vmax.f32 %v3562, 0.0
      %v3691 = vmax.f32 %v3563, 0.0
      %v3692 = vmax.f32 %v3564, 0.0
      %v3693 = vmax.f32 %v3565, 0.0
      %v3694 = vmax.f32 %v3566, 0.0
      %v3695 = vmax.f32 %v3567, 0.0
      %v3696 = vmax.f32 %v3568, 0.0
      %v3697 = vmax.f32 %v3569, 0.0
      %v3698 = vmax.f32 %v3570, 0.0
      %v3699 = vmax.f32 %v3571, 0.0
      %v3700 = vmax.f32 %v3572, 0.0
      %v3701 = vmax.f32 %v3573, 0.0
      %v3702 = vmax.f32 %v3574, 0.0
      %v3703 = vmax.f32 %v3575, 0.0
      %v3704 = vmax.f32 %v3576, 0.0
      %v3705 = vmax.f32 %v3577, 0.0
      %v3706 = vmax.f32 %v3578, 0.0
      %v3707 = vmax.f32 %v3579, 0.0
      %v3708 = vmax.f32 %v3580, 0.0
      %v3709 = vmax.f32 %v3581, 0.0
      %v3710 = vmax.f32 %v3582, 0.0
      %v3711 = vmax.f32 %v3583, 0.0
      %v3712 = vmax.f32 %v3584, 0.0
      %v3713 = vmax.f32 %v3585, 0.0
      %v3714 = vmax.f32 %v3586, 0.0
      %v3715 = vmax.f32 %v3587, 0.0
      %v3716 = vmax.f32 %v3588, 0.0
      %v3717 = vmax.f32 %v3589, 0.0
      %v3718 = vmax.f32 %v3590, 0.0
      %v3719 = vmax.f32 %v3591, 0.0
      %v3720 = vmax.f32 %v3592, 0.0
      %v3721 = vmax.f32 %v3593, 0.0
      %v3722 = vmax.f32 %v3594, 0.0
      %v3723 = vmax.f32 %v3595, 0.0
      %v3724 = vmax.f32 %v3596, 0.0
      %v3725 = vmax.f32 %v3597, 0.0
      %v3726 = vmax.f32 %v3598, 0.0
      %v3727 = vmax.f32 %v3599, 0.0
      %v3728 = vmax.f32 %v3600, 0.0
      %v3729 = vmax.f32 %v3601, 0.0
      %v3730 = vmax.f32 %v3602, 0.0
      %v3731 = vmax.f32 %v3603, 0.0
      %v3732 = vmax.f32 %v3604, 0.0
      %v3733 = vmax.f32 %v3605, 0.0
      %v3734 = vmax.f32 %v3606, 0.0
      %v3735 = vmax.f32 %v3607, 0.0
      %v3736 = vmax.f32 %v3608, 0.0
      %v3737 = vmax.f32 %v3609, 0.0
      %v3738 = vmax.f32 %v3610, 0.0
      %v3739 = vmax.f32 %v3611, 0.0
      %v3740 = vmax.f32 %v3612, 0.0
      %v3741 = vmax.f32 %v3613, 0.0
      %v3742 = vmax.f32 %v3614, 0.0
      %v3743 = vmax.f32 %v3615, 0.0
      %v3744 = vmax.f32 %v3616, 0.0
      %v3745 = vmax.f32 %v3617, 0.0
      %v3746 = vmax.f32 %v3618, 0.0
      %v3747 = vmax.f32 %v3619, 0.0
      %v3748 = vmax.f32 %v3620, 0.0
      %v3749 = vmax.f32 %v3621, 0.0
      %v3750 = vmax.f32 %v3622, 0.0
      %v3751 = vmax.f32 %v3623, 0.0
      %v3752 = vmax.f32 %v3624, 0.0
      %v3753 = vmax.f32 %v3625, 0.0
      %v3754 = vmax.f32 %v3626, 0.0
      %v3755 = vmax.f32 %v3627, 0.0
      %v3756 = vmax.f32 %v3628, 0.0
      %v3757 = vmax.f32 %v3629, 0.0
      %v3758 = vmax.f32 %v3630, 0.0
      %v3759 = vmax.f32 %v3631, 0.0
      %v3760 = vmax.f32 %v3632, 0.0
      %v3761 = vmax.f32 %v3633, 0.0
      %v3762 = vmax.f32 %v3634, 0.0
      %v3763 = vmax.f32 %v3635, 0.0
      %v3764 = vmax.f32 %v3636, 0.0
      %v3765 = vmax.f32 %v3637, 0.0
      %v3766 = vmax.f32 %v3638, 0.0
      %v3767 = vmax.f32 %v3639, 0.0
      %v3770 = vcombine.low %v3126, %v3127
      %v3772 = vunpack.c.l.s4 1966171168
      %v3773 = vunpack.c.0.s8 %v3772
      %v3774 = vlaneseq
      %v3775 = vshrl.u32 %v3774, 7
      %v3776 = vsub.s32 %v3773, %v3775
      %v3777 = vrot.slane %v3770, %v3776
      %v3778 = vcombine.high %v3777, %v3777
      %v3780 = vunpack.c.l.s4 1966171168
      %v3781 = vunpack.c.0.s8 %v3780
      %v3782 = vlaneseq
      %v3783 = vshrl.u32 %v3782, 7
      %v3784 = vsub.s32 %v3781, %v3783
      %v3785 = vrot.slane %v3777, %v3784
      %v3787 = vunpack.c.l.s4 1966171168
      %v3788 = vunpack.c.0.s8 %v3787
      %v3789 = vlaneseq
      %v3790 = vshrl.u32 %v3789, 7
      %v3791 = vsub.s32 %v3788, %v3790
      %v3792 = vrot.slane %v3778, %v3791
      %v3793 = vcombine.high %v3785, %v3785
      %v3794 = vlaneseq
      %v3795 = vshrl.u32 %v3794, 7
      %v3796 = vsub.s32 0, %v3795
      %v3797 = vrot.slane %v3785, %v3796
      %v3798 = vlaneseq
      %v3799 = vshrl.u32 %v3798, 7
      %v3800 = vsub.s32 1, %v3799
      %v3801 = vrot.slane %v3785, %v3800
      %v3802 = vlaneseq
      %v3803 = vshrl.u32 %v3802, 7
      %v3804 = vsub.s32 0, %v3803
      %v3805 = vrot.slane %v3792, %v3804
      %v3806 = vlaneseq
      %v3807 = vshrl.u32 %v3806, 7
      %v3808 = vsub.s32 1, %v3807
      %v3809 = vrot.slane %v3792, %v3808
      %v3810 = vlaneseq
      %v3811 = vshrl.u32 %v3810, 7
      %v3812 = vsub.s32 0, %v3811
      %v3813 = vrot.slane %v3793, %v3812
      %v3814 = vlaneseq
      %v3815 = vshrl.u32 %v3814, 7
      %v3816 = vsub.s32 1, %v3815
      %v3817 = vrot.slane %v3793, %v3816
      %v3824 = vmul.f32 %v1856, %v3797
      %v3825 = vmul.f32 %v1858, %v3801
      %v3826 = vmul.f32 %v1862, %v3797
      %v3827 = vmul.f32 %v1864, %v3801
      %v3828 = vmul.f32 %v1868, %v3797
      %v3829 = vmul.f32 %v1870, %v3801
      %v3830 = vmul.f32 %v1874, %v3797
      %v3831 = vmul.f32 %v1876, %v3801
      %v3832 = vmul.f32 %v1880, %v3797
      %v3833 = vmul.f32 %v1882, %v3801
      %v3834 = vmul.f32 %v1886, %v3797
      %v3835 = vmul.f32 %v1888, %v3801
      %v3836 = vmul.f32 %v1892, %v3797
      %v3837 = vmul.f32 %v1894, %v3801
      %v3838 = vmul.f32 %v1898, %v3797
      %v3839 = vmul.f32 %v1900, %v3801
      %v3840 = vmul.f32 %v1904, %v3797
      %v3841 = vmul.f32 %v1906, %v3801
      %v3842 = vmul.f32 %v1910, %v3797
      %v3843 = vmul.f32 %v1912, %v3801
      %v3844 = vmul.f32 %v1916, %v3797
      %v3845 = vmul.f32 %v1918, %v3801
      %v3846 = vmul.f32 %v1922, %v3797
      %v3847 = vmul.f32 %v1924, %v3801
      %v3848 = vmul.f32 %v1928, %v3797
      %v3849 = vmul.f32 %v1930, %v3801
      %v3850 = vmul.f32 %v1934, %v3797
      %v3851 = vmul.f32 %v1936, %v3801
      %v3852 = vmul.f32 %v1940, %v3797
      %v3853 = vmul.f32 %v1942, %v3801
      %v3854 = vmul.f32 %v1946, %v3797
      %v3855 = vmul.f32 %v1948, %v3801
      %v3856 = vmul.f32 %v1952, %v3797
      %v3857 = vmul.f32 %v1954, %v3801
      %v3858 = vmul.f32 %v1958, %v3797
      %v3859 = vmul.f32 %v1960, %v3801
      %v3860 = vmul.f32 %v1964, %v3797
      %v3861 = vmul.f32 %v1966, %v3801
      %v3862 = vmul.f32 %v1970, %v3797
      %v3863 = vmul.f32 %v1972, %v3801
      %v3864 = vmul.f32 %v1976, %v3797
      %v3865 = vmul.f32 %v1978, %v3801
      %v3866 = vmul.f32 %v1982, %v3797
      %v3867 = vmul.f32 %v1984, %v3801
      %v3868 = vmul.f32 %v1988, %v3797
      %v3869 = vmul.f32 %v1990, %v3801
      %v3870 = vmul.f32 %v1994, %v3797
      %v3871 = vmul.f32 %v1996, %v3801
      %v3872 = vmul.f32 %v2000, %v3797
      %v3873 = vmul.f32 %v2002, %v3801
      %v3874 = vmul.f32 %v2006, %v3797
      %v3875 = vmul.f32 %v2008, %v3801
      %v3876 = vmul.f32 %v2012, %v3797
      %v3877 = vmul.f32 %v2014, %v3801
      %v3878 = vmul.f32 %v2018, %v3797
      %v3879 = vmul.f32 %v2020, %v3801
      %v3880 = vmul.f32 %v2024, %v3797
      %v3881 = vmul.f32 %v2026, %v3801
      %v3882 = vmul.f32 %v2030, %v3797
      %v3883 = vmul.f32 %v2032, %v3801
      %v3884 = vmul.f32 %v2036, %v3797
      %v3885 = vmul.f32 %v2038, %v3801
      %v3886 = vmul.f32 %v2042, %v3797
      %v3887 = vmul.f32 %v2044, %v3801
      %v3888 = vmul.f32 %v2048, %v3797
      %v3889 = vmul.f32 %v2050, %v3801
      %v3890 = vmul.f32 %v2054, %v3797
      %v3891 = vmul.f32 %v2056, %v3801
      %v3892 = vmul.f32 %v2060, %v3797
      %v3893 = vmul.f32 %v2062, %v3801
      %v3894 = vmul.f32 %v2066, %v3797
      %v3895 = vmul.f32 %v2068, %v3801
      %v3896 = vmul.f32 %v2072, %v3797
      %v3897 = vmul.f32 %v2074, %v3801
      %v3898 = vmul.f32 %v2078, %v3797
      %v3899 = vmul.f32 %v2080, %v3801
      %v3900 = vmul.f32 %v2084, %v3797
      %v3901 = vmul.f32 %v2086, %v3801
      %v3902 = vmul.f32 %v2090, %v3797
      %v3903 = vmul.f32 %v2092, %v3801
      %v3904 = vmul.f32 %v2096, %v3797
      %v3905 = vmul.f32 %v2098, %v3801
      %v3906 = vmul.f32 %v2102, %v3797
      %v3907 = vmul.f32 %v2104, %v3801
      %v3908 = vmul.f32 %v2108, %v3797
      %v3909 = vmul.f32 %v2110, %v3801
      %v3910 = vmul.f32 %v2114, %v3797
      %v3911 = vmul.f32 %v2116, %v3801
      %v3912 = vmul.f32 %v2120, %v3797
      %v3913 = vmul.f32 %v2122, %v3801
      %v3914 = vmul.f32 %v2126, %v3797
      %v3915 = vmul.f32 %v2128, %v3801
      %v3916 = vmul.f32 %v2132, %v3797
      %v3917 = vmul.f32 %v2134, %v3801
      %v3918 = vmul.f32 %v2138, %v3797
      %v3919 = vmul.f32 %v2140, %v3801
      %v3920 = vmul.f32 %v2144, %v3797
      %v3921 = vmul.f32 %v2146, %v3801
      %v3922 = vmul.f32 %v2150, %v3797
      %v3923 = vmul.f32 %v2152, %v3801
      %v3924 = vmul.f32 %v2156, %v3797
      %v3925 = vmul.f32 %v2158, %v3801
      %v3926 = vmul.f32 %v2162, %v3797
      %v3927 = vmul.f32 %v2164, %v3801
      %v3928 = vmul.f32 %v2168, %v3797
      %v3929 = vmul.f32 %v2170, %v3801
      %v3930 = vmul.f32 %v2174, %v3797
      %v3931 = vmul.f32 %v2176, %v3801
      %v3932 = vmul.f32 %v2180, %v3797
      %v3933 = vmul.f32 %v2182, %v3801
      %v3934 = vmul.f32 %v2186, %v3797
      %v3935 = vmul.f32 %v2188, %v3801
      %v3936 = vmul.f32 %v2192, %v3797
      %v3937 = vmul.f32 %v2194, %v3801
      %v3938 = vmul.f32 %v2198, %v3797
      %v3939 = vmul.f32 %v2200, %v3801
      %v3940 = vmul.f32 %v2204, %v3797
      %v3941 = vmul.f32 %v2206, %v3801
      %v3942 = vmul.f32 %v2210, %v3797
      %v3943 = vmul.f32 %v2212, %v3801
      %v3944 = vmul.f32 %v2216, %v3797
      %v3945 = vmul.f32 %v2218, %v3801
      %v3946 = vmul.f32 %v2222, %v3797
      %v3947 = vmul.f32 %v2224, %v3801
      %v3948 = vmul.f32 %v2228, %v3797
      %v3949 = vmul.f32 %v2230, %v3801
      %v3950 = vmul.f32 %v2234, %v3797
      %v3951 = vmul.f32 %v2236, %v3801
      %v3952 = vmul.f32 %v2240, %v3805
      %v3953 = vmul.f32 %v2242, %v3809
      %v3954 = vmul.f32 %v2246, %v3805
      %v3955 = vmul.f32 %v2248, %v3809
      %v3956 = vmul.f32 %v2252, %v3805
      %v3957 = vmul.f32 %v2254, %v3809
      %v3958 = vmul.f32 %v2258, %v3805
      %v3959 = vmul.f32 %v2260, %v3809
      %v3960 = vmul.f32 %v2264, %v3805
      %v3961 = vmul.f32 %v2266, %v3809
      %v3962 = vmul.f32 %v2270, %v3805
      %v3963 = vmul.f32 %v2272, %v3809
      %v3964 = vmul.f32 %v2276, %v3805
      %v3965 = vmul.f32 %v2278, %v3809
      %v3966 = vmul.f32 %v2282, %v3805
      %v3967 = vmul.f32 %v2284, %v3809
      %v3968 = vmul.f32 %v2288, %v3805
      %v3969 = vmul.f32 %v2290, %v3809
      %v3970 = vmul.f32 %v2294, %v3805
      %v3971 = vmul.f32 %v2296, %v3809
      %v3972 = vmul.f32 %v2300, %v3805
      %v3973 = vmul.f32 %v2302, %v3809
      %v3974 = vmul.f32 %v2306, %v3805
      %v3975 = vmul.f32 %v2308, %v3809
      %v3976 = vmul.f32 %v2312, %v3805
      %v3977 = vmul.f32 %v2314, %v3809
      %v3978 = vmul.f32 %v2318, %v3805
      %v3979 = vmul.f32 %v2320, %v3809
      %v3980 = vmul.f32 %v2324, %v3805
      %v3981 = vmul.f32 %v2326, %v3809
      %v3982 = vmul.f32 %v2330, %v3805
      %v3983 = vmul.f32 %v2332, %v3809
      %v3984 = vmul.f32 %v2336, %v3805
      %v3985 = vmul.f32 %v2338, %v3809
      %v3986 = vmul.f32 %v2342, %v3805
      %v3987 = vmul.f32 %v2344, %v3809
      %v3988 = vmul.f32 %v2348, %v3805
      %v3989 = vmul.f32 %v2350, %v3809
      %v3990 = vmul.f32 %v2354, %v3805
      %v3991 = vmul.f32 %v2356, %v3809
      %v3992 = vmul.f32 %v2360, %v3805
      %v3993 = vmul.f32 %v2362, %v3809
      %v3994 = vmul.f32 %v2366, %v3805
      %v3995 = vmul.f32 %v2368, %v3809
      %v3996 = vmul.f32 %v2372, %v3805
      %v3997 = vmul.f32 %v2374, %v3809
      %v3998 = vmul.f32 %v2378, %v3805
      %v3999 = vmul.f32 %v2380, %v3809
      %v4000 = vmul.f32 %v2384, %v3805
      %v4001 = vmul.f32 %v2386, %v3809
      %v4002 = vmul.f32 %v2390, %v3805
      %v4003 = vmul.f32 %v2392, %v3809
      %v4004 = vmul.f32 %v2396, %v3805
      %v4005 = vmul.f32 %v2398, %v3809
      %v4006 = vmul.f32 %v2402, %v3805
      %v4007 = vmul.f32 %v2404, %v3809
      %v4008 = vmul.f32 %v2408, %v3805
      %v4009 = vmul.f32 %v2410, %v3809
      %v4010 = vmul.f32 %v2414, %v3805
      %v4011 = vmul.f32 %v2416, %v3809
      %v4012 = vmul.f32 %v2420, %v3805
      %v4013 = vmul.f32 %v2422, %v3809
      %v4014 = vmul.f32 %v2426, %v3805
      %v4015 = vmul.f32 %v2428, %v3809
      %v4016 = vmul.f32 %v2432, %v3805
      %v4017 = vmul.f32 %v2434, %v3809
      %v4018 = vmul.f32 %v2438, %v3805
      %v4019 = vmul.f32 %v2440, %v3809
      %v4020 = vmul.f32 %v2444, %v3805
      %v4021 = vmul.f32 %v2446, %v3809
      %v4022 = vmul.f32 %v2450, %v3805
      %v4023 = vmul.f32 %v2452, %v3809
      %v4024 = vmul.f32 %v2456, %v3805
      %v4025 = vmul.f32 %v2458, %v3809
      %v4026 = vmul.f32 %v2462, %v3805
      %v4027 = vmul.f32 %v2464, %v3809
      %v4028 = vmul.f32 %v2468, %v3805
      %v4029 = vmul.f32 %v2470, %v3809
      %v4030 = vmul.f32 %v2474, %v3805
      %v4031 = vmul.f32 %v2476, %v3809
      %v4032 = vmul.f32 %v2480, %v3805
      %v4033 = vmul.f32 %v2482, %v3809
      %v4034 = vmul.f32 %v2486, %v3805
      %v4035 = vmul.f32 %v2488, %v3809
      %v4036 = vmul.f32 %v2492, %v3805
      %v4037 = vmul.f32 %v2494, %v3809
      %v4038 = vmul.f32 %v2498, %v3805
      %v4039 = vmul.f32 %v2500, %v3809
      %v4040 = vmul.f32 %v2504, %v3805
      %v4041 = vmul.f32 %v2506, %v3809
      %v4042 = vmul.f32 %v2510, %v3805
      %v4043 = vmul.f32 %v2512, %v3809
      %v4044 = vmul.f32 %v2516, %v3805
      %v4045 = vmul.f32 %v2518, %v3809
      %v4046 = vmul.f32 %v2522, %v3805
      %v4047 = vmul.f32 %v2524, %v3809
      %v4048 = vmul.f32 %v2528, %v3805
      %v4049 = vmul.f32 %v2530, %v3809
      %v4050 = vmul.f32 %v2534, %v3805
      %v4051 = vmul.f32 %v2536, %v3809
      %v4052 = vmul.f32 %v2540, %v3805
      %v4053 = vmul.f32 %v2542, %v3809
      %v4054 = vmul.f32 %v2546, %v3805
      %v4055 = vmul.f32 %v2548, %v3809
      %v4056 = vmul.f32 %v2552, %v3805
      %v4057 = vmul.f32 %v2554, %v3809
      %v4058 = vmul.f32 %v2558, %v3805
      %v4059 = vmul.f32 %v2560, %v3809
      %v4060 = vmul.f32 %v2564, %v3805
      %v4061 = vmul.f32 %v2566, %v3809
      %v4062 = vmul.f32 %v2570, %v3805
      %v4063 = vmul.f32 %v2572, %v3809
      %v4064 = vmul.f32 %v2576, %v3805
      %v4065 = vmul.f32 %v2578, %v3809
      %v4066 = vmul.f32 %v2582, %v3805
      %v4067 = vmul.f32 %v2584, %v3809
      %v4068 = vmul.f32 %v2588, %v3805
      %v4069 = vmul.f32 %v2590, %v3809
      %v4070 = vmul.f32 %v2594, %v3805
      %v4071 = vmul.f32 %v2596, %v3809
      %v4072 = vmul.f32 %v2600, %v3805
      %v4073 = vmul.f32 %v2602, %v3809
      %v4074 = vmul.f32 %v2606, %v3805
      %v4075 = vmul.f32 %v2608, %v3809
      %v4076 = vmul.f32 %v2612, %v3805
      %v4077 = vmul.f32 %v2614, %v3809
      %v4078 = vmul.f32 %v2618, %v3805
      %v4079 = vmul.f32 %v2620, %v3809
      %v4080 = vmul.f32 %v2624, %v3813
      %v4081 = vmul.f32 %v2626, %v3817
      %v4082 = vmul.f32 %v2630, %v3813
      %v4083 = vmul.f32 %v2632, %v3817
      %v4084 = vmul.f32 %v2636, %v3813
      %v4085 = vmul.f32 %v2638, %v3817
      %v4086 = vmul.f32 %v2642, %v3813
      %v4087 = vmul.f32 %v2644, %v3817
      %v4088 = vmul.f32 %v2648, %v3813
      %v4089 = vmul.f32 %v2650, %v3817
      %v4090 = vmul.f32 %v2654, %v3813
      %v4091 = vmul.f32 %v2656, %v3817
      %v4092 = vmul.f32 %v2660, %v3813
      %v4093 = vmul.f32 %v2662, %v3817
      %v4094 = vmul.f32 %v2666, %v3813
      %v4095 = vmul.f32 %v2668, %v3817
      %v4096 = vmul.f32 %v2672, %v3813
      %v4097 = vmul.f32 %v2674, %v3817
      %v4098 = vmul.f32 %v2678, %v3813
      %v4099 = vmul.f32 %v2680, %v3817
      %v4100 = vmul.f32 %v2684, %v3813
      %v4101 = vmul.f32 %v2686, %v3817
      %v4102 = vmul.f32 %v2690, %v3813
      %v4103 = vmul.f32 %v2692, %v3817
      %v4104 = vmul.f32 %v2696, %v3813
      %v4105 = vmul.f32 %v2698, %v3817
      %v4106 = vmul.f32 %v2702, %v3813
      %v4107 = vmul.f32 %v2704, %v3817
      %v4108 = vmul.f32 %v2708, %v3813
      %v4109 = vmul.f32 %v2710, %v3817
      %v4110 = vmul.f32 %v2714, %v3813
      %v4111 = vmul.f32 %v2716, %v3817
      %v4112 = vmul.f32 %v2720, %v3813
      %v4113 = vmul.f32 %v2722, %v3817
      %v4114 = vmul.f32 %v2726, %v3813
      %v4115 = vmul.f32 %v2728, %v3817
      %v4116 = vmul.f32 %v2732, %v3813
      %v4117 = vmul.f32 %v2734, %v3817
      %v4118 = vmul.f32 %v2738, %v3813
      %v4119 = vmul.f32 %v2740, %v3817
      %v4120 = vmul.f32 %v2744, %v3813
      %v4121 = vmul.f32 %v2746, %v3817
      %v4122 = vmul.f32 %v2750, %v3813
      %v4123 = vmul.f32 %v2752, %v3817
      %v4124 = vmul.f32 %v2756, %v3813
      %v4125 = vmul.f32 %v2758, %v3817
      %v4126 = vmul.f32 %v2762, %v3813
      %v4127 = vmul.f32 %v2764, %v3817
      %v4128 = vmul.f32 %v2768, %v3813
      %v4129 = vmul.f32 %v2770, %v3817
      %v4130 = vmul.f32 %v2774, %v3813
      %v4131 = vmul.f32 %v2776, %v3817
      %v4132 = vmul.f32 %v2780, %v3813
      %v4133 = vmul.f32 %v2782, %v3817
      %v4134 = vmul.f32 %v2786, %v3813
      %v4135 = vmul.f32 %v2788, %v3817
      %v4136 = vmul.f32 %v2792, %v3813
      %v4137 = vmul.f32 %v2794, %v3817
      %v4138 = vmul.f32 %v2798, %v3813
      %v4139 = vmul.f32 %v2800, %v3817
      %v4140 = vmul.f32 %v2804, %v3813
      %v4141 = vmul.f32 %v2806, %v3817
      %v4142 = vmul.f32 %v2810, %v3813
      %v4143 = vmul.f32 %v2812, %v3817
      %v4144 = vmul.f32 %v2816, %v3813
      %v4145 = vmul.f32 %v2818, %v3817
      %v4146 = vmul.f32 %v2822, %v3813
      %v4147 = vmul.f32 %v2824, %v3817
      %v4148 = vmul.f32 %v2828, %v3813
      %v4149 = vmul.f32 %v2830, %v3817
      %v4150 = vmul.f32 %v2834, %v3813
      %v4151 = vmul.f32 %v2836, %v3817
      %v4152 = vmul.f32 %v2840, %v3813
      %v4153 = vmul.f32 %v2842, %v3817
      %v4154 = vmul.f32 %v2846, %v3813
      %v4155 = vmul.f32 %v2848, %v3817
      %v4156 = vmul.f32 %v2852, %v3813
      %v4157 = vmul.f32 %v2854, %v3817
      %v4158 = vmul.f32 %v2858, %v3813
      %v4159 = vmul.f32 %v2860, %v3817
      %v4160 = vmul.f32 %v2864, %v3813
      %v4161 = vmul.f32 %v2866, %v3817
      %v4162 = vmul.f32 %v2870, %v3813
      %v4163 = vmul.f32 %v2872, %v3817
      %v4164 = vmul.f32 %v2876, %v3813
      %v4165 = vmul.f32 %v2878, %v3817
      %v4166 = vmul.f32 %v2882, %v3813
      %v4167 = vmul.f32 %v2884, %v3817
      %v4168 = vmul.f32 %v2888, %v3813
      %v4169 = vmul.f32 %v2890, %v3817
      %v4170 = vmul.f32 %v2894, %v3813
      %v4171 = vmul.f32 %v2896, %v3817
      %v4172 = vmul.f32 %v2900, %v3813
      %v4173 = vmul.f32 %v2902, %v3817
      %v4174 = vmul.f32 %v2906, %v3813
      %v4175 = vmul.f32 %v2908, %v3817
      %v4176 = vmul.f32 %v2912, %v3813
      %v4177 = vmul.f32 %v2914, %v3817
      %v4178 = vmul.f32 %v2918, %v3813
      %v4179 = vmul.f32 %v2920, %v3817
      %v4180 = vmul.f32 %v2924, %v3813
      %v4181 = vmul.f32 %v2926, %v3817
      %v4182 = vmul.f32 %v2930, %v3813
      %v4183 = vmul.f32 %v2932, %v3817
      %v4184 = vmul.f32 %v2936, %v3813
      %v4185 = vmul.f32 %v2938, %v3817
      %v4186 = vmul.f32 %v2942, %v3813
      %v4187 = vmul.f32 %v2944, %v3817
      %v4188 = vmul.f32 %v2948, %v3813
      %v4189 = vmul.f32 %v2950, %v3817
      %v4190 = vmul.f32 %v2954, %v3813
      %v4191 = vmul.f32 %v2956, %v3817
      %v4192 = vmul.f32 %v2960, %v3813
      %v4193 = vmul.f32 %v2962, %v3817
      %v4194 = vmul.f32 %v2966, %v3813
      %v4195 = vmul.f32 %v2968, %v3817
      %v4196 = vmul.f32 %v2972, %v3813
      %v4197 = vmul.f32 %v2974, %v3817
      %v4198 = vmul.f32 %v2978, %v3813
      %v4199 = vmul.f32 %v2980, %v3817
      %v4200 = vmul.f32 %v2984, %v3813
      %v4201 = vmul.f32 %v2986, %v3817
      %v4202 = vmul.f32 %v2990, %v3813
      %v4203 = vmul.f32 %v2992, %v3817
      %v4204 = vmul.f32 %v2996, %v3813
      %v4205 = vmul.f32 %v2998, %v3817
      %v4206 = vmul.f32 %v3002, %v3813
      %v4207 = vmul.f32 %v3004, %v3817
      %v4208 = vld [vmem:[%s5] sm:$0xff]
      %v4209 = vld [vmem:[%s5 + $0x8] sm:$0xff]
      %v4210 = vld [vmem:[%s5 + $0x10] sm:$0xff]
      %v4211 = vld [vmem:[%s5 + $0x18] sm:$0xff]
      %v4212 = vld [vmem:[%s5 + $0x20] sm:$0xff]
      %v4213 = vld [vmem:[%s5 + $0x28] sm:$0xff]
      %v4214 = vld [vmem:[%s5 + $0x30] sm:$0xff]
      %v4215 = vld [vmem:[%s5 + $0x38] sm:$0xff]
      %v4216 = vld [vmem:[%s5 + $0x40] sm:$0xff]
      %v4217 = vld [vmem:[%s5 + $0x48] sm:$0xff]
      %v4218 = vld [vmem:[%s5 + $0x50] sm:$0xff]
      %v4219 = vld [vmem:[%s5 + $0x58] sm:$0xff]
      %v4220 = vld [vmem:[%s5 + $0x60] sm:$0xff]
      %v4221 = vld [vmem:[%s5 + $0x68] sm:$0xff]
      %v4222 = vld [vmem:[%s5 + $0x70] sm:$0xff]
      %v4223 = vld [vmem:[%s5 + $0x78] sm:$0xff]
      %v4224 = vld [vmem:[%s5 + $0x80] sm:$0xff]
      %v4225 = vld [vmem:[%s5 + $0x88] sm:$0xff]
      %v4226 = vld [vmem:[%s5 + $0x90] sm:$0xff]
      %v4227 = vld [vmem:[%s5 + $0x98] sm:$0xff]
      %v4228 = vld [vmem:[%s5 + $0xa0] sm:$0xff]
      %v4229 = vld [vmem:[%s5 + $0xa8] sm:$0xff]
      %v4230 = vld [vmem:[%s5 + $0xb0] sm:$0xff]
      %v4231 = vld [vmem:[%s5 + $0xb8] sm:$0xff]
      %v4232 = vld [vmem:[%s5 + $0xc0] sm:$0xff]
      %v4233 = vld [vmem:[%s5 + $0xc8] sm:$0xff]
      %v4234 = vld [vmem:[%s5 + $0xd0] sm:$0xff]
      %v4235 = vld [vmem:[%s5 + $0xd8] sm:$0xff]
      %v4236 = vld [vmem:[%s5 + $0xe0] sm:$0xff]
      %v4237 = vld [vmem:[%s5 + $0xe8] sm:$0xff]
      %v4238 = vld [vmem:[%s5 + $0xf0] sm:$0xff]
      %v4239 = vld [vmem:[%s5 + $0xf8] sm:$0xff]
      %v4240 = vld [vmem:[%s5 + $0x100] sm:$0xff]
      %v4241 = vld [vmem:[%s5 + $0x108] sm:$0xff]
      %v4242 = vld [vmem:[%s5 + $0x110] sm:$0xff]
      %v4243 = vld [vmem:[%s5 + $0x118] sm:$0xff]
      %v4244 = vld [vmem:[%s5 + $0x120] sm:$0xff]
      %v4245 = vld [vmem:[%s5 + $0x128] sm:$0xff]
      %v4246 = vld [vmem:[%s5 + $0x130] sm:$0xff]
      %v4247 = vld [vmem:[%s5 + $0x138] sm:$0xff]
      %v4248 = vld [vmem:[%s5 + $0x140] sm:$0xff]
      %v4249 = vld [vmem:[%s5 + $0x148] sm:$0xff]
      %v4250 = vld [vmem:[%s5 + $0x150] sm:$0xff]
      %v4251 = vld [vmem:[%s5 + $0x158] sm:$0xff]
      %v4252 = vld [vmem:[%s5 + $0x160] sm:$0xff]
      %v4253 = vld [vmem:[%s5 + $0x168] sm:$0xff]
      %v4254 = vld [vmem:[%s5 + $0x170] sm:$0xff]
      %v4255 = vld [vmem:[%s5 + $0x178] sm:$0xff]
      %v4256 = vld [vmem:[%s5 + $0x180] sm:$0xff]
      %v4257 = vld [vmem:[%s5 + $0x188] sm:$0xff]
      %v4258 = vld [vmem:[%s5 + $0x190] sm:$0xff]
      %v4259 = vld [vmem:[%s5 + $0x198] sm:$0xff]
      %v4260 = vld [vmem:[%s5 + $0x1a0] sm:$0xff]
      %v4261 = vld [vmem:[%s5 + $0x1a8] sm:$0xff]
      %v4262 = vld [vmem:[%s5 + $0x1b0] sm:$0xff]
      %v4263 = vld [vmem:[%s5 + $0x1b8] sm:$0xff]
      %v4264 = vld [vmem:[%s5 + $0x1c0] sm:$0xff]
      %v4265 = vld [vmem:[%s5 + $0x1c8] sm:$0xff]
      %v4266 = vld [vmem:[%s5 + $0x1d0] sm:$0xff]
      %v4267 = vld [vmem:[%s5 + $0x1d8] sm:$0xff]
      %v4268 = vld [vmem:[%s5 + $0x1e0] sm:$0xff]
      %v4269 = vld [vmem:[%s5 + $0x1e8] sm:$0xff]
      %v4270 = vld [vmem:[%s5 + $0x1f0] sm:$0xff]
      %v4271 = vld [vmem:[%s5 + $0x1f8] sm:$0xff]
      %v4272 = vld [vmem:[%s5 + $0x200] sm:$0xff]
      %v4273 = vld [vmem:[%s5 + $0x208] sm:$0xff]
      %v4274 = vld [vmem:[%s5 + $0x210] sm:$0xff]
      %v4275 = vld [vmem:[%s5 + $0x218] sm:$0xff]
      %v4276 = vld [vmem:[%s5 + $0x220] sm:$0xff]
      %v4277 = vld [vmem:[%s5 + $0x228] sm:$0xff]
      %v4278 = vld [vmem:[%s5 + $0x230] sm:$0xff]
      %v4279 = vld [vmem:[%s5 + $0x238] sm:$0xff]
      %v4280 = vld [vmem:[%s5 + $0x240] sm:$0xff]
      %v4281 = vld [vmem:[%s5 + $0x248] sm:$0xff]
      %v4282 = vld [vmem:[%s5 + $0x250] sm:$0xff]
      %v4283 = vld [vmem:[%s5 + $0x258] sm:$0xff]
      %v4284 = vld [vmem:[%s5 + $0x260] sm:$0xff]
      %v4285 = vld [vmem:[%s5 + $0x268] sm:$0xff]
      %v4286 = vld [vmem:[%s5 + $0x270] sm:$0xff]
      %v4287 = vld [vmem:[%s5 + $0x278] sm:$0xff]
      %v4288 = vld [vmem:[%s5 + $0x280] sm:$0xff]
      %v4289 = vld [vmem:[%s5 + $0x288] sm:$0xff]
      %v4290 = vld [vmem:[%s5 + $0x290] sm:$0xff]
      %v4291 = vld [vmem:[%s5 + $0x298] sm:$0xff]
      %v4292 = vld [vmem:[%s5 + $0x2a0] sm:$0xff]
      %v4293 = vld [vmem:[%s5 + $0x2a8] sm:$0xff]
      %v4294 = vld [vmem:[%s5 + $0x2b0] sm:$0xff]
      %v4295 = vld [vmem:[%s5 + $0x2b8] sm:$0xff]
      %v4296 = vld [vmem:[%s5 + $0x2c0] sm:$0xff]
      %v4297 = vld [vmem:[%s5 + $0x2c8] sm:$0xff]
      %v4298 = vld [vmem:[%s5 + $0x2d0] sm:$0xff]
      %v4299 = vld [vmem:[%s5 + $0x2d8] sm:$0xff]
      %v4300 = vld [vmem:[%s5 + $0x2e0] sm:$0xff]
      %v4301 = vld [vmem:[%s5 + $0x2e8] sm:$0xff]
      %v4302 = vld [vmem:[%s5 + $0x2f0] sm:$0xff]
      %v4303 = vld [vmem:[%s5 + $0x2f8] sm:$0xff]
      %v4304 = vld [vmem:[%s5 + $0x300] sm:$0xff]
      %v4305 = vld [vmem:[%s5 + $0x308] sm:$0xff]
      %v4306 = vld [vmem:[%s5 + $0x310] sm:$0xff]
      %v4307 = vld [vmem:[%s5 + $0x318] sm:$0xff]
      %v4308 = vld [vmem:[%s5 + $0x320] sm:$0xff]
      %v4309 = vld [vmem:[%s5 + $0x328] sm:$0xff]
      %v4310 = vld [vmem:[%s5 + $0x330] sm:$0xff]
      %v4311 = vld [vmem:[%s5 + $0x338] sm:$0xff]
      %v4312 = vld [vmem:[%s5 + $0x340] sm:$0xff]
      %v4313 = vld [vmem:[%s5 + $0x348] sm:$0xff]
      %v4314 = vld [vmem:[%s5 + $0x350] sm:$0xff]
      %v4315 = vld [vmem:[%s5 + $0x358] sm:$0xff]
      %v4316 = vld [vmem:[%s5 + $0x360] sm:$0xff]
      %v4317 = vld [vmem:[%s5 + $0x368] sm:$0xff]
      %v4318 = vld [vmem:[%s5 + $0x370] sm:$0xff]
      %v4319 = vld [vmem:[%s5 + $0x378] sm:$0xff]
      %v4320 = vld [vmem:[%s5 + $0x380] sm:$0xff]
      %v4321 = vld [vmem:[%s5 + $0x388] sm:$0xff]
      %v4322 = vld [vmem:[%s5 + $0x390] sm:$0xff]
      %v4323 = vld [vmem:[%s5 + $0x398] sm:$0xff]
      %v4324 = vld [vmem:[%s5 + $0x3a0] sm:$0xff]
      %v4325 = vld [vmem:[%s5 + $0x3a8] sm:$0xff]
      %v4326 = vld [vmem:[%s5 + $0x3b0] sm:$0xff]
      %v4327 = vld [vmem:[%s5 + $0x3b8] sm:$0xff]
      %v4328 = vld [vmem:[%s5 + $0x3c0] sm:$0xff]
      %v4329 = vld [vmem:[%s5 + $0x3c8] sm:$0xff]
      %v4330 = vld [vmem:[%s5 + $0x3d0] sm:$0xff]
      %v4331 = vld [vmem:[%s5 + $0x3d8] sm:$0xff]
      %v4332 = vld [vmem:[%s5 + $0x3e0] sm:$0xff]
      %v4333 = vld [vmem:[%s5 + $0x3e8] sm:$0xff]
      %v4334 = vld [vmem:[%s5 + $0x3f0] sm:$0xff]
      %v4335 = vld [vmem:[%s5 + $0x3f8] sm:$0xff]
      %v4336 = vld [vmem:[%s5 + $0x400] sm:$0xff]
      %v4337 = vld [vmem:[%s5 + $0x408] sm:$0xff]
      %v4338 = vld [vmem:[%s5 + $0x410] sm:$0xff]
      %v4339 = vld [vmem:[%s5 + $0x418] sm:$0xff]
      %v4340 = vld [vmem:[%s5 + $0x420] sm:$0xff]
      %v4341 = vld [vmem:[%s5 + $0x428] sm:$0xff]
      %v4342 = vld [vmem:[%s5 + $0x430] sm:$0xff]
      %v4343 = vld [vmem:[%s5 + $0x438] sm:$0xff]
      %v4344 = vld [vmem:[%s5 + $0x440] sm:$0xff]
      %v4345 = vld [vmem:[%s5 + $0x448] sm:$0xff]
      %v4346 = vld [vmem:[%s5 + $0x450] sm:$0xff]
      %v4347 = vld [vmem:[%s5 + $0x458] sm:$0xff]
      %v4348 = vld [vmem:[%s5 + $0x460] sm:$0xff]
      %v4349 = vld [vmem:[%s5 + $0x468] sm:$0xff]
      %v4350 = vld [vmem:[%s5 + $0x470] sm:$0xff]
      %v4351 = vld [vmem:[%s5 + $0x478] sm:$0xff]
      %v4352 = vld [vmem:[%s5 + $0x480] sm:$0xff]
      %v4353 = vld [vmem:[%s5 + $0x488] sm:$0xff]
      %v4354 = vld [vmem:[%s5 + $0x490] sm:$0xff]
      %v4355 = vld [vmem:[%s5 + $0x498] sm:$0xff]
      %v4356 = vld [vmem:[%s5 + $0x4a0] sm:$0xff]
      %v4357 = vld [vmem:[%s5 + $0x4a8] sm:$0xff]
      %v4358 = vld [vmem:[%s5 + $0x4b0] sm:$0xff]
      %v4359 = vld [vmem:[%s5 + $0x4b8] sm:$0xff]
      %v4360 = vld [vmem:[%s5 + $0x4c0] sm:$0xff]
      %v4361 = vld [vmem:[%s5 + $0x4c8] sm:$0xff]
      %v4362 = vld [vmem:[%s5 + $0x4d0] sm:$0xff]
      %v4363 = vld [vmem:[%s5 + $0x4d8] sm:$0xff]
      %v4364 = vld [vmem:[%s5 + $0x4e0] sm:$0xff]
      %v4365 = vld [vmem:[%s5 + $0x4e8] sm:$0xff]
      %v4366 = vld [vmem:[%s5 + $0x4f0] sm:$0xff]
      %v4367 = vld [vmem:[%s5 + $0x4f8] sm:$0xff]
      %v4368 = vld [vmem:[%s5 + $0x500] sm:$0xff]
      %v4369 = vld [vmem:[%s5 + $0x508] sm:$0xff]
      %v4370 = vld [vmem:[%s5 + $0x510] sm:$0xff]
      %v4371 = vld [vmem:[%s5 + $0x518] sm:$0xff]
      %v4372 = vld [vmem:[%s5 + $0x520] sm:$0xff]
      %v4373 = vld [vmem:[%s5 + $0x528] sm:$0xff]
      %v4374 = vld [vmem:[%s5 + $0x530] sm:$0xff]
      %v4375 = vld [vmem:[%s5 + $0x538] sm:$0xff]
      %v4376 = vld [vmem:[%s5 + $0x540] sm:$0xff]
      %v4377 = vld [vmem:[%s5 + $0x548] sm:$0xff]
      %v4378 = vld [vmem:[%s5 + $0x550] sm:$0xff]
      %v4379 = vld [vmem:[%s5 + $0x558] sm:$0xff]
      %v4380 = vld [vmem:[%s5 + $0x560] sm:$0xff]
      %v4381 = vld [vmem:[%s5 + $0x568] sm:$0xff]
      %v4382 = vld [vmem:[%s5 + $0x570] sm:$0xff]
      %v4383 = vld [vmem:[%s5 + $0x578] sm:$0xff]
      %v4384 = vld [vmem:[%s5 + $0x580] sm:$0xff]
      %v4385 = vld [vmem:[%s5 + $0x588] sm:$0xff]
      %v4386 = vld [vmem:[%s5 + $0x590] sm:$0xff]
      %v4387 = vld [vmem:[%s5 + $0x598] sm:$0xff]
      %v4388 = vld [vmem:[%s5 + $0x5a0] sm:$0xff]
      %v4389 = vld [vmem:[%s5 + $0x5a8] sm:$0xff]
      %v4390 = vld [vmem:[%s5 + $0x5b0] sm:$0xff]
      %v4391 = vld [vmem:[%s5 + $0x5b8] sm:$0xff]
      %v4392 = vld [vmem:[%s5 + $0x5c0] sm:$0xff]
      %v4393 = vld [vmem:[%s5 + $0x5c8] sm:$0xff]
      %v4394 = vld [vmem:[%s5 + $0x5d0] sm:$0xff]
      %v4395 = vld [vmem:[%s5 + $0x5d8] sm:$0xff]
      %v4396 = vld [vmem:[%s5 + $0x5e0] sm:$0xff]
      %v4397 = vld [vmem:[%s5 + $0x5e8] sm:$0xff]
      %v4398 = vld [vmem:[%s5 + $0x5f0] sm:$0xff]
      %v4399 = vld [vmem:[%s5 + $0x5f8] sm:$0xff]
      %4401 = vset.pattern.permute.xlu0 0
      %4402 = vperm.xlu0 %4401, %v4208
      %v4403 = vpop.permute.xlu0 %4402
      %4406 = vset.pattern.permute.xlu0 0
      %4407 = vperm.xlu0 %4406, %v4209
      %v4408 = vpop.permute.xlu0 %4407
      %4411 = vset.pattern.permute.xlu0 0
      %4412 = vperm.xlu0 %4411, %v4210
      %v4413 = vpop.permute.xlu0 %4412
      %4416 = vset.pattern.permute.xlu0 0
      %4417 = vperm.xlu0 %4416, %v4211
      %v4418 = vpop.permute.xlu0 %4417
      %4421 = vset.pattern.permute.xlu0 0
      %4422 = vperm.xlu0 %4421, %v4212
      %v4423 = vpop.permute.xlu0 %4422
      %4426 = vset.pattern.permute.xlu0 0
      %4427 = vperm.xlu0 %4426, %v4213
      %v4428 = vpop.permute.xlu0 %4427
      %4431 = vset.pattern.permute.xlu0 0
      %4432 = vperm.xlu0 %4431, %v4214
      %v4433 = vpop.permute.xlu0 %4432
      %4436 = vset.pattern.permute.xlu0 0
      %4437 = vperm.xlu0 %4436, %v4215
      %v4438 = vpop.permute.xlu0 %4437
      %4441 = vset.pattern.permute.xlu0 0
      %4442 = vperm.xlu0 %4441, %v4216
      %v4443 = vpop.permute.xlu0 %4442
      %4446 = vset.pattern.permute.xlu0 0
      %4447 = vperm.xlu0 %4446, %v4217
      %v4448 = vpop.permute.xlu0 %4447
      %4451 = vset.pattern.permute.xlu0 0
      %4452 = vperm.xlu0 %4451, %v4218
      %v4453 = vpop.permute.xlu0 %4452
      %4456 = vset.pattern.permute.xlu0 0
      %4457 = vperm.xlu0 %4456, %v4219
      %v4458 = vpop.permute.xlu0 %4457
      %4461 = vset.pattern.permute.xlu0 0
      %4462 = vperm.xlu0 %4461, %v4220
      %v4463 = vpop.permute.xlu0 %4462
      %4466 = vset.pattern.permute.xlu0 0
      %4467 = vperm.xlu0 %4466, %v4221
      %v4468 = vpop.permute.xlu0 %4467
      %4471 = vset.pattern.permute.xlu0 0
      %4472 = vperm.xlu0 %4471, %v4222
      %v4473 = vpop.permute.xlu0 %4472
      %4476 = vset.pattern.permute.xlu0 0
      %4477 = vperm.xlu0 %4476, %v4223
      %v4478 = vpop.permute.xlu0 %4477
      %4481 = vset.pattern.permute.xlu0 0
      %4482 = vperm.xlu0 %4481, %v4224
      %v4483 = vpop.permute.xlu0 %4482
      %4486 = vset.pattern.permute.xlu0 0
      %4487 = vperm.xlu0 %4486, %v4225
      %v4488 = vpop.permute.xlu0 %4487
      %4491 = vset.pattern.permute.xlu0 0
      %4492 = vperm.xlu0 %4491, %v4226
      %v4493 = vpop.permute.xlu0 %4492
      %4496 = vset.pattern.permute.xlu0 0
      %4497 = vperm.xlu0 %4496, %v4227
      %v4498 = vpop.permute.xlu0 %4497
      %4501 = vset.pattern.permute.xlu0 0
      %4502 = vperm.xlu0 %4501, %v4228
      %v4503 = vpop.permute.xlu0 %4502
      %4506 = vset.pattern.permute.xlu0 0
      %4507 = vperm.xlu0 %4506, %v4229
      %v4508 = vpop.permute.xlu0 %4507
      %4511 = vset.pattern.permute.xlu0 0
      %4512 = vperm.xlu0 %4511, %v4230
      %v4513 = vpop.permute.xlu0 %4512
      %4516 = vset.pattern.permute.xlu0 0
      %4517 = vperm.xlu0 %4516, %v4231
      %v4518 = vpop.permute.xlu0 %4517
      %4521 = vset.pattern.permute.xlu0 0
      %4522 = vperm.xlu0 %4521, %v4232
      %v4523 = vpop.permute.xlu0 %4522
      %4526 = vset.pattern.permute.xlu0 0
      %4527 = vperm.xlu0 %4526, %v4233
      %v4528 = vpop.permute.xlu0 %4527
      %4531 = vset.pattern.permute.xlu0 0
      %4532 = vperm.xlu0 %4531, %v4234
      %v4533 = vpop.permute.xlu0 %4532
      %4536 = vset.pattern.permute.xlu0 0
      %4537 = vperm.xlu0 %4536, %v4235
      %v4538 = vpop.permute.xlu0 %4537
      %4541 = vset.pattern.permute.xlu0 0
      %4542 = vperm.xlu0 %4541, %v4236
      %v4543 = vpop.permute.xlu0 %4542
      %4546 = vset.pattern.permute.xlu0 0
      %4547 = vperm.xlu0 %4546, %v4237
      %v4548 = vpop.permute.xlu0 %4547
      %4551 = vset.pattern.permute.xlu0 0
      %4552 = vperm.xlu0 %4551, %v4238
      %v4553 = vpop.permute.xlu0 %4552
      %4556 = vset.pattern.permute.xlu0 0
      %4557 = vperm.xlu0 %4556, %v4239
      %v4558 = vpop.permute.xlu0 %4557
      %4561 = vset.pattern.permute.xlu0 0
      %4562 = vperm.xlu0 %4561, %v4240
      %v4563 = vpop.permute.xlu0 %4562
      %4566 = vset.pattern.permute.xlu0 0
      %4567 = vperm.xlu0 %4566, %v4241
      %v4568 = vpop.permute.xlu0 %4567
      %4571 = vset.pattern.permute.xlu0 0
      %4572 = vperm.xlu0 %4571, %v4242
      %v4573 = vpop.permute.xlu0 %4572
      %4576 = vset.pattern.permute.xlu0 0
      %4577 = vperm.xlu0 %4576, %v4243
      %v4578 = vpop.permute.xlu0 %4577
      %4581 = vset.pattern.permute.xlu0 0
      %4582 = vperm.xlu0 %4581, %v4244
      %v4583 = vpop.permute.xlu0 %4582
      %4586 = vset.pattern.permute.xlu0 0
      %4587 = vperm.xlu0 %4586, %v4245
      %v4588 = vpop.permute.xlu0 %4587
      %4591 = vset.pattern.permute.xlu0 0
      %4592 = vperm.xlu0 %4591, %v4246
      %v4593 = vpop.permute.xlu0 %4592
      %4596 = vset.pattern.permute.xlu0 0
      %4597 = vperm.xlu0 %4596, %v4247
      %v4598 = vpop.permute.xlu0 %4597
      %4601 = vset.pattern.permute.xlu0 0
      %4602 = vperm.xlu0 %4601, %v4248
      %v4603 = vpop.permute.xlu0 %4602
      %4606 = vset.pattern.permute.xlu0 0
      %4607 = vperm.xlu0 %4606, %v4249
      %v4608 = vpop.permute.xlu0 %4607
      %4611 = vset.pattern.permute.xlu0 0
      %4612 = vperm.xlu0 %4611, %v4250
      %v4613 = vpop.permute.xlu0 %4612
      %4616 = vset.pattern.permute.xlu0 0
      %4617 = vperm.xlu0 %4616, %v4251
      %v4618 = vpop.permute.xlu0 %4617
      %4621 = vset.pattern.permute.xlu0 0
      %4622 = vperm.xlu0 %4621, %v4252
      %v4623 = vpop.permute.xlu0 %4622
      %4626 = vset.pattern.permute.xlu0 0
      %4627 = vperm.xlu0 %4626, %v4253
      %v4628 = vpop.permute.xlu0 %4627
      %4631 = vset.pattern.permute.xlu0 0
      %4632 = vperm.xlu0 %4631, %v4254
      %v4633 = vpop.permute.xlu0 %4632
      %4636 = vset.pattern.permute.xlu0 0
      %4637 = vperm.xlu0 %4636, %v4255
      %v4638 = vpop.permute.xlu0 %4637
      %4641 = vset.pattern.permute.xlu0 0
      %4642 = vperm.xlu0 %4641, %v4256
      %v4643 = vpop.permute.xlu0 %4642
      %4646 = vset.pattern.permute.xlu0 0
      %4647 = vperm.xlu0 %4646, %v4257
      %v4648 = vpop.permute.xlu0 %4647
      %4651 = vset.pattern.permute.xlu0 0
      %4652 = vperm.xlu0 %4651, %v4258
      %v4653 = vpop.permute.xlu0 %4652
      %4656 = vset.pattern.permute.xlu0 0
      %4657 = vperm.xlu0 %4656, %v4259
      %v4658 = vpop.permute.xlu0 %4657
      %4661 = vset.pattern.permute.xlu0 0
      %4662 = vperm.xlu0 %4661, %v4260
      %v4663 = vpop.permute.xlu0 %4662
      %4666 = vset.pattern.permute.xlu0 0
      %4667 = vperm.xlu0 %4666, %v4261
      %v4668 = vpop.permute.xlu0 %4667
      %4671 = vset.pattern.permute.xlu0 0
      %4672 = vperm.xlu0 %4671, %v4262
      %v4673 = vpop.permute.xlu0 %4672
      %4676 = vset.pattern.permute.xlu0 0
      %4677 = vperm.xlu0 %4676, %v4263
      %v4678 = vpop.permute.xlu0 %4677
      %4681 = vset.pattern.permute.xlu0 0
      %4682 = vperm.xlu0 %4681, %v4264
      %v4683 = vpop.permute.xlu0 %4682
      %4686 = vset.pattern.permute.xlu0 0
      %4687 = vperm.xlu0 %4686, %v4265
      %v4688 = vpop.permute.xlu0 %4687
      %4691 = vset.pattern.permute.xlu0 0
      %4692 = vperm.xlu0 %4691, %v4266
      %v4693 = vpop.permute.xlu0 %4692
      %4696 = vset.pattern.permute.xlu0 0
      %4697 = vperm.xlu0 %4696, %v4267
      %v4698 = vpop.permute.xlu0 %4697
      %4701 = vset.pattern.permute.xlu0 0
      %4702 = vperm.xlu0 %4701, %v4268
      %v4703 = vpop.permute.xlu0 %4702
      %4706 = vset.pattern.permute.xlu0 0
      %4707 = vperm.xlu0 %4706, %v4269
      %v4708 = vpop.permute.xlu0 %4707
      %4711 = vset.pattern.permute.xlu0 0
      %4712 = vperm.xlu0 %4711, %v4270
      %v4713 = vpop.permute.xlu0 %4712
      %4716 = vset.pattern.permute.xlu0 0
      %4717 = vperm.xlu0 %4716, %v4271
      %v4718 = vpop.permute.xlu0 %4717
      %4721 = vset.pattern.permute.xlu0 0
      %4722 = vperm.xlu0 %4721, %v4272
      %v4723 = vpop.permute.xlu0 %4722
      %4726 = vset.pattern.permute.xlu0 0
      %4727 = vperm.xlu0 %4726, %v4273
      %v4728 = vpop.permute.xlu0 %4727
      %4731 = vset.pattern.permute.xlu0 0
      %4732 = vperm.xlu0 %4731, %v4274
      %v4733 = vpop.permute.xlu0 %4732
      %4736 = vset.pattern.permute.xlu0 0
      %4737 = vperm.xlu0 %4736, %v4275
      %v4738 = vpop.permute.xlu0 %4737
      %4741 = vset.pattern.permute.xlu0 0
      %4742 = vperm.xlu0 %4741, %v4276
      %v4743 = vpop.permute.xlu0 %4742
      %4746 = vset.pattern.permute.xlu0 0
      %4747 = vperm.xlu0 %4746, %v4277
      %v4748 = vpop.permute.xlu0 %4747
      %4751 = vset.pattern.permute.xlu0 0
      %4752 = vperm.xlu0 %4751, %v4278
      %v4753 = vpop.permute.xlu0 %4752
      %4756 = vset.pattern.permute.xlu0 0
      %4757 = vperm.xlu0 %4756, %v4279
      %v4758 = vpop.permute.xlu0 %4757
      %4761 = vset.pattern.permute.xlu0 0
      %4762 = vperm.xlu0 %4761, %v4280
      %v4763 = vpop.permute.xlu0 %4762
      %4766 = vset.pattern.permute.xlu0 0
      %4767 = vperm.xlu0 %4766, %v4281
      %v4768 = vpop.permute.xlu0 %4767
      %4771 = vset.pattern.permute.xlu0 0
      %4772 = vperm.xlu0 %4771, %v4282
      %v4773 = vpop.permute.xlu0 %4772
      %4776 = vset.pattern.permute.xlu0 0
      %4777 = vperm.xlu0 %4776, %v4283
      %v4778 = vpop.permute.xlu0 %4777
      %4781 = vset.pattern.permute.xlu0 0
      %4782 = vperm.xlu0 %4781, %v4284
      %v4783 = vpop.permute.xlu0 %4782
      %4786 = vset.pattern.permute.xlu0 0
      %4787 = vperm.xlu0 %4786, %v4285
      %v4788 = vpop.permute.xlu0 %4787
      %4791 = vset.pattern.permute.xlu0 0
      %4792 = vperm.xlu0 %4791, %v4286
      %v4793 = vpop.permute.xlu0 %4792
      %4796 = vset.pattern.permute.xlu0 0
      %4797 = vperm.xlu0 %4796, %v4287
      %v4798 = vpop.permute.xlu0 %4797
      %4801 = vset.pattern.permute.xlu0 0
      %4802 = vperm.xlu0 %4801, %v4288
      %v4803 = vpop.permute.xlu0 %4802
      %4806 = vset.pattern.permute.xlu0 0
      %4807 = vperm.xlu0 %4806, %v4289
      %v4808 = vpop.permute.xlu0 %4807
      %4811 = vset.pattern.permute.xlu0 0
      %4812 = vperm.xlu0 %4811, %v4290
      %v4813 = vpop.permute.xlu0 %4812
      %4816 = vset.pattern.permute.xlu0 0
      %4817 = vperm.xlu0 %4816, %v4291
      %v4818 = vpop.permute.xlu0 %4817
      %4821 = vset.pattern.permute.xlu0 0
      %4822 = vperm.xlu0 %4821, %v4292
      %v4823 = vpop.permute.xlu0 %4822
      %4826 = vset.pattern.permute.xlu0 0
      %4827 = vperm.xlu0 %4826, %v4293
      %v4828 = vpop.permute.xlu0 %4827
      %4831 = vset.pattern.permute.xlu0 0
      %4832 = vperm.xlu0 %4831, %v4294
      %v4833 = vpop.permute.xlu0 %4832
      %4836 = vset.pattern.permute.xlu0 0
      %4837 = vperm.xlu0 %4836, %v4295
      %v4838 = vpop.permute.xlu0 %4837
      %4841 = vset.pattern.permute.xlu0 0
      %4842 = vperm.xlu0 %4841, %v4296
      %v4843 = vpop.permute.xlu0 %4842
      %4846 = vset.pattern.permute.xlu0 0
      %4847 = vperm.xlu0 %4846, %v4297
      %v4848 = vpop.permute.xlu0 %4847
      %4851 = vset.pattern.permute.xlu0 0
      %4852 = vperm.xlu0 %4851, %v4298
      %v4853 = vpop.permute.xlu0 %4852
      %4856 = vset.pattern.permute.xlu0 0
      %4857 = vperm.xlu0 %4856, %v4299
      %v4858 = vpop.permute.xlu0 %4857
      %4861 = vset.pattern.permute.xlu0 0
      %4862 = vperm.xlu0 %4861, %v4300
      %v4863 = vpop.permute.xlu0 %4862
      %4866 = vset.pattern.permute.xlu0 0
      %4867 = vperm.xlu0 %4866, %v4301
      %v4868 = vpop.permute.xlu0 %4867
      %4871 = vset.pattern.permute.xlu0 0
      %4872 = vperm.xlu0 %4871, %v4302
      %v4873 = vpop.permute.xlu0 %4872
      %4876 = vset.pattern.permute.xlu0 0
      %4877 = vperm.xlu0 %4876, %v4303
      %v4878 = vpop.permute.xlu0 %4877
      %4881 = vset.pattern.permute.xlu0 0
      %4882 = vperm.xlu0 %4881, %v4304
      %v4883 = vpop.permute.xlu0 %4882
      %4886 = vset.pattern.permute.xlu0 0
      %4887 = vperm.xlu0 %4886, %v4305
      %v4888 = vpop.permute.xlu0 %4887
      %4891 = vset.pattern.permute.xlu0 0
      %4892 = vperm.xlu0 %4891, %v4306
      %v4893 = vpop.permute.xlu0 %4892
      %4896 = vset.pattern.permute.xlu0 0
      %4897 = vperm.xlu0 %4896, %v4307
      %v4898 = vpop.permute.xlu0 %4897
      %4901 = vset.pattern.permute.xlu0 0
      %4902 = vperm.xlu0 %4901, %v4308
      %v4903 = vpop.permute.xlu0 %4902
      %4906 = vset.pattern.permute.xlu0 0
      %4907 = vperm.xlu0 %4906, %v4309
      %v4908 = vpop.permute.xlu0 %4907
      %4911 = vset.pattern.permute.xlu0 0
      %4912 = vperm.xlu0 %4911, %v4310
      %v4913 = vpop.permute.xlu0 %4912
      %4916 = vset.pattern.permute.xlu0 0
      %4917 = vperm.xlu0 %4916, %v4311
      %v4918 = vpop.permute.xlu0 %4917
      %4921 = vset.pattern.permute.xlu0 0
      %4922 = vperm.xlu0 %4921, %v4312
      %v4923 = vpop.permute.xlu0 %4922
      %4926 = vset.pattern.permute.xlu0 0
      %4927 = vperm.xlu0 %4926, %v4313
      %v4928 = vpop.permute.xlu0 %4927
      %4931 = vset.pattern.permute.xlu0 0
      %4932 = vperm.xlu0 %4931, %v4314
      %v4933 = vpop.permute.xlu0 %4932
      %4936 = vset.pattern.permute.xlu0 0
      %4937 = vperm.xlu0 %4936, %v4315
      %v4938 = vpop.permute.xlu0 %4937
      %4941 = vset.pattern.permute.xlu0 0
      %4942 = vperm.xlu0 %4941, %v4316
      %v4943 = vpop.permute.xlu0 %4942
      %4946 = vset.pattern.permute.xlu0 0
      %4947 = vperm.xlu0 %4946, %v4317
      %v4948 = vpop.permute.xlu0 %4947
      %4951 = vset.pattern.permute.xlu0 0
      %4952 = vperm.xlu0 %4951, %v4318
      %v4953 = vpop.permute.xlu0 %4952
      %4956 = vset.pattern.permute.xlu0 0
      %4957 = vperm.xlu0 %4956, %v4319
      %v4958 = vpop.permute.xlu0 %4957
      %4961 = vset.pattern.permute.xlu0 0
      %4962 = vperm.xlu0 %4961, %v4320
      %v4963 = vpop.permute.xlu0 %4962
      %4966 = vset.pattern.permute.xlu0 0
      %4967 = vperm.xlu0 %4966, %v4321
      %v4968 = vpop.permute.xlu0 %4967
      %4971 = vset.pattern.permute.xlu0 0
      %4972 = vperm.xlu0 %4971, %v4322
      %v4973 = vpop.permute.xlu0 %4972
      %4976 = vset.pattern.permute.xlu0 0
      %4977 = vperm.xlu0 %4976, %v4323
      %v4978 = vpop.permute.xlu0 %4977
      %4981 = vset.pattern.permute.xlu0 0
      %4982 = vperm.xlu0 %4981, %v4324
      %v4983 = vpop.permute.xlu0 %4982
      %4986 = vset.pattern.permute.xlu0 0
      %4987 = vperm.xlu0 %4986, %v4325
      %v4988 = vpop.permute.xlu0 %4987
      %4991 = vset.pattern.permute.xlu0 0
      %4992 = vperm.xlu0 %4991, %v4326
      %v4993 = vpop.permute.xlu0 %4992
      %4996 = vset.pattern.permute.xlu0 0
      %4997 = vperm.xlu0 %4996, %v4327
      %v4998 = vpop.permute.xlu0 %4997
      %5001 = vset.pattern.permute.xlu0 0
      %5002 = vperm.xlu0 %5001, %v4328
      %v5003 = vpop.permute.xlu0 %5002
      %5006 = vset.pattern.permute.xlu0 0
      %5007 = vperm.xlu0 %5006, %v4329
      %v5008 = vpop.permute.xlu0 %5007
      %5011 = vset.pattern.permute.xlu0 0
      %5012 = vperm.xlu0 %5011, %v4330
      %v5013 = vpop.permute.xlu0 %5012
      %5016 = vset.pattern.permute.xlu0 0
      %5017 = vperm.xlu0 %5016, %v4331
      %v5018 = vpop.permute.xlu0 %5017
      %5021 = vset.pattern.permute.xlu0 0
      %5022 = vperm.xlu0 %5021, %v4332
      %v5023 = vpop.permute.xlu0 %5022
      %5026 = vset.pattern.permute.xlu0 0
      %5027 = vperm.xlu0 %5026, %v4333
      %v5028 = vpop.permute.xlu0 %5027
      %5031 = vset.pattern.permute.xlu0 0
      %5032 = vperm.xlu0 %5031, %v4334
      %v5033 = vpop.permute.xlu0 %5032
      %5036 = vset.pattern.permute.xlu0 0
      %5037 = vperm.xlu0 %5036, %v4335
      %v5038 = vpop.permute.xlu0 %5037
      %5041 = vset.pattern.permute.xlu0 0
      %5042 = vperm.xlu0 %5041, %v4336
      %v5043 = vpop.permute.xlu0 %5042
      %5046 = vset.pattern.permute.xlu0 0
      %5047 = vperm.xlu0 %5046, %v4337
      %v5048 = vpop.permute.xlu0 %5047
      %5051 = vset.pattern.permute.xlu0 0
      %5052 = vperm.xlu0 %5051, %v4338
      %v5053 = vpop.permute.xlu0 %5052
      %5056 = vset.pattern.permute.xlu0 0
      %5057 = vperm.xlu0 %5056, %v4339
      %v5058 = vpop.permute.xlu0 %5057
      %5061 = vset.pattern.permute.xlu0 0
      %5062 = vperm.xlu0 %5061, %v4340
      %v5063 = vpop.permute.xlu0 %5062
      %5066 = vset.pattern.permute.xlu0 0
      %5067 = vperm.xlu0 %5066, %v4341
      %v5068 = vpop.permute.xlu0 %5067
      %5071 = vset.pattern.permute.xlu0 0
      %5072 = vperm.xlu0 %5071, %v4342
      %v5073 = vpop.permute.xlu0 %5072
      %5076 = vset.pattern.permute.xlu0 0
      %5077 = vperm.xlu0 %5076, %v4343
      %v5078 = vpop.permute.xlu0 %5077
      %5081 = vset.pattern.permute.xlu0 0
      %5082 = vperm.xlu0 %5081, %v4344
      %v5083 = vpop.permute.xlu0 %5082
      %5086 = vset.pattern.permute.xlu0 0
      %5087 = vperm.xlu0 %5086, %v4345
      %v5088 = vpop.permute.xlu0 %5087
      %5091 = vset.pattern.permute.xlu0 0
      %5092 = vperm.xlu0 %5091, %v4346
      %v5093 = vpop.permute.xlu0 %5092
      %5096 = vset.pattern.permute.xlu0 0
      %5097 = vperm.xlu0 %5096, %v4347
      %v5098 = vpop.permute.xlu0 %5097
      %5101 = vset.pattern.permute.xlu0 0
      %5102 = vperm.xlu0 %5101, %v4348
      %v5103 = vpop.permute.xlu0 %5102
      %5106 = vset.pattern.permute.xlu0 0
      %5107 = vperm.xlu0 %5106, %v4349
      %v5108 = vpop.permute.xlu0 %5107
      %5111 = vset.pattern.permute.xlu0 0
      %5112 = vperm.xlu0 %5111, %v4350
      %v5113 = vpop.permute.xlu0 %5112
      %5116 = vset.pattern.permute.xlu0 0
      %5117 = vperm.xlu0 %5116, %v4351
      %v5118 = vpop.permute.xlu0 %5117
      %5121 = vset.pattern.permute.xlu0 0
      %5122 = vperm.xlu0 %5121, %v4352
      %v5123 = vpop.permute.xlu0 %5122
      %5126 = vset.pattern.permute.xlu0 0
      %5127 = vperm.xlu0 %5126, %v4353
      %v5128 = vpop.permute.xlu0 %5127
      %5131 = vset.pattern.permute.xlu0 0
      %5132 = vperm.xlu0 %5131, %v4354
      %v5133 = vpop.permute.xlu0 %5132
      %5136 = vset.pattern.permute.xlu0 0
      %5137 = vperm.xlu0 %5136, %v4355
      %v5138 = vpop.permute.xlu0 %5137
      %5141 = vset.pattern.permute.xlu0 0
      %5142 = vperm.xlu0 %5141, %v4356
      %v5143 = vpop.permute.xlu0 %5142
      %5146 = vset.pattern.permute.xlu0 0
      %5147 = vperm.xlu0 %5146, %v4357
      %v5148 = vpop.permute.xlu0 %5147
      %5151 = vset.pattern.permute.xlu0 0
      %5152 = vperm.xlu0 %5151, %v4358
      %v5153 = vpop.permute.xlu0 %5152
      %5156 = vset.pattern.permute.xlu0 0
      %5157 = vperm.xlu0 %5156, %v4359
      %v5158 = vpop.permute.xlu0 %5157
      %5161 = vset.pattern.permute.xlu0 0
      %5162 = vperm.xlu0 %5161, %v4360
      %v5163 = vpop.permute.xlu0 %5162
      %5166 = vset.pattern.permute.xlu0 0
      %5167 = vperm.xlu0 %5166, %v4361
      %v5168 = vpop.permute.xlu0 %5167
      %5171 = vset.pattern.permute.xlu0 0
      %5172 = vperm.xlu0 %5171, %v4362
      %v5173 = vpop.permute.xlu0 %5172
      %5176 = vset.pattern.permute.xlu0 0
      %5177 = vperm.xlu0 %5176, %v4363
      %v5178 = vpop.permute.xlu0 %5177
      %5181 = vset.pattern.permute.xlu0 0
      %5182 = vperm.xlu0 %5181, %v4364
      %v5183 = vpop.permute.xlu0 %5182
      %5186 = vset.pattern.permute.xlu0 0
      %5187 = vperm.xlu0 %5186, %v4365
      %v5188 = vpop.permute.xlu0 %5187
      %5191 = vset.pattern.permute.xlu0 0
      %5192 = vperm.xlu0 %5191, %v4366
      %v5193 = vpop.permute.xlu0 %5192
      %5196 = vset.pattern.permute.xlu0 0
      %5197 = vperm.xlu0 %5196, %v4367
      %v5198 = vpop.permute.xlu0 %5197
      %5201 = vset.pattern.permute.xlu0 0
      %5202 = vperm.xlu0 %5201, %v4368
      %v5203 = vpop.permute.xlu0 %5202
      %5206 = vset.pattern.permute.xlu0 0
      %5207 = vperm.xlu0 %5206, %v4369
      %v5208 = vpop.permute.xlu0 %5207
      %5211 = vset.pattern.permute.xlu0 0
      %5212 = vperm.xlu0 %5211, %v4370
      %v5213 = vpop.permute.xlu0 %5212
      %5216 = vset.pattern.permute.xlu0 0
      %5217 = vperm.xlu0 %5216, %v4371
      %v5218 = vpop.permute.xlu0 %5217
      %5221 = vset.pattern.permute.xlu0 0
      %5222 = vperm.xlu0 %5221, %v4372
      %v5223 = vpop.permute.xlu0 %5222
      %5226 = vset.pattern.permute.xlu0 0
      %5227 = vperm.xlu0 %5226, %v4373
      %v5228 = vpop.permute.xlu0 %5227
      %5231 = vset.pattern.permute.xlu0 0
      %5232 = vperm.xlu0 %5231, %v4374
      %v5233 = vpop.permute.xlu0 %5232
      %5236 = vset.pattern.permute.xlu0 0
      %5237 = vperm.xlu0 %5236, %v4375
      %v5238 = vpop.permute.xlu0 %5237
      %5241 = vset.pattern.permute.xlu0 0
      %5242 = vperm.xlu0 %5241, %v4376
      %v5243 = vpop.permute.xlu0 %5242
      %5246 = vset.pattern.permute.xlu0 0
      %5247 = vperm.xlu0 %5246, %v4377
      %v5248 = vpop.permute.xlu0 %5247
      %5251 = vset.pattern.permute.xlu0 0
      %5252 = vperm.xlu0 %5251, %v4378
      %v5253 = vpop.permute.xlu0 %5252
      %5256 = vset.pattern.permute.xlu0 0
      %5257 = vperm.xlu0 %5256, %v4379
      %v5258 = vpop.permute.xlu0 %5257
      %5261 = vset.pattern.permute.xlu0 0
      %5262 = vperm.xlu0 %5261, %v4380
      %v5263 = vpop.permute.xlu0 %5262
      %5266 = vset.pattern.permute.xlu0 0
      %5267 = vperm.xlu0 %5266, %v4381
      %v5268 = vpop.permute.xlu0 %5267
      %5271 = vset.pattern.permute.xlu0 0
      %5272 = vperm.xlu0 %5271, %v4382
      %v5273 = vpop.permute.xlu0 %5272
      %5276 = vset.pattern.permute.xlu0 0
      %5277 = vperm.xlu0 %5276, %v4383
      %v5278 = vpop.permute.xlu0 %5277
      %5281 = vset.pattern.permute.xlu0 0
      %5282 = vperm.xlu0 %5281, %v4384
      %v5283 = vpop.permute.xlu0 %5282
      %5286 = vset.pattern.permute.xlu0 0
      %5287 = vperm.xlu0 %5286, %v4385
      %v5288 = vpop.permute.xlu0 %5287
      %5291 = vset.pattern.permute.xlu0 0
      %5292 = vperm.xlu0 %5291, %v4386
      %v5293 = vpop.permute.xlu0 %5292
      %5296 = vset.pattern.permute.xlu0 0
      %5297 = vperm.xlu0 %5296, %v4387
      %v5298 = vpop.permute.xlu0 %5297
      %5301 = vset.pattern.permute.xlu0 0
      %5302 = vperm.xlu0 %5301, %v4388
      %v5303 = vpop.permute.xlu0 %5302
      %5306 = vset.pattern.permute.xlu0 0
      %5307 = vperm.xlu0 %5306, %v4389
      %v5308 = vpop.permute.xlu0 %5307
      %5311 = vset.pattern.permute.xlu0 0
      %5312 = vperm.xlu0 %5311, %v4390
      %v5313 = vpop.permute.xlu0 %5312
      %5316 = vset.pattern.permute.xlu0 0
      %5317 = vperm.xlu0 %5316, %v4391
      %v5318 = vpop.permute.xlu0 %5317
      %5321 = vset.pattern.permute.xlu0 0
      %5322 = vperm.xlu0 %5321, %v4392
      %v5323 = vpop.permute.xlu0 %5322
      %5326 = vset.pattern.permute.xlu0 0
      %5327 = vperm.xlu0 %5326, %v4393
      %v5328 = vpop.permute.xlu0 %5327
      %5331 = vset.pattern.permute.xlu0 0
      %5332 = vperm.xlu0 %5331, %v4394
      %v5333 = vpop.permute.xlu0 %5332
      %5336 = vset.pattern.permute.xlu0 0
      %5337 = vperm.xlu0 %5336, %v4395
      %v5338 = vpop.permute.xlu0 %5337
      %5341 = vset.pattern.permute.xlu0 0
      %5342 = vperm.xlu0 %5341, %v4396
      %v5343 = vpop.permute.xlu0 %5342
      %5346 = vset.pattern.permute.xlu0 0
      %5347 = vperm.xlu0 %5346, %v4397
      %v5348 = vpop.permute.xlu0 %5347
      %5351 = vset.pattern.permute.xlu0 0
      %5352 = vperm.xlu0 %5351, %v4398
      %v5353 = vpop.permute.xlu0 %5352
      %5356 = vset.pattern.permute.xlu0 0
      %5357 = vperm.xlu0 %5356, %v4399
      %v5358 = vpop.permute.xlu0 %5357
      %v5360 = vadd.f32 %v3824, %v4403
      %v5361 = vadd.f32 %v3825, %v4403
      %v5362 = vadd.f32 %v3826, %v4408
      %v5363 = vadd.f32 %v3827, %v4408
      %v5364 = vadd.f32 %v3828, %v4413
      %v5365 = vadd.f32 %v3829, %v4413
      %v5366 = vadd.f32 %v3830, %v4418
      %v5367 = vadd.f32 %v3831, %v4418
      %v5368 = vadd.f32 %v3832, %v4423
      %v5369 = vadd.f32 %v3833, %v4423
      %v5370 = vadd.f32 %v3834, %v4428
      %v5371 = vadd.f32 %v3835, %v4428
      %v5372 = vadd.f32 %v3836, %v4433
      %v5373 = vadd.f32 %v3837, %v4433
      %v5374 = vadd.f32 %v3838, %v4438
      %v5375 = vadd.f32 %v3839, %v4438
      %v5376 = vadd.f32 %v3840, %v4443
      %v5377 = vadd.f32 %v3841, %v4443
      %v5378 = vadd.f32 %v3842, %v4448
      %v5379 = vadd.f32 %v3843, %v4448
      %v5380 = vadd.f32 %v3844, %v4453
      %v5381 = vadd.f32 %v3845, %v4453
      %v5382 = vadd.f32 %v3846, %v4458
      %v5383 = vadd.f32 %v3847, %v4458
      %v5384 = vadd.f32 %v3848, %v4463
      %v5385 = vadd.f32 %v3849, %v4463
      %v5386 = vadd.f32 %v3850, %v4468
      %v5387 = vadd.f32 %v3851, %v4468
      %v5388 = vadd.f32 %v3852, %v4473
      %v5389 = vadd.f32 %v3853, %v4473
      %v5390 = vadd.f32 %v3854, %v4478
      %v5391 = vadd.f32 %v3855, %v4478
      %v5392 = vadd.f32 %v3856, %v4483
      %v5393 = vadd.f32 %v3857, %v4483
      %v5394 = vadd.f32 %v3858, %v4488
      %v5395 = vadd.f32 %v3859, %v4488
      %v5396 = vadd.f32 %v3860, %v4493
      %v5397 = vadd.f32 %v3861, %v4493
      %v5398 = vadd.f32 %v3862, %v4498
      %v5399 = vadd.f32 %v3863, %v4498
      %v5400 = vadd.f32 %v3864, %v4503
      %v5401 = vadd.f32 %v3865, %v4503
      %v5402 = vadd.f32 %v3866, %v4508
      %v5403 = vadd.f32 %v3867, %v4508
      %v5404 = vadd.f32 %v3868, %v4513
      %v5405 = vadd.f32 %v3869, %v4513
      %v5406 = vadd.f32 %v3870, %v4518
      %v5407 = vadd.f32 %v3871, %v4518
      %v5408 = vadd.f32 %v3872, %v4523
      %v5409 = vadd.f32 %v3873, %v4523
      %v5410 = vadd.f32 %v3874, %v4528
      %v5411 = vadd.f32 %v3875, %v4528
      %v5412 = vadd.f32 %v3876, %v4533
      %v5413 = vadd.f32 %v3877, %v4533
      %v5414 = vadd.f32 %v3878, %v4538
      %v5415 = vadd.f32 %v3879, %v4538
      %v5416 = vadd.f32 %v3880, %v4543
      %v5417 = vadd.f32 %v3881, %v4543
      %v5418 = vadd.f32 %v3882, %v4548
      %v5419 = vadd.f32 %v3883, %v4548
      %v5420 = vadd.f32 %v3884, %v4553
      %v5421 = vadd.f32 %v3885, %v4553
      %v5422 = vadd.f32 %v3886, %v4558
      %v5423 = vadd.f32 %v3887, %v4558
      %v5424 = vadd.f32 %v3888, %v4563
      %v5425 = vadd.f32 %v3889, %v4563
      %v5426 = vadd.f32 %v3890, %v4568
      %v5427 = vadd.f32 %v3891, %v4568
      %v5428 = vadd.f32 %v3892, %v4573
      %v5429 = vadd.f32 %v3893, %v4573
      %v5430 = vadd.f32 %v3894, %v4578
      %v5431 = vadd.f32 %v3895, %v4578
      %v5432 = vadd.f32 %v3896, %v4583
      %v5433 = vadd.f32 %v3897, %v4583
      %v5434 = vadd.f32 %v3898, %v4588
      %v5435 = vadd.f32 %v3899, %v4588
      %v5436 = vadd.f32 %v3900, %v4593
      %v5437 = vadd.f32 %v3901, %v4593
      %v5438 = vadd.f32 %v3902, %v4598
      %v5439 = vadd.f32 %v3903, %v4598
      %v5440 = vadd.f32 %v3904, %v4603
      %v5441 = vadd.f32 %v3905, %v4603
      %v5442 = vadd.f32 %v3906, %v4608
      %v5443 = vadd.f32 %v3907, %v4608
      %v5444 = vadd.f32 %v3908, %v4613
      %v5445 = vadd.f32 %v3909, %v4613
      %v5446 = vadd.f32 %v3910, %v4618
      %v5447 = vadd.f32 %v3911, %v4618
      %v5448 = vadd.f32 %v3912, %v4623
      %v5449 = vadd.f32 %v3913, %v4623
      %v5450 = vadd.f32 %v3914, %v4628
      %v5451 = vadd.f32 %v3915, %v4628
      %v5452 = vadd.f32 %v3916, %v4633
      %v5453 = vadd.f32 %v3917, %v4633
      %v5454 = vadd.f32 %v3918, %v4638
      %v5455 = vadd.f32 %v3919, %v4638
      %v5456 = vadd.f32 %v3920, %v4643
      %v5457 = vadd.f32 %v3921, %v4643
      %v5458 = vadd.f32 %v3922, %v4648
      %v5459 = vadd.f32 %v3923, %v4648
      %v5460 = vadd.f32 %v3924, %v4653
      %v5461 = vadd.f32 %v3925, %v4653
      %v5462 = vadd.f32 %v3926, %v4658
      %v5463 = vadd.f32 %v3927, %v4658
      %v5464 = vadd.f32 %v3928, %v4663
      %v5465 = vadd.f32 %v3929, %v4663
      %v5466 = vadd.f32 %v3930, %v4668
      %v5467 = vadd.f32 %v3931, %v4668
      %v5468 = vadd.f32 %v3932, %v4673
      %v5469 = vadd.f32 %v3933, %v4673
      %v5470 = vadd.f32 %v3934, %v4678
      %v5471 = vadd.f32 %v3935, %v4678
      %v5472 = vadd.f32 %v3936, %v4683
      %v5473 = vadd.f32 %v3937, %v4683
      %v5474 = vadd.f32 %v3938, %v4688
      %v5475 = vadd.f32 %v3939, %v4688
      %v5476 = vadd.f32 %v3940, %v4693
      %v5477 = vadd.f32 %v3941, %v4693
      %v5478 = vadd.f32 %v3942, %v4698
      %v5479 = vadd.f32 %v3943, %v4698
      %v5480 = vadd.f32 %v3944, %v4703
      %v5481 = vadd.f32 %v3945, %v4703
      %v5482 = vadd.f32 %v3946, %v4708
      %v5483 = vadd.f32 %v3947, %v4708
      %v5484 = vadd.f32 %v3948, %v4713
      %v5485 = vadd.f32 %v3949, %v4713
      %v5486 = vadd.f32 %v3950, %v4718
      %v5487 = vadd.f32 %v3951, %v4718
      %v5488 = vadd.f32 %v3952, %v4723
      %v5489 = vadd.f32 %v3953, %v4723
      %v5490 = vadd.f32 %v3954, %v4728
      %v5491 = vadd.f32 %v3955, %v4728
      %v5492 = vadd.f32 %v3956, %v4733
      %v5493 = vadd.f32 %v3957, %v4733
      %v5494 = vadd.f32 %v3958, %v4738
      %v5495 = vadd.f32 %v3959, %v4738
      %v5496 = vadd.f32 %v3960, %v4743
      %v5497 = vadd.f32 %v3961, %v4743
      %v5498 = vadd.f32 %v3962, %v4748
      %v5499 = vadd.f32 %v3963, %v4748
      %v5500 = vadd.f32 %v3964, %v4753
      %v5501 = vadd.f32 %v3965, %v4753
      %v5502 = vadd.f32 %v3966, %v4758
      %v5503 = vadd.f32 %v3967, %v4758
      %v5504 = vadd.f32 %v3968, %v4763
      %v5505 = vadd.f32 %v3969, %v4763
      %v5506 = vadd.f32 %v3970, %v4768
      %v5507 = vadd.f32 %v3971, %v4768
      %v5508 = vadd.f32 %v3972, %v4773
      %v5509 = vadd.f32 %v3973, %v4773
      %v5510 = vadd.f32 %v3974, %v4778
      %v5511 = vadd.f32 %v3975, %v4778
      %v5512 = vadd.f32 %v3976, %v4783
      %v5513 = vadd.f32 %v3977, %v4783
      %v5514 = vadd.f32 %v3978, %v4788
      %v5515 = vadd.f32 %v3979, %v4788
      %v5516 = vadd.f32 %v3980, %v4793
      %v5517 = vadd.f32 %v3981, %v4793
      %v5518 = vadd.f32 %v3982, %v4798
      %v5519 = vadd.f32 %v3983, %v4798
      %v5520 = vadd.f32 %v3984, %v4803
      %v5521 = vadd.f32 %v3985, %v4803
      %v5522 = vadd.f32 %v3986, %v4808
      %v5523 = vadd.f32 %v3987, %v4808
      %v5524 = vadd.f32 %v3988, %v4813
      %v5525 = vadd.f32 %v3989, %v4813
      %v5526 = vadd.f32 %v3990, %v4818
      %v5527 = vadd.f32 %v3991, %v4818
      %v5528 = vadd.f32 %v3992, %v4823
      %v5529 = vadd.f32 %v3993, %v4823
      %v5530 = vadd.f32 %v3994, %v4828
      %v5531 = vadd.f32 %v3995, %v4828
      %v5532 = vadd.f32 %v3996, %v4833
      %v5533 = vadd.f32 %v3997, %v4833
      %v5534 = vadd.f32 %v3998, %v4838
      %v5535 = vadd.f32 %v3999, %v4838
      %v5536 = vadd.f32 %v4000, %v4843
      %v5537 = vadd.f32 %v4001, %v4843
      %v5538 = vadd.f32 %v4002, %v4848
      %v5539 = vadd.f32 %v4003, %v4848
      %v5540 = vadd.f32 %v4004, %v4853
      %v5541 = vadd.f32 %v4005, %v4853
      %v5542 = vadd.f32 %v4006, %v4858
      %v5543 = vadd.f32 %v4007, %v4858
      %v5544 = vadd.f32 %v4008, %v4863
      %v5545 = vadd.f32 %v4009, %v4863
      %v5546 = vadd.f32 %v4010, %v4868
      %v5547 = vadd.f32 %v4011, %v4868
      %v5548 = vadd.f32 %v4012, %v4873
      %v5549 = vadd.f32 %v4013, %v4873
      %v5550 = vadd.f32 %v4014, %v4878
      %v5551 = vadd.f32 %v4015, %v4878
      %v5552 = vadd.f32 %v4016, %v4883
      %v5553 = vadd.f32 %v4017, %v4883
      %v5554 = vadd.f32 %v4018, %v4888
      %v5555 = vadd.f32 %v4019, %v4888
      %v5556 = vadd.f32 %v4020, %v4893
      %v5557 = vadd.f32 %v4021, %v4893
      %v5558 = vadd.f32 %v4022, %v4898
      %v5559 = vadd.f32 %v4023, %v4898
      %v5560 = vadd.f32 %v4024, %v4903
      %v5561 = vadd.f32 %v4025, %v4903
      %v5562 = vadd.f32 %v4026, %v4908
      %v5563 = vadd.f32 %v4027, %v4908
      %v5564 = vadd.f32 %v4028, %v4913
      %v5565 = vadd.f32 %v4029, %v4913
      %v5566 = vadd.f32 %v4030, %v4918
      %v5567 = vadd.f32 %v4031, %v4918
      %v5568 = vadd.f32 %v4032, %v4923
      %v5569 = vadd.f32 %v4033, %v4923
      %v5570 = vadd.f32 %v4034, %v4928
      %v5571 = vadd.f32 %v4035, %v4928
      %v5572 = vadd.f32 %v4036, %v4933
      %v5573 = vadd.f32 %v4037, %v4933
      %v5574 = vadd.f32 %v4038, %v4938
      %v5575 = vadd.f32 %v4039, %v4938
      %v5576 = vadd.f32 %v4040, %v4943
      %v5577 = vadd.f32 %v4041, %v4943
      %v5578 = vadd.f32 %v4042, %v4948
      %v5579 = vadd.f32 %v4043, %v4948
      %v5580 = vadd.f32 %v4044, %v4953
      %v5581 = vadd.f32 %v4045, %v4953
      %v5582 = vadd.f32 %v4046, %v4958
      %v5583 = vadd.f32 %v4047, %v4958
      %v5584 = vadd.f32 %v4048, %v4963
      %v5585 = vadd.f32 %v4049, %v4963
      %v5586 = vadd.f32 %v4050, %v4968
      %v5587 = vadd.f32 %v4051, %v4968
      %v5588 = vadd.f32 %v4052, %v4973
      %v5589 = vadd.f32 %v4053, %v4973
      %v5590 = vadd.f32 %v4054, %v4978
      %v5591 = vadd.f32 %v4055, %v4978
      %v5592 = vadd.f32 %v4056, %v4983
      %v5593 = vadd.f32 %v4057, %v4983
      %v5594 = vadd.f32 %v4058, %v4988
      %v5595 = vadd.f32 %v4059, %v4988
      %v5596 = vadd.f32 %v4060, %v4993
      %v5597 = vadd.f32 %v4061, %v4993
      %v5598 = vadd.f32 %v4062, %v4998
      %v5599 = vadd.f32 %v4063, %v4998
      %v5600 = vadd.f32 %v4064, %v5003
      %v5601 = vadd.f32 %v4065, %v5003
      %v5602 = vadd.f32 %v4066, %v5008
      %v5603 = vadd.f32 %v4067, %v5008
      %v5604 = vadd.f32 %v4068, %v5013
      %v5605 = vadd.f32 %v4069, %v5013
      %v5606 = vadd.f32 %v4070, %v5018
      %v5607 = vadd.f32 %v4071, %v5018
      %v5608 = vadd.f32 %v4072, %v5023
      %v5609 = vadd.f32 %v4073, %v5023
      %v5610 = vadd.f32 %v4074, %v5028
      %v5611 = vadd.f32 %v4075, %v5028
      %v5612 = vadd.f32 %v4076, %v5033
      %v5613 = vadd.f32 %v4077, %v5033
      %v5614 = vadd.f32 %v4078, %v5038
      %v5615 = vadd.f32 %v4079, %v5038
      %v5616 = vadd.f32 %v4080, %v5043
      %v5617 = vadd.f32 %v4081, %v5043
      %v5618 = vadd.f32 %v4082, %v5048
      %v5619 = vadd.f32 %v4083, %v5048
      %v5620 = vadd.f32 %v4084, %v5053
      %v5621 = vadd.f32 %v4085, %v5053
      %v5622 = vadd.f32 %v4086, %v5058
      %v5623 = vadd.f32 %v4087, %v5058
      %v5624 = vadd.f32 %v4088, %v5063
      %v5625 = vadd.f32 %v4089, %v5063
      %v5626 = vadd.f32 %v4090, %v5068
      %v5627 = vadd.f32 %v4091, %v5068
      %v5628 = vadd.f32 %v4092, %v5073
      %v5629 = vadd.f32 %v4093, %v5073
      %v5630 = vadd.f32 %v4094, %v5078
      %v5631 = vadd.f32 %v4095, %v5078
      %v5632 = vadd.f32 %v4096, %v5083
      %v5633 = vadd.f32 %v4097, %v5083
      %v5634 = vadd.f32 %v4098, %v5088
      %v5635 = vadd.f32 %v4099, %v5088
      %v5636 = vadd.f32 %v4100, %v5093
      %v5637 = vadd.f32 %v4101, %v5093
      %v5638 = vadd.f32 %v4102, %v5098
      %v5639 = vadd.f32 %v4103, %v5098
      %v5640 = vadd.f32 %v4104, %v5103
      %v5641 = vadd.f32 %v4105, %v5103
      %v5642 = vadd.f32 %v4106, %v5108
      %v5643 = vadd.f32 %v4107, %v5108
      %v5644 = vadd.f32 %v4108, %v5113
      %v5645 = vadd.f32 %v4109, %v5113
      %v5646 = vadd.f32 %v4110, %v5118
      %v5647 = vadd.f32 %v4111, %v5118
      %v5648 = vadd.f32 %v4112, %v5123
      %v5649 = vadd.f32 %v4113, %v5123
      %v5650 = vadd.f32 %v4114, %v5128
      %v5651 = vadd.f32 %v4115, %v5128
      %v5652 = vadd.f32 %v4116, %v5133
      %v5653 = vadd.f32 %v4117, %v5133
      %v5654 = vadd.f32 %v4118, %v5138
      %v5655 = vadd.f32 %v4119, %v5138
      %v5656 = vadd.f32 %v4120, %v5143
      %v5657 = vadd.f32 %v4121, %v5143
      %v5658 = vadd.f32 %v4122, %v5148
      %v5659 = vadd.f32 %v4123, %v5148
      %v5660 = vadd.f32 %v4124, %v5153
      %v5661 = vadd.f32 %v4125, %v5153
      %v5662 = vadd.f32 %v4126, %v5158
      %v5663 = vadd.f32 %v4127, %v5158
      %v5664 = vadd.f32 %v4128, %v5163
      %v5665 = vadd.f32 %v4129, %v5163
      %v5666 = vadd.f32 %v4130, %v5168
      %v5667 = vadd.f32 %v4131, %v5168
      %v5668 = vadd.f32 %v4132, %v5173
      %v5669 = vadd.f32 %v4133, %v5173
      %v5670 = vadd.f32 %v4134, %v5178
      %v5671 = vadd.f32 %v4135, %v5178
      %v5672 = vadd.f32 %v4136, %v5183
      %v5673 = vadd.f32 %v4137, %v5183
      %v5674 = vadd.f32 %v4138, %v5188
      %v5675 = vadd.f32 %v4139, %v5188
      %v5676 = vadd.f32 %v4140, %v5193
      %v5677 = vadd.f32 %v4141, %v5193
      %v5678 = vadd.f32 %v4142, %v5198
      %v5679 = vadd.f32 %v4143, %v5198
      %v5680 = vadd.f32 %v4144, %v5203
      %v5681 = vadd.f32 %v4145, %v5203
      %v5682 = vadd.f32 %v4146, %v5208
      %v5683 = vadd.f32 %v4147, %v5208
      %v5684 = vadd.f32 %v4148, %v5213
      %v5685 = vadd.f32 %v4149, %v5213
      %v5686 = vadd.f32 %v4150, %v5218
      %v5687 = vadd.f32 %v4151, %v5218
      %v5688 = vadd.f32 %v4152, %v5223
      %v5689 = vadd.f32 %v4153, %v5223
      %v5690 = vadd.f32 %v4154, %v5228
      %v5691 = vadd.f32 %v4155, %v5228
      %v5692 = vadd.f32 %v4156, %v5233
      %v5693 = vadd.f32 %v4157, %v5233
      %v5694 = vadd.f32 %v4158, %v5238
      %v5695 = vadd.f32 %v4159, %v5238
      %v5696 = vadd.f32 %v4160, %v5243
      %v5697 = vadd.f32 %v4161, %v5243
      %v5698 = vadd.f32 %v4162, %v5248
      %v5699 = vadd.f32 %v4163, %v5248
      %v5700 = vadd.f32 %v4164, %v5253
      %v5701 = vadd.f32 %v4165, %v5253
      %v5702 = vadd.f32 %v4166, %v5258
      %v5703 = vadd.f32 %v4167, %v5258
      %v5704 = vadd.f32 %v4168, %v5263
      %v5705 = vadd.f32 %v4169, %v5263
      %v5706 = vadd.f32 %v4170, %v5268
      %v5707 = vadd.f32 %v4171, %v5268
      %v5708 = vadd.f32 %v4172, %v5273
      %v5709 = vadd.f32 %v4173, %v5273
      %v5710 = vadd.f32 %v4174, %v5278
      %v5711 = vadd.f32 %v4175, %v5278
      %v5712 = vadd.f32 %v4176, %v5283
      %v5713 = vadd.f32 %v4177, %v5283
      %v5714 = vadd.f32 %v4178, %v5288
      %v5715 = vadd.f32 %v4179, %v5288
      %v5716 = vadd.f32 %v4180, %v5293
      %v5717 = vadd.f32 %v4181, %v5293
      %v5718 = vadd.f32 %v4182, %v5298
      %v5719 = vadd.f32 %v4183, %v5298
      %v5720 = vadd.f32 %v4184, %v5303
      %v5721 = vadd.f32 %v4185, %v5303
      %v5722 = vadd.f32 %v4186, %v5308
      %v5723 = vadd.f32 %v4187, %v5308
      %v5724 = vadd.f32 %v4188, %v5313
      %v5725 = vadd.f32 %v4189, %v5313
      %v5726 = vadd.f32 %v4190, %v5318
      %v5727 = vadd.f32 %v4191, %v5318
      %v5728 = vadd.f32 %v4192, %v5323
      %v5729 = vadd.f32 %v4193, %v5323
      %v5730 = vadd.f32 %v4194, %v5328
      %v5731 = vadd.f32 %v4195, %v5328
      %v5732 = vadd.f32 %v4196, %v5333
      %v5733 = vadd.f32 %v4197, %v5333
      %v5734 = vadd.f32 %v4198, %v5338
      %v5735 = vadd.f32 %v4199, %v5338
      %v5736 = vadd.f32 %v4200, %v5343
      %v5737 = vadd.f32 %v4201, %v5343
      %v5738 = vadd.f32 %v4202, %v5348
      %v5739 = vadd.f32 %v4203, %v5348
      %v5740 = vadd.f32 %v4204, %v5353
      %v5741 = vadd.f32 %v4205, %v5353
      %v5742 = vadd.f32 %v4206, %v5358
      %v5743 = vadd.f32 %v4207, %v5358
      %v5744 = vmax.f32 %v5360, 0.0
      %v5745 = vmax.f32 %v5361, 0.0
      %v5746 = vmax.f32 %v5362, 0.0
      %v5747 = vmax.f32 %v5363, 0.0
      %v5748 = vmax.f32 %v5364, 0.0
      %v5749 = vmax.f32 %v5365, 0.0
      %v5750 = vmax.f32 %v5366, 0.0
      %v5751 = vmax.f32 %v5367, 0.0
      %v5752 = vmax.f32 %v5368, 0.0
      %v5753 = vmax.f32 %v5369, 0.0
      %v5754 = vmax.f32 %v5370, 0.0
      %v5755 = vmax.f32 %v5371, 0.0
      %v5756 = vmax.f32 %v5372, 0.0
      %v5757 = vmax.f32 %v5373, 0.0
      %v5758 = vmax.f32 %v5374, 0.0
      %v5759 = vmax.f32 %v5375, 0.0
      %v5760 = vmax.f32 %v5376, 0.0
      %v5761 = vmax.f32 %v5377, 0.0
      %v5762 = vmax.f32 %v5378, 0.0
      %v5763 = vmax.f32 %v5379, 0.0
      %v5764 = vmax.f32 %v5380, 0.0
      %v5765 = vmax.f32 %v5381, 0.0
      %v5766 = vmax.f32 %v5382, 0.0
      %v5767 = vmax.f32 %v5383, 0.0
      %v5768 = vmax.f32 %v5384, 0.0
      %v5769 = vmax.f32 %v5385, 0.0
      %v5770 = vmax.f32 %v5386, 0.0
      %v5771 = vmax.f32 %v5387, 0.0
      %v5772 = vmax.f32 %v5388, 0.0
      %v5773 = vmax.f32 %v5389, 0.0
      %v5774 = vmax.f32 %v5390, 0.0
      %v5775 = vmax.f32 %v5391, 0.0
      %v5776 = vmax.f32 %v5392, 0.0
      %v5777 = vmax.f32 %v5393, 0.0
      %v5778 = vmax.f32 %v5394, 0.0
      %v5779 = vmax.f32 %v5395, 0.0
      %v5780 = vmax.f32 %v5396, 0.0
      %v5781 = vmax.f32 %v5397, 0.0
      %v5782 = vmax.f32 %v5398, 0.0
      %v5783 = vmax.f32 %v5399, 0.0
      %v5784 = vmax.f32 %v5400, 0.0
      %v5785 = vmax.f32 %v5401, 0.0
      %v5786 = vmax.f32 %v5402, 0.0
      %v5787 = vmax.f32 %v5403, 0.0
      %v5788 = vmax.f32 %v5404, 0.0
      %v5789 = vmax.f32 %v5405, 0.0
      %v5790 = vmax.f32 %v5406, 0.0
      %v5791 = vmax.f32 %v5407, 0.0
      %v5792 = vmax.f32 %v5408, 0.0
      %v5793 = vmax.f32 %v5409, 0.0
      %v5794 = vmax.f32 %v5410, 0.0
      %v5795 = vmax.f32 %v5411, 0.0
      %v5796 = vmax.f32 %v5412, 0.0
      %v5797 = vmax.f32 %v5413, 0.0
      %v5798 = vmax.f32 %v5414, 0.0
      %v5799 = vmax.f32 %v5415, 0.0
      %v5800 = vmax.f32 %v5416, 0.0
      %v5801 = vmax.f32 %v5417, 0.0
      %v5802 = vmax.f32 %v5418, 0.0
      %v5803 = vmax.f32 %v5419, 0.0
      %v5804 = vmax.f32 %v5420, 0.0
      %v5805 = vmax.f32 %v5421, 0.0
      %v5806 = vmax.f32 %v5422, 0.0
      %v5807 = vmax.f32 %v5423, 0.0
      %v5808 = vmax.f32 %v5424, 0.0
      %v5809 = vmax.f32 %v5425, 0.0
      %v5810 = vmax.f32 %v5426, 0.0
      %v5811 = vmax.f32 %v5427, 0.0
      %v5812 = vmax.f32 %v5428, 0.0
      %v5813 = vmax.f32 %v5429, 0.0
      %v5814 = vmax.f32 %v5430, 0.0
      %v5815 = vmax.f32 %v5431, 0.0
      %v5816 = vmax.f32 %v5432, 0.0
      %v5817 = vmax.f32 %v5433, 0.0
      %v5818 = vmax.f32 %v5434, 0.0
      %v5819 = vmax.f32 %v5435, 0.0
      %v5820 = vmax.f32 %v5436, 0.0
      %v5821 = vmax.f32 %v5437, 0.0
      %v5822 = vmax.f32 %v5438, 0.0
      %v5823 = vmax.f32 %v5439, 0.0
      %v5824 = vmax.f32 %v5440, 0.0
      %v5825 = vmax.f32 %v5441, 0.0
      %v5826 = vmax.f32 %v5442, 0.0
      %v5827 = vmax.f32 %v5443, 0.0
      %v5828 = vmax.f32 %v5444, 0.0
      %v5829 = vmax.f32 %v5445, 0.0
      %v5830 = vmax.f32 %v5446, 0.0
      %v5831 = vmax.f32 %v5447, 0.0
      %v5832 = vmax.f32 %v5448, 0.0
      %v5833 = vmax.f32 %v5449, 0.0
      %v5834 = vmax.f32 %v5450, 0.0
      %v5835 = vmax.f32 %v5451, 0.0
      %v5836 = vmax.f32 %v5452, 0.0
      %v5837 = vmax.f32 %v5453, 0.0
      %v5838 = vmax.f32 %v5454, 0.0
      %v5839 = vmax.f32 %v5455, 0.0
      %v5840 = vmax.f32 %v5456, 0.0
      %v5841 = vmax.f32 %v5457, 0.0
      %v5842 = vmax.f32 %v5458, 0.0
      %v5843 = vmax.f32 %v5459, 0.0
      %v5844 = vmax.f32 %v5460, 0.0
      %v5845 = vmax.f32 %v5461, 0.0
      %v5846 = vmax.f32 %v5462, 0.0
      %v5847 = vmax.f32 %v5463, 0.0
      %v5848 = vmax.f32 %v5464, 0.0
      %v5849 = vmax.f32 %v5465, 0.0
      %v5850 = vmax.f32 %v5466, 0.0
      %v5851 = vmax.f32 %v5467, 0.0
      %v5852 = vmax.f32 %v5468, 0.0
      %v5853 = vmax.f32 %v5469, 0.0
      %v5854 = vmax.f32 %v5470, 0.0
      %v5855 = vmax.f32 %v5471, 0.0
      %v5856 = vmax.f32 %v5472, 0.0
      %v5857 = vmax.f32 %v5473, 0.0
      %v5858 = vmax.f32 %v5474, 0.0
      %v5859 = vmax.f32 %v5475, 0.0
      %v5860 = vmax.f32 %v5476, 0.0
      %v5861 = vmax.f32 %v5477, 0.0
      %v5862 = vmax.f32 %v5478, 0.0
      %v5863 = vmax.f32 %v5479, 0.0
      %v5864 = vmax.f32 %v5480, 0.0
      %v5865 = vmax.f32 %v5481, 0.0
      %v5866 = vmax.f32 %v5482, 0.0
      %v5867 = vmax.f32 %v5483, 0.0
      %v5868 = vmax.f32 %v5484, 0.0
      %v5869 = vmax.f32 %v5485, 0.0
      %v5870 = vmax.f32 %v5486, 0.0
      %v5871 = vmax.f32 %v5487, 0.0
      %v5872 = vmax.f32 %v5488, 0.0
      %v5873 = vmax.f32 %v5489, 0.0
      %v5874 = vmax.f32 %v5490, 0.0
      %v5875 = vmax.f32 %v5491, 0.0
      %v5876 = vmax.f32 %v5492, 0.0
      %v5877 = vmax.f32 %v5493, 0.0
      %v5878 = vmax.f32 %v5494, 0.0
      %v5879 = vmax.f32 %v5495, 0.0
      %v5880 = vmax.f32 %v5496, 0.0
      %v5881 = vmax.f32 %v5497, 0.0
      %v5882 = vmax.f32 %v5498, 0.0
      %v5883 = vmax.f32 %v5499, 0.0
      %v5884 = vmax.f32 %v5500, 0.0
      %v5885 = vmax.f32 %v5501, 0.0
      %v5886 = vmax.f32 %v5502, 0.0
      %v5887 = vmax.f32 %v5503, 0.0
      %v5888 = vmax.f32 %v5504, 0.0
      %v5889 = vmax.f32 %v5505, 0.0
      %v5890 = vmax.f32 %v5506, 0.0
      %v5891 = vmax.f32 %v5507, 0.0
      %v5892 = vmax.f32 %v5508, 0.0
      %v5893 = vmax.f32 %v5509, 0.0
      %v5894 = vmax.f32 %v5510, 0.0
      %v5895 = vmax.f32 %v5511, 0.0
      %v5896 = vmax.f32 %v5512, 0.0
      %v5897 = vmax.f32 %v5513, 0.0
      %v5898 = vmax.f32 %v5514, 0.0
      %v5899 = vmax.f32 %v5515, 0.0
      %v5900 = vmax.f32 %v5516, 0.0
      %v5901 = vmax.f32 %v5517, 0.0
      %v5902 = vmax.f32 %v5518, 0.0
      %v5903 = vmax.f32 %v5519, 0.0
      %v5904 = vmax.f32 %v5520, 0.0
      %v5905 = vmax.f32 %v5521, 0.0
      %v5906 = vmax.f32 %v5522, 0.0
      %v5907 = vmax.f32 %v5523, 0.0
      %v5908 = vmax.f32 %v5524, 0.0
      %v5909 = vmax.f32 %v5525, 0.0
      %v5910 = vmax.f32 %v5526, 0.0
      %v5911 = vmax.f32 %v5527, 0.0
      %v5912 = vmax.f32 %v5528, 0.0
      %v5913 = vmax.f32 %v5529, 0.0
      %v5914 = vmax.f32 %v5530, 0.0
      %v5915 = vmax.f32 %v5531, 0.0
      %v5916 = vmax.f32 %v5532, 0.0
      %v5917 = vmax.f32 %v5533, 0.0
      %v5918 = vmax.f32 %v5534, 0.0
      %v5919 = vmax.f32 %v5535, 0.0
      %v5920 = vmax.f32 %v5536, 0.0
      %v5921 = vmax.f32 %v5537, 0.0
      %v5922 = vmax.f32 %v5538, 0.0
      %v5923 = vmax.f32 %v5539, 0.0
      %v5924 = vmax.f32 %v5540, 0.0
      %v5925 = vmax.f32 %v5541, 0.0
      %v5926 = vmax.f32 %v5542, 0.0
      %v5927 = vmax.f32 %v5543, 0.0
      %v5928 = vmax.f32 %v5544, 0.0
      %v5929 = vmax.f32 %v5545, 0.0
      %v5930 = vmax.f32 %v5546, 0.0
      %v5931 = vmax.f32 %v5547, 0.0
      %v5932 = vmax.f32 %v5548, 0.0
      %v5933 = vmax.f32 %v5549, 0.0
      %v5934 = vmax.f32 %v5550, 0.0
      %v5935 = vmax.f32 %v5551, 0.0
      %v5936 = vmax.f32 %v5552, 0.0
      %v5937 = vmax.f32 %v5553, 0.0
      %v5938 = vmax.f32 %v5554, 0.0
      %v5939 = vmax.f32 %v5555, 0.0
      %v5940 = vmax.f32 %v5556, 0.0
      %v5941 = vmax.f32 %v5557, 0.0
      %v5942 = vmax.f32 %v5558, 0.0
      %v5943 = vmax.f32 %v5559, 0.0
      %v5944 = vmax.f32 %v5560, 0.0
      %v5945 = vmax.f32 %v5561, 0.0
      %v5946 = vmax.f32 %v5562, 0.0
      %v5947 = vmax.f32 %v5563, 0.0
      %v5948 = vmax.f32 %v5564, 0.0
      %v5949 = vmax.f32 %v5565, 0.0
      %v5950 = vmax.f32 %v5566, 0.0
      %v5951 = vmax.f32 %v5567, 0.0
      %v5952 = vmax.f32 %v5568, 0.0
      %v5953 = vmax.f32 %v5569, 0.0
      %v5954 = vmax.f32 %v5570, 0.0
      %v5955 = vmax.f32 %v5571, 0.0
      %v5956 = vmax.f32 %v5572, 0.0
      %v5957 = vmax.f32 %v5573, 0.0
      %v5958 = vmax.f32 %v5574, 0.0
      %v5959 = vmax.f32 %v5575, 0.0
      %v5960 = vmax.f32 %v5576, 0.0
      %v5961 = vmax.f32 %v5577, 0.0
      %v5962 = vmax.f32 %v5578, 0.0
      %v5963 = vmax.f32 %v5579, 0.0
      %v5964 = vmax.f32 %v5580, 0.0
      %v5965 = vmax.f32 %v5581, 0.0
      %v5966 = vmax.f32 %v5582, 0.0
      %v5967 = vmax.f32 %v5583, 0.0
      %v5968 = vmax.f32 %v5584, 0.0
      %v5969 = vmax.f32 %v5585, 0.0
      %v5970 = vmax.f32 %v5586, 0.0
      %v5971 = vmax.f32 %v5587, 0.0
      %v5972 = vmax.f32 %v5588, 0.0
      %v5973 = vmax.f32 %v5589, 0.0
      %v5974 = vmax.f32 %v5590, 0.0
      %v5975 = vmax.f32 %v5591, 0.0
      %v5976 = vmax.f32 %v5592, 0.0
      %v5977 = vmax.f32 %v5593, 0.0
      %v5978 = vmax.f32 %v5594, 0.0
      %v5979 = vmax.f32 %v5595, 0.0
      %v5980 = vmax.f32 %v5596, 0.0
      %v5981 = vmax.f32 %v5597, 0.0
      %v5982 = vmax.f32 %v5598, 0.0
      %v5983 = vmax.f32 %v5599, 0.0
      %v5984 = vmax.f32 %v5600, 0.0
      %v5985 = vmax.f32 %v5601, 0.0
      %v5986 = vmax.f32 %v5602, 0.0
      %v5987 = vmax.f32 %v5603, 0.0
      %v5988 = vmax.f32 %v5604, 0.0
      %v5989 = vmax.f32 %v5605, 0.0
      %v5990 = vmax.f32 %v5606, 0.0
      %v5991 = vmax.f32 %v5607, 0.0
      %v5992 = vmax.f32 %v5608, 0.0
      %v5993 = vmax.f32 %v5609, 0.0
      %v5994 = vmax.f32 %v5610, 0.0
      %v5995 = vmax.f32 %v5611, 0.0
      %v5996 = vmax.f32 %v5612, 0.0
      %v5997 = vmax.f32 %v5613, 0.0
      %v5998 = vmax.f32 %v5614, 0.0
      %v5999 = vmax.f32 %v5615, 0.0
      %v6000 = vmax.f32 %v5616, 0.0
      %v6001 = vmax.f32 %v5617, 0.0
      %v6002 = vmax.f32 %v5618, 0.0
      %v6003 = vmax.f32 %v5619, 0.0
      %v6004 = vmax.f32 %v5620, 0.0
      %v6005 = vmax.f32 %v5621, 0.0
      %v6006 = vmax.f32 %v5622, 0.0
      %v6007 = vmax.f32 %v5623, 0.0
      %v6008 = vmax.f32 %v5624, 0.0
      %v6009 = vmax.f32 %v5625, 0.0
      %v6010 = vmax.f32 %v5626, 0.0
      %v6011 = vmax.f32 %v5627, 0.0
      %v6012 = vmax.f32 %v5628, 0.0
      %v6013 = vmax.f32 %v5629, 0.0
      %v6014 = vmax.f32 %v5630, 0.0
      %v6015 = vmax.f32 %v5631, 0.0
      %v6016 = vmax.f32 %v5632, 0.0
      %v6017 = vmax.f32 %v5633, 0.0
      %v6018 = vmax.f32 %v5634, 0.0
      %v6019 = vmax.f32 %v5635, 0.0
      %v6020 = vmax.f32 %v5636, 0.0
      %v6021 = vmax.f32 %v5637, 0.0
      %v6022 = vmax.f32 %v5638, 0.0
      %v6023 = vmax.f32 %v5639, 0.0
      %v6024 = vmax.f32 %v5640, 0.0
      %v6025 = vmax.f32 %v5641, 0.0
      %v6026 = vmax.f32 %v5642, 0.0
      %v6027 = vmax.f32 %v5643, 0.0
      %v6028 = vmax.f32 %v5644, 0.0
      %v6029 = vmax.f32 %v5645, 0.0
      %v6030 = vmax.f32 %v5646, 0.0
      %v6031 = vmax.f32 %v5647, 0.0
      %v6032 = vmax.f32 %v5648, 0.0
      %v6033 = vmax.f32 %v5649, 0.0
      %v6034 = vmax.f32 %v5650, 0.0
      %v6035 = vmax.f32 %v5651, 0.0
      %v6036 = vmax.f32 %v5652, 0.0
      %v6037 = vmax.f32 %v5653, 0.0
      %v6038 = vmax.f32 %v5654, 0.0
      %v6039 = vmax.f32 %v5655, 0.0
      %v6040 = vmax.f32 %v5656, 0.0
      %v6041 = vmax.f32 %v5657, 0.0
      %v6042 = vmax.f32 %v5658, 0.0
      %v6043 = vmax.f32 %v5659, 0.0
      %v6044 = vmax.f32 %v5660, 0.0
      %v6045 = vmax.f32 %v5661, 0.0
      %v6046 = vmax.f32 %v5662, 0.0
      %v6047 = vmax.f32 %v5663, 0.0
      %v6048 = vmax.f32 %v5664, 0.0
      %v6049 = vmax.f32 %v5665, 0.0
      %v6050 = vmax.f32 %v5666, 0.0
      %v6051 = vmax.f32 %v5667, 0.0
      %v6052 = vmax.f32 %v5668, 0.0
      %v6053 = vmax.f32 %v5669, 0.0
      %v6054 = vmax.f32 %v5670, 0.0
      %v6055 = vmax.f32 %v5671, 0.0
      %v6056 = vmax.f32 %v5672, 0.0
      %v6057 = vmax.f32 %v5673, 0.0
      %v6058 = vmax.f32 %v5674, 0.0
      %v6059 = vmax.f32 %v5675, 0.0
      %v6060 = vmax.f32 %v5676, 0.0
      %v6061 = vmax.f32 %v5677, 0.0
      %v6062 = vmax.f32 %v5678, 0.0
      %v6063 = vmax.f32 %v5679, 0.0
      %v6064 = vmax.f32 %v5680, 0.0
      %v6065 = vmax.f32 %v5681, 0.0
      %v6066 = vmax.f32 %v5682, 0.0
      %v6067 = vmax.f32 %v5683, 0.0
      %v6068 = vmax.f32 %v5684, 0.0
      %v6069 = vmax.f32 %v5685, 0.0
      %v6070 = vmax.f32 %v5686, 0.0
      %v6071 = vmax.f32 %v5687, 0.0
      %v6072 = vmax.f32 %v5688, 0.0
      %v6073 = vmax.f32 %v5689, 0.0
      %v6074 = vmax.f32 %v5690, 0.0
      %v6075 = vmax.f32 %v5691, 0.0
      %v6076 = vmax.f32 %v5692, 0.0
      %v6077 = vmax.f32 %v5693, 0.0
      %v6078 = vmax.f32 %v5694, 0.0
      %v6079 = vmax.f32 %v5695, 0.0
      %v6080 = vmax.f32 %v5696, 0.0
      %v6081 = vmax.f32 %v5697, 0.0
      %v6082 = vmax.f32 %v5698, 0.0
      %v6083 = vmax.f32 %v5699, 0.0
      %v6084 = vmax.f32 %v5700, 0.0
      %v6085 = vmax.f32 %v5701, 0.0
      %v6086 = vmax.f32 %v5702, 0.0
      %v6087 = vmax.f32 %v5703, 0.0
      %v6088 = vmax.f32 %v5704, 0.0
      %v6089 = vmax.f32 %v5705, 0.0
      %v6090 = vmax.f32 %v5706, 0.0
      %v6091 = vmax.f32 %v5707, 0.0
      %v6092 = vmax.f32 %v5708, 0.0
      %v6093 = vmax.f32 %v5709, 0.0
      %v6094 = vmax.f32 %v5710, 0.0
      %v6095 = vmax.f32 %v5711, 0.0
      %v6096 = vmax.f32 %v5712, 0.0
      %v6097 = vmax.f32 %v5713, 0.0
      %v6098 = vmax.f32 %v5714, 0.0
      %v6099 = vmax.f32 %v5715, 0.0
      %v6100 = vmax.f32 %v5716, 0.0
      %v6101 = vmax.f32 %v5717, 0.0
      %v6102 = vmax.f32 %v5718, 0.0
      %v6103 = vmax.f32 %v5719, 0.0
      %v6104 = vmax.f32 %v5720, 0.0
      %v6105 = vmax.f32 %v5721, 0.0
      %v6106 = vmax.f32 %v5722, 0.0
      %v6107 = vmax.f32 %v5723, 0.0
      %v6108 = vmax.f32 %v5724, 0.0
      %v6109 = vmax.f32 %v5725, 0.0
      %v6110 = vmax.f32 %v5726, 0.0
      %v6111 = vmax.f32 %v5727, 0.0
      %v6112 = vmax.f32 %v5728, 0.0
      %v6113 = vmax.f32 %v5729, 0.0
      %v6114 = vmax.f32 %v5730, 0.0
      %v6115 = vmax.f32 %v5731, 0.0
      %v6116 = vmax.f32 %v5732, 0.0
      %v6117 = vmax.f32 %v5733, 0.0
      %v6118 = vmax.f32 %v5734, 0.0
      %v6119 = vmax.f32 %v5735, 0.0
      %v6120 = vmax.f32 %v5736, 0.0
      %v6121 = vmax.f32 %v5737, 0.0
      %v6122 = vmax.f32 %v5738, 0.0
      %v6123 = vmax.f32 %v5739, 0.0
      %v6124 = vmax.f32 %v5740, 0.0
      %v6125 = vmax.f32 %v5741, 0.0
      %v6126 = vmax.f32 %v5742, 0.0
      %v6127 = vmax.f32 %v5743, 0.0
      %v6128 = vld [vmem:[%s6] sm:$0xff]
      %v6130 = vcombine.high %v6128, %v6128
      %v6132 = vunpack.c.l.s4 1983009808
      %v6133 = vunpack.c.0.s8 %v6132
      %v6134 = vlaneseq
      %v6135 = vshrl.u32 %v6134, 7
      %v6136 = vsub.s32 %v6133, %v6135
      %v6137 = vrot.slane %v6128, %v6136
      %v6139 = vunpack.c.l.s4 1983009808
      %v6140 = vunpack.c.0.s8 %v6139
      %v6141 = vlaneseq
      %v6142 = vshrl.u32 %v6141, 7
      %v6143 = vsub.s32 %v6140, %v6142
      %v6144 = vrot.slane %v6130, %v6143
      %v6145 = vcombine.high %v6137, %v6137
      %v6146 = vcombine.high %v6144, %v6144
      %6151 = vmatprep.subr.mxu0 %v3641
      %6152 = vmatpush1.msra.mxu0 %v3640
      %6153 = vmatprep.subr.mxu0 %v3643
      %6154 = vmatpush1.msra.mxu0 %v3642
      %6155 = vmatprep.subr.mxu0 %v3645
      %6156 = vmatpush1.msra.mxu0 %v3644
      %6157 = vmatprep.subr.mxu0 %v3647
      %6158 = vmatpush1.msra.mxu0 %v3646
      %6159 = vmatprep.subr.mxu0 %v3649
      %6160 = vmatpush1.msra.mxu0 %v3648
      %6161 = vmatprep.subr.mxu0 %v3651
      %6162 = vmatpush1.msra.mxu0 %v3650
      %6163 = vmatprep.subr.mxu0 %v3653
      %6164 = vmatpush1.msra.mxu0 %v3652
      %6165 = vmatprep.subr.mxu0 %v3655
      %6166 = vmatpush1.msra.mxu0 %v3654
      %6167 = vmatprep.subr.mxu0 %v3657
      %6168 = vmatpush1.msra.mxu0 %v3656
      %6169 = vmatprep.subr.mxu0 %v3659
      %6170 = vmatpush1.msra.mxu0 %v3658
      %6171 = vmatprep.subr.mxu0 %v3661
      %6172 = vmatpush1.msra.mxu0 %v3660
      %6173 = vmatprep.subr.mxu0 %v3663
      %6174 = vmatpush1.msra.mxu0 %v3662
      %6175 = vmatprep.subr.mxu0 %v3665
      %6176 = vmatpush1.msra.mxu0 %v3664
      %6177 = vmatprep.subr.mxu0 %v3667
      %6178 = vmatpush1.msra.mxu0 %v3666
      %6179 = vmatprep.subr.mxu0 %v3669
      %6180 = vmatpush1.msra.mxu0 %v3668
      %6181 = vmatprep.subr.mxu0 %v3671
      %6182 = vmatpush1.msra.mxu0 %v3670
      %6183 = vmatprep.subr.mxu0 %v3673
      %6184 = vmatpush1.msra.mxu0 %v3672
      %6185 = vmatprep.subr.mxu0 %v3675
      %6186 = vmatpush1.msra.mxu0 %v3674
      %6187 = vmatprep.subr.mxu0 %v3677
      %6188 = vmatpush1.msra.mxu0 %v3676
      %6189 = vmatprep.subr.mxu0 %v3679
      %6190 = vmatpush1.msra.mxu0 %v3678
      %6191 = vmatprep.subr.mxu0 %v3681
      %6192 = vmatpush1.msra.mxu0 %v3680
      %6193 = vmatprep.subr.mxu0 %v3683
      %6194 = vmatpush1.msra.mxu0 %v3682
      %6195 = vmatprep.subr.mxu0 %v3685
      %6196 = vmatpush1.msra.mxu0 %v3684
      %6197 = vmatprep.subr.mxu0 %v3687
      %6198 = vmatpush1.msra.mxu0 %v3686
      %6199 = vmatprep.subr.mxu0 %v3689
      %6200 = vmatpush1.msra.mxu0 %v3688
      %6201 = vmatprep.subr.mxu0 %v3691
      %6202 = vmatpush1.msra.mxu0 %v3690
      %6203 = vmatprep.subr.mxu0 %v3693
      %6204 = vmatpush1.msra.mxu0 %v3692
      %6205 = vmatprep.subr.mxu0 %v3695
      %6206 = vmatpush1.msra.mxu0 %v3694
      %6207 = vmatprep.subr.mxu0 %v3697
      %6208 = vmatpush1.msra.mxu0 %v3696
      %6209 = vmatprep.subr.mxu0 %v3699
      %6210 = vmatpush1.msra.mxu0 %v3698
      %6211 = vmatprep.subr.mxu0 %v3701
      %6212 = vmatpush1.msra.mxu0 %v3700
      %6213 = vmatprep.subr.mxu0 %v3703
      %6214 = vmatpush1.msra.mxu0 %v3702
      %6215 = vmatprep.mubr.f32.mxu0 %v6145
      %6216 = vmatmul.mubr.f32.gmra.mrb[0].mxu0 %v6137
      %v6217 = vpop.f32.mrb[0].mxu0
      %v6218 = vadd.f32 0.0, %v6217
      %v6219 = vpop.f32.mrb[0].mxu0
      %v6220 = vadd.f32 0.0, %v6219
      %6221 = vdwg.mxu0
      %6222 = vmatprep.subr.mxu0 %v3705
      %6223 = vmatpush1.msra.mxu0 %v3704
      %6224 = vmatprep.subr.mxu0 %v3707
      %6225 = vmatpush1.msra.mxu0 %v3706
      %6226 = vmatprep.subr.mxu0 %v3709
      %6227 = vmatpush1.msra.mxu0 %v3708
      %6228 = vmatprep.subr.mxu0 %v3711
      %6229 = vmatpush1.msra.mxu0 %v3710
      %6230 = vmatprep.subr.mxu0 %v3713
      %6231 = vmatpush1.msra.mxu0 %v3712
      %6232 = vmatprep.subr.mxu0 %v3715
      %6233 = vmatpush1.msra.mxu0 %v3714
      %6234 = vmatprep.subr.mxu0 %v3717
      %6235 = vmatpush1.msra.mxu0 %v3716
      %6236 = vmatprep.subr.mxu0 %v3719
      %6237 = vmatpush1.msra.mxu0 %v3718
      %6238 = vmatprep.subr.mxu0 %v3721
      %6239 = vmatpush1.msra.mxu0 %v3720
      %6240 = vmatprep.subr.mxu0 %v3723
      %6241 = vmatpush1.msra.mxu0 %v3722
      %6242 = vmatprep.subr.mxu0 %v3725
      %6243 = vmatpush1.msra.mxu0 %v3724
      %6244 = vmatprep.subr.mxu0 %v3727
      %6245 = vmatpush1.msra.mxu0 %v3726
      %6246 = vmatprep.subr.mxu0 %v3729
      %6247 = vmatpush1.msra.mxu0 %v3728
      %6248 = vmatprep.subr.mxu0 %v3731
      %6249 = vmatpush1.msra.mxu0 %v3730
      %6250 = vmatprep.subr.mxu0 %v3733
      %6251 = vmatpush1.msra.mxu0 %v3732
      %6252 = vmatprep.subr.mxu0 %v3735
      %6253 = vmatpush1.msra.mxu0 %v3734
      %6254 = vmatprep.subr.mxu0 %v3737
      %6255 = vmatpush1.msra.mxu0 %v3736
      %6256 = vmatprep.subr.mxu0 %v3739
      %6257 = vmatpush1.msra.mxu0 %v3738
      %6258 = vmatprep.subr.mxu0 %v3741
      %6259 = vmatpush1.msra.mxu0 %v3740
      %6260 = vmatprep.subr.mxu0 %v3743
      %6261 = vmatpush1.msra.mxu0 %v3742
      %6262 = vmatprep.subr.mxu0 %v3745
      %6263 = vmatpush1.msra.mxu0 %v3744
      %6264 = vmatprep.subr.mxu0 %v3747
      %6265 = vmatpush1.msra.mxu0 %v3746
      %6266 = vmatprep.subr.mxu0 %v3749
      %6267 = vmatpush1.msra.mxu0 %v3748
      %6268 = vmatprep.subr.mxu0 %v3751
      %6269 = vmatpush1.msra.mxu0 %v3750
      %6270 = vmatprep.subr.mxu0 %v3753
      %6271 = vmatpush1.msra.mxu0 %v3752
      %6272 = vmatprep.subr.mxu0 %v3755
      %6273 = vmatpush1.msra.mxu0 %v3754
      %6274 = vmatprep.subr.mxu0 %v3757
      %6275 = vmatpush1.msra.mxu0 %v3756
      %6276 = vmatprep.subr.mxu0 %v3759
      %6277 = vmatpush1.msra.mxu0 %v3758
      %6278 = vmatprep.subr.mxu0 %v3761
      %6279 = vmatpush1.msra.mxu0 %v3760
      %6280 = vmatprep.subr.mxu0 %v3763
      %6281 = vmatpush1.msra.mxu0 %v3762
      %6282 = vmatprep.subr.mxu0 %v3765
      %6283 = vmatpush1.msra.mxu0 %v3764
      %6284 = vmatprep.subr.mxu0 %v3767
      %6285 = vmatpush1.msra.mxu0 %v3766
      %6286 = vmatprep.mubr.f32.mxu0 %v6146
      %6287 = vmatmul.mubr.f32.gmra.mrb[0].mxu0 %v6144
      %v6288 = vpop.f32.mrb[0].mxu0
      %v6289 = vadd.f32 %v6218, %v6288
      %v6290 = vpop.f32.mrb[0].mxu0
      %v6291 = vadd.f32 %v6220, %v6290
      %6292 = vdwg.mxu0
      %v6293 = vld [vmem:[%s7] sm:$0x3f]
      %v6294 = vld [vmem:[%s7 + $0x8] sm:$0x3f]
      %v6295 = vld [vmem:[%s7 + $0x10] sm:$0x3f]
      %v6296 = vld [vmem:[%s7 + $0x18] sm:$0x3f]
      %v6297 = vld [vmem:[%s7 + $0x20] sm:$0x3f]
      %v6298 = vld [vmem:[%s7 + $0x28] sm:$0x3f]
      %v6299 = vld [vmem:[%s7 + $0x30] sm:$0x3f]
      %v6300 = vld [vmem:[%s7 + $0x38] sm:$0x3f]
      %v6301 = vld [vmem:[%s7 + $0x40] sm:$0x3f]
      %v6302 = vld [vmem:[%s7 + $0x48] sm:$0x3f]
      %v6303 = vld [vmem:[%s7 + $0x50] sm:$0x3f]
      %v6304 = vld [vmem:[%s7 + $0x58] sm:$0x3f]
      %6305 = vmatprep.subr.mxu0 %v5745
      %6306 = vmatpush1.msra.mxu0 %v5744
      %6307 = vmatprep.subr.mxu0 %v5747
      %6308 = vmatpush1.msra.mxu0 %v5746
      %6309 = vmatprep.subr.mxu0 %v5749
      %6310 = vmatpush1.msra.mxu0 %v5748
      %6311 = vmatprep.subr.mxu0 %v5751
      %6312 = vmatpush1.msra.mxu0 %v5750
      %6313 = vmatprep.subr.mxu0 %v5753
      %6314 = vmatpush1.msra.mxu0 %v5752
      %6315 = vmatprep.subr.mxu0 %v5755
      %6316 = vmatpush1.msra.mxu0 %v5754
      %6317 = vmatprep.subr.mxu0 %v5757
      %6318 = vmatpush1.msra.mxu0 %v5756
      %6319 = vmatprep.subr.mxu0 %v5759
      %6320 = vmatpush1.msra.mxu0 %v5758
      %6321 = vmatprep.subr.mxu0 %v5761
      %6322 = vmatpush1.msra.mxu0 %v5760
      %6323 = vmatprep.subr.mxu0 %v5763
      %6324 = vmatpush1.msra.mxu0 %v5762
      %6325 = vmatprep.subr.mxu0 %v5765
      %6326 = vmatpush1.msra.mxu0 %v5764
      %6327 = vmatprep.subr.mxu0 %v5767
      %6328 = vmatpush1.msra.mxu0 %v5766
      %6329 = vmatprep.subr.mxu0 %v5769
      %6330 = vmatpush1.msra.mxu0 %v5768
      %6331 = vmatprep.subr.mxu0 %v5771
      %6332 = vmatpush1.msra.mxu0 %v5770
      %6333 = vmatprep.subr.mxu0 %v5773
      %6334 = vmatpush1.msra.mxu0 %v5772
      %6335 = vmatprep.subr.mxu0 %v5775
      %6336 = vmatpush1.msra.mxu0 %v5774
      %6337 = vmatprep.subr.mxu0 %v5777
      %6338 = vmatpush1.msra.mxu0 %v5776
      %6339 = vmatprep.subr.mxu0 %v5779
      %6340 = vmatpush1.msra.mxu0 %v5778
      %6341 = vmatprep.subr.mxu0 %v5781
      %6342 = vmatpush1.msra.mxu0 %v5780
      %6343 = vmatprep.subr.mxu0 %v5783
      %6344 = vmatpush1.msra.mxu0 %v5782
      %6345 = vmatprep.subr.mxu0 %v5785
      %6346 = vmatpush1.msra.mxu0 %v5784
      %6347 = vmatprep.subr.mxu0 %v5787
      %6348 = vmatpush1.msra.mxu0 %v5786
      %6349 = vmatprep.subr.mxu0 %v5789
      %6350 = vmatpush1.msra.mxu0 %v5788
      %6351 = vmatprep.subr.mxu0 %v5791
      %6352 = vmatpush1.msra.mxu0 %v5790
      %6353 = vmatprep.subr.mxu0 %v5793
      %6354 = vmatpush1.msra.mxu0 %v5792
      %6355 = vmatprep.subr.mxu0 %v5795
      %6356 = vmatpush1.msra.mxu0 %v5794
      %6357 = vmatprep.subr.mxu0 %v5797
      %6358 = vmatpush1.msra.mxu0 %v5796
      %6359 = vmatprep.subr.mxu0 %v5799
      %6360 = vmatpush1.msra.mxu0 %v5798
      %6361 = vmatprep.subr.mxu0 %v5801
      %6362 = vmatpush1.msra.mxu0 %v5800
      %6363 = vmatprep.subr.mxu0 %v5803
      %6364 = vmatpush1.msra.mxu0 %v5802
      %6365 = vmatprep.subr.mxu0 %v5805
      %6366 = vmatpush1.msra.mxu0 %v5804
      %6367 = vmatprep.subr.mxu0 %v5807
      %6368 = vmatpush1.msra.mxu0 %v5806
      %6369 = vmatprep.mubr.f32.mxu0 %v6294
      %6370 = vmatmul.mubr.f32.gmra.mrb[0].mxu0 %v6293
      %v6371 = vpop.f32.mrb[0].mxu0
      %v6372 = vadd.f32 0.0, %v6371
      %v6373 = vpop.f32.mrb[0].mxu0
      %v6374 = vadd.f32 0.0, %v6373
      %6375 = vdwg.mxu0
      %6376 = vmatprep.subr.mxu0 %v5809
      %6377 = vmatpush1.msra.mxu0 %v5808
      %6378 = vmatprep.subr.mxu0 %v5811
      %6379 = vmatpush1.msra.mxu0 %v5810
      %6380 = vmatprep.subr.mxu0 %v5813
      %6381 = vmatpush1.msra.mxu0 %v5812
      %6382 = vmatprep.subr.mxu0 %v5815
      %6383 = vmatpush1.msra.mxu0 %v5814
      %6384 = vmatprep.subr.mxu0 %v5817
      %6385 = vmatpush1.msra.mxu0 %v5816
      %6386 = vmatprep.subr.mxu0 %v5819
      %6387 = vmatpush1.msra.mxu0 %v5818
      %6388 = vmatprep.subr.mxu0 %v5821
      %6389 = vmatpush1.msra.mxu0 %v5820
      %6390 = vmatprep.subr.mxu0 %v5823
      %6391 = vmatpush1.msra.mxu0 %v5822
      %6392 = vmatprep.subr.mxu0 %v5825
      %6393 = vmatpush1.msra.mxu0 %v5824
      %6394 = vmatprep.subr.mxu0 %v5827
      %6395 = vmatpush1.msra.mxu0 %v5826
      %6396 = vmatprep.subr.mxu0 %v5829
      %6397 = vmatpush1.msra.mxu0 %v5828
      %6398 = vmatprep.subr.mxu0 %v5831
      %6399 = vmatpush1.msra.mxu0 %v5830
      %6400 = vmatprep.subr.mxu0 %v5833
      %6401 = vmatpush1.msra.mxu0 %v5832
      %6402 = vmatprep.subr.mxu0 %v5835
      %6403 = vmatpush1.msra.mxu0 %v5834
      %6404 = vmatprep.subr.mxu0 %v5837
      %6405 = vmatpush1.msra.mxu0 %v5836
      %6406 = vmatprep.subr.mxu0 %v5839
      %6407 = vmatpush1.msra.mxu0 %v5838
      %6408 = vmatprep.subr.mxu0 %v5841
      %6409 = vmatpush1.msra.mxu0 %v5840
      %6410 = vmatprep.subr.mxu0 %v5843
      %6411 = vmatpush1.msra.mxu0 %v5842
      %6412 = vmatprep.subr.mxu0 %v5845
      %6413 = vmatpush1.msra.mxu0 %v5844
      %6414 = vmatprep.subr.mxu0 %v5847
      %6415 = vmatpush1.msra.mxu0 %v5846
      %6416 = vmatprep.subr.mxu0 %v5849
      %6417 = vmatpush1.msra.mxu0 %v5848
      %6418 = vmatprep.subr.mxu0 %v5851
      %6419 = vmatpush1.msra.mxu0 %v5850
      %6420 = vmatprep.subr.mxu0 %v5853
      %6421 = vmatpush1.msra.mxu0 %v5852
      %6422 = vmatprep.subr.mxu0 %v5855
      %6423 = vmatpush1.msra.mxu0 %v5854
      %6424 = vmatprep.subr.mxu0 %v5857
      %6425 = vmatpush1.msra.mxu0 %v5856
      %6426 = vmatprep.subr.mxu0 %v5859
      %6427 = vmatpush1.msra.mxu0 %v5858
      %6428 = vmatprep.subr.mxu0 %v5861
      %6429 = vmatpush1.msra.mxu0 %v5860
      %6430 = vmatprep.subr.mxu0 %v5863
      %6431 = vmatpush1.msra.mxu0 %v5862
      %6432 = vmatprep.subr.mxu0 %v5865
      %6433 = vmatpush1.msra.mxu0 %v5864
      %6434 = vmatprep.subr.mxu0 %v5867
      %6435 = vmatpush1.msra.mxu0 %v5866
      %6436 = vmatprep.subr.mxu0 %v5869
      %6437 = vmatpush1.msra.mxu0 %v5868
      %6438 = vmatprep.subr.mxu0 %v5871
      %6439 = vmatpush1.msra.mxu0 %v5870
      %6440 = vmatprep.mubr.f32.mxu0 %v6296
      %6441 = vmatmul.mubr.f32.gmra.mrb[0].mxu0 %v6295
      %v6442 = vpop.f32.mrb[0].mxu0
      %v6443 = vadd.f32 %v6372, %v6442
      %v6444 = vpop.f32.mrb[0].mxu0
      %v6445 = vadd.f32 %v6374, %v6444
      %6446 = vdwg.mxu0
      %6447 = vmatprep.subr.mxu0 %v5873
      %6448 = vmatpush1.msra.mxu0 %v5872
      %6449 = vmatprep.subr.mxu0 %v5875
      %6450 = vmatpush1.msra.mxu0 %v5874
      %6451 = vmatprep.subr.mxu0 %v5877
      %6452 = vmatpush1.msra.mxu0 %v5876
      %6453 = vmatprep.subr.mxu0 %v5879
      %6454 = vmatpush1.msra.mxu0 %v5878
      %6455 = vmatprep.subr.mxu0 %v5881
      %6456 = vmatpush1.msra.mxu0 %v5880
      %6457 = vmatprep.subr.mxu0 %v5883
      %6458 = vmatpush1.msra.mxu0 %v5882
      %6459 = vmatprep.subr.mxu0 %v5885
      %6460 = vmatpush1.msra.mxu0 %v5884
      %6461 = vmatprep.subr.mxu0 %v5887
      %6462 = vmatpush1.msra.mxu0 %v5886
      %6463 = vmatprep.subr.mxu0 %v5889
      %6464 = vmatpush1.msra.mxu0 %v5888
      %6465 = vmatprep.subr.mxu0 %v5891
      %6466 = vmatpush1.msra.mxu0 %v5890
      %6467 = vmatprep.subr.mxu0 %v5893
      %6468 = vmatpush1.msra.mxu0 %v5892
      %6469 = vmatprep.subr.mxu0 %v5895
      %6470 = vmatpush1.msra.mxu0 %v5894
      %6471 = vmatprep.subr.mxu0 %v5897
      %6472 = vmatpush1.msra.mxu0 %v5896
      %6473 = vmatprep.subr.mxu0 %v5899
      %6474 = vmatpush1.msra.mxu0 %v5898
      %6475 = vmatprep.subr.mxu0 %v5901
      %6476 = vmatpush1.msra.mxu0 %v5900
      %6477 = vmatprep.subr.mxu0 %v5903
      %6478 = vmatpush1.msra.mxu0 %v5902
      %6479 = vmatprep.subr.mxu0 %v5905
      %6480 = vmatpush1.msra.mxu0 %v5904
      %6481 = vmatprep.subr.mxu0 %v5907
      %6482 = vmatpush1.msra.mxu0 %v5906
      %6483 = vmatprep.subr.mxu0 %v5909
      %6484 = vmatpush1.msra.mxu0 %v5908
      %6485 = vmatprep.subr.mxu0 %v5911
      %6486 = vmatpush1.msra.mxu0 %v5910
      %6487 = vmatprep.subr.mxu0 %v5913
      %6488 = vmatpush1.msra.mxu0 %v5912
      %6489 = vmatprep.subr.mxu0 %v5915
      %6490 = vmatpush1.msra.mxu0 %v5914
      %6491 = vmatprep.subr.mxu0 %v5917
      %6492 = vmatpush1.msra.mxu0 %v5916
      %6493 = vmatprep.subr.mxu0 %v5919
      %6494 = vmatpush1.msra.mxu0 %v5918
      %6495 = vmatprep.subr.mxu0 %v5921
      %6496 = vmatpush1.msra.mxu0 %v5920
      %6497 = vmatprep.subr.mxu0 %v5923
      %6498 = vmatpush1.msra.mxu0 %v5922
      %6499 = vmatprep.subr.mxu0 %v5925
      %6500 = vmatpush1.msra.mxu0 %v5924
      %6501 = vmatprep.subr.mxu0 %v5927
      %6502 = vmatpush1.msra.mxu0 %v5926
      %6503 = vmatprep.subr.mxu0 %v5929
      %6504 = vmatpush1.msra.mxu0 %v5928
      %6505 = vmatprep.subr.mxu0 %v5931
      %6506 = vmatpush1.msra.mxu0 %v5930
      %6507 = vmatprep.subr.mxu0 %v5933
      %6508 = vmatpush1.msra.mxu0 %v5932
      %6509 = vmatprep.subr.mxu0 %v5935
      %6510 = vmatpush1.msra.mxu0 %v5934
      %6511 = vmatprep.mubr.f32.mxu0 %v6298
      %6512 = vmatmul.mubr.f32.gmra.mrb[0].mxu0 %v6297
      %v6513 = vpop.f32.mrb[0].mxu0
      %v6514 = vadd.f32 %v6443, %v6513
      %v6515 = vpop.f32.mrb[0].mxu0
      %v6516 = vadd.f32 %v6445, %v6515
      %6517 = vdwg.mxu0
      %6518 = vmatprep.subr.mxu0 %v5937
      %6519 = vmatpush1.msra.mxu0 %v5936
      %6520 = vmatprep.subr.mxu0 %v5939
      %6521 = vmatpush1.msra.mxu0 %v5938
      %6522 = vmatprep.subr.mxu0 %v5941
      %6523 = vmatpush1.msra.mxu0 %v5940
      %6524 = vmatprep.subr.mxu0 %v5943
      %6525 = vmatpush1.msra.mxu0 %v5942
      %6526 = vmatprep.subr.mxu0 %v5945
      %6527 = vmatpush1.msra.mxu0 %v5944
      %6528 = vmatprep.subr.mxu0 %v5947
      %6529 = vmatpush1.msra.mxu0 %v5946
      %6530 = vmatprep.subr.mxu0 %v5949
      %6531 = vmatpush1.msra.mxu0 %v5948
      %6532 = vmatprep.subr.mxu0 %v5951
      %6533 = vmatpush1.msra.mxu0 %v5950
      %6534 = vmatprep.subr.mxu0 %v5953
      %6535 = vmatpush1.msra.mxu0 %v5952
      %6536 = vmatprep.subr.mxu0 %v5955
      %6537 = vmatpush1.msra.mxu0 %v5954
      %6538 = vmatprep.subr.mxu0 %v5957
      %6539 = vmatpush1.msra.mxu0 %v5956
      %6540 = vmatprep.subr.mxu0 %v5959
      %6541 = vmatpush1.msra.mxu0 %v5958
      %6542 = vmatprep.subr.mxu0 %v5961
      %6543 = vmatpush1.msra.mxu0 %v5960
      %6544 = vmatprep.subr.mxu0 %v5963
      %6545 = vmatpush1.msra.mxu0 %v5962
      %6546 = vmatprep.subr.mxu0 %v5965
      %6547 = vmatpush1.msra.mxu0 %v5964
      %6548 = vmatprep.subr.mxu0 %v5967
      %6549 = vmatpush1.msra.mxu0 %v5966
      %6550 = vmatprep.subr.mxu0 %v5969
      %6551 = vmatpush1.msra.mxu0 %v5968
      %6552 = vmatprep.subr.mxu0 %v5971
      %6553 = vmatpush1.msra.mxu0 %v5970
      %6554 = vmatprep.subr.mxu0 %v5973
      %6555 = vmatpush1.msra.mxu0 %v5972
      %6556 = vmatprep.subr.mxu0 %v5975
      %6557 = vmatpush1.msra.mxu0 %v5974
      %6558 = vmatprep.subr.mxu0 %v5977
      %6559 = vmatpush1.msra.mxu0 %v5976
      %6560 = vmatprep.subr.mxu0 %v5979
      %6561 = vmatpush1.msra.mxu0 %v5978
      %6562 = vmatprep.subr.mxu0 %v5981
      %6563 = vmatpush1.msra.mxu0 %v5980
      %6564 = vmatprep.subr.mxu0 %v5983
      %6565 = vmatpush1.msra.mxu0 %v5982
      %6566 = vmatprep.subr.mxu0 %v5985
      %6567 = vmatpush1.msra.mxu0 %v5984
      %6568 = vmatprep.subr.mxu0 %v5987
      %6569 = vmatpush1.msra.mxu0 %v5986
      %6570 = vmatprep.subr.mxu0 %v5989
      %6571 = vmatpush1.msra.mxu0 %v5988
      %6572 = vmatprep.subr.mxu0 %v5991
      %6573 = vmatpush1.msra.mxu0 %v5990
      %6574 = vmatprep.subr.mxu0 %v5993
      %6575 = vmatpush1.msra.mxu0 %v5992
      %6576 = vmatprep.subr.mxu0 %v5995
      %6577 = vmatpush1.msra.mxu0 %v5994
      %6578 = vmatprep.subr.mxu0 %v5997
      %6579 = vmatpush1.msra.mxu0 %v5996
      %6580 = vmatprep.subr.mxu0 %v5999
      %6581 = vmatpush1.msra.mxu0 %v5998
      %6582 = vmatprep.mubr.f32.mxu0 %v6300
      %6583 = vmatmul.mubr.f32.gmra.mrb[0].mxu0 %v6299
      %v6584 = vpop.f32.mrb[0].mxu0
      %v6585 = vadd.f32 %v6514, %v6584
      %v6586 = vpop.f32.mrb[0].mxu0
      %v6587 = vadd.f32 %v6516, %v6586
      %6588 = vdwg.mxu0
      %6589 = vmatprep.subr.mxu0 %v6001
      %6590 = vmatpush1.msra.mxu0 %v6000
      %6591 = vmatprep.subr.mxu0 %v6003
      %6592 = vmatpush1.msra.mxu0 %v6002
      %6593 = vmatprep.subr.mxu0 %v6005
      %6594 = vmatpush1.msra.mxu0 %v6004
      %6595 = vmatprep.subr.mxu0 %v6007
      %6596 = vmatpush1.msra.mxu0 %v6006
      %6597 = vmatprep.subr.mxu0 %v6009
      %6598 = vmatpush1.msra.mxu0 %v6008
      %6599 = vmatprep.subr.mxu0 %v6011
      %6600 = vmatpush1.msra.mxu0 %v6010
      %6601 = vmatprep.subr.mxu0 %v6013
      %6602 = vmatpush1.msra.mxu0 %v6012
      %6603 = vmatprep.subr.mxu0 %v6015
      %6604 = vmatpush1.msra.mxu0 %v6014
      %6605 = vmatprep.subr.mxu0 %v6017
      %6606 = vmatpush1.msra.mxu0 %v6016
      %6607 = vmatprep.subr.mxu0 %v6019
      %6608 = vmatpush1.msra.mxu0 %v6018
      %6609 = vmatprep.subr.mxu0 %v6021
      %6610 = vmatpush1.msra.mxu0 %v6020
      %6611 = vmatprep.subr.mxu0 %v6023
      %6612 = vmatpush1.msra.mxu0 %v6022
      %6613 = vmatprep.subr.mxu0 %v6025
      %6614 = vmatpush1.msra.mxu0 %v6024
      %6615 = vmatprep.subr.mxu0 %v6027
      %6616 = vmatpush1.msra.mxu0 %v6026
      %6617 = vmatprep.subr.mxu0 %v6029
      %6618 = vmatpush1.msra.mxu0 %v6028
      %6619 = vmatprep.subr.mxu0 %v6031
      %6620 = vmatpush1.msra.mxu0 %v6030
      %6621 = vmatprep.subr.mxu0 %v6033
      %6622 = vmatpush1.msra.mxu0 %v6032
      %6623 = vmatprep.subr.mxu0 %v6035
      %6624 = vmatpush1.msra.mxu0 %v6034
      %6625 = vmatprep.subr.mxu0 %v6037
      %6626 = vmatpush1.msra.mxu0 %v6036
      %6627 = vmatprep.subr.mxu0 %v6039
      %6628 = vmatpush1.msra.mxu0 %v6038
      %6629 = vmatprep.subr.mxu0 %v6041
      %6630 = vmatpush1.msra.mxu0 %v6040
      %6631 = vmatprep.subr.mxu0 %v6043
      %6632 = vmatpush1.msra.mxu0 %v6042
      %6633 = vmatprep.subr.mxu0 %v6045
      %6634 = vmatpush1.msra.mxu0 %v6044
      %6635 = vmatprep.subr.mxu0 %v6047
      %6636 = vmatpush1.msra.mxu0 %v6046
      %6637 = vmatprep.subr.mxu0 %v6049
      %6638 = vmatpush1.msra.mxu0 %v6048
      %6639 = vmatprep.subr.mxu0 %v6051
      %6640 = vmatpush1.msra.mxu0 %v6050
      %6641 = vmatprep.subr.mxu0 %v6053
      %6642 = vmatpush1.msra.mxu0 %v6052
      %6643 = vmatprep.subr.mxu0 %v6055
      %6644 = vmatpush1.msra.mxu0 %v6054
      %6645 = vmatprep.subr.mxu0 %v6057
      %6646 = vmatpush1.msra.mxu0 %v6056
      %6647 = vmatprep.subr.mxu0 %v6059
      %6648 = vmatpush1.msra.mxu0 %v6058
      %6649 = vmatprep.subr.mxu0 %v6061
      %6650 = vmatpush1.msra.mxu0 %v6060
      %6651 = vmatprep.subr.mxu0 %v6063
      %6652 = vmatpush1.msra.mxu0 %v6062
      %6653 = vmatprep.mubr.f32.mxu0 %v6302
      %6654 = vmatmul.mubr.f32.gmra.mrb[0].mxu0 %v6301
      %v6655 = vpop.f32.mrb[0].mxu0
      %v6656 = vadd.f32 %v6585, %v6655
      %v6657 = vpop.f32.mrb[0].mxu0
      %v6658 = vadd.f32 %v6587, %v6657
      %6659 = vdwg.mxu0
      %6660 = vmatprep.subr.mxu0 %v6065
      %6661 = vmatpush1.msra.mxu0 %v6064
      %6662 = vmatprep.subr.mxu0 %v6067
      %6663 = vmatpush1.msra.mxu0 %v6066
      %6664 = vmatprep.subr.mxu0 %v6069
      %6665 = vmatpush1.msra.mxu0 %v6068
      %6666 = vmatprep.subr.mxu0 %v6071
      %6667 = vmatpush1.msra.mxu0 %v6070
      %6668 = vmatprep.subr.mxu0 %v6073
      %6669 = vmatpush1.msra.mxu0 %v6072
      %6670 = vmatprep.subr.mxu0 %v6075
      %6671 = vmatpush1.msra.mxu0 %v6074
      %6672 = vmatprep.subr.mxu0 %v6077
      %6673 = vmatpush1.msra.mxu0 %v6076
      %6674 = vmatprep.subr.mxu0 %v6079
      %6675 = vmatpush1.msra.mxu0 %v6078
      %6676 = vmatprep.subr.mxu0 %v6081
      %6677 = vmatpush1.msra.mxu0 %v6080
      %6678 = vmatprep.subr.mxu0 %v6083
      %6679 = vmatpush1.msra.mxu0 %v6082
      %6680 = vmatprep.subr.mxu0 %v6085
      %6681 = vmatpush1.msra.mxu0 %v6084
      %6682 = vmatprep.subr.mxu0 %v6087
      %6683 = vmatpush1.msra.mxu0 %v6086
      %6684 = vmatprep.subr.mxu0 %v6089
      %6685 = vmatpush1.msra.mxu0 %v6088
      %6686 = vmatprep.subr.mxu0 %v6091
      %6687 = vmatpush1.msra.mxu0 %v6090
      %6688 = vmatprep.subr.mxu0 %v6093
      %6689 = vmatpush1.msra.mxu0 %v6092
      %6690 = vmatprep.subr.mxu0 %v6095
      %6691 = vmatpush1.msra.mxu0 %v6094
      %6692 = vmatprep.subr.mxu0 %v6097
      %6693 = vmatpush1.msra.mxu0 %v6096
      %6694 = vmatprep.subr.mxu0 %v6099
      %6695 = vmatpush1.msra.mxu0 %v6098
      %6696 = vmatprep.subr.mxu0 %v6101
      %6697 = vmatpush1.msra.mxu0 %v6100
      %6698 = vmatprep.subr.mxu0 %v6103
      %6699 = vmatpush1.msra.mxu0 %v6102
      %6700 = vmatprep.subr.mxu0 %v6105
      %6701 = vmatpush1.msra.mxu0 %v6104
      %6702 = vmatprep.subr.mxu0 %v6107
      %6703 = vmatpush1.msra.mxu0 %v6106
      %6704 = vmatprep.subr.mxu0 %v6109
      %6705 = vmatpush1.msra.mxu0 %v6108
      %6706 = vmatprep.subr.mxu0 %v6111
      %6707 = vmatpush1.msra.mxu0 %v6110
      %6708 = vmatprep.subr.mxu0 %v6113
      %6709 = vmatpush1.msra.mxu0 %v6112
      %6710 = vmatprep.subr.mxu0 %v6115
      %6711 = vmatpush1.msra.mxu0 %v6114
      %6712 = vmatprep.subr.mxu0 %v6117
      %6713 = vmatpush1.msra.mxu0 %v6116
      %6714 = vmatprep.subr.mxu0 %v6119
      %6715 = vmatpush1.msra.mxu0 %v6118
      %6716 = vmatprep.subr.mxu0 %v6121
      %6717 = vmatpush1.msra.mxu0 %v6120
      %6718 = vmatprep.subr.mxu0 %v6123
      %6719 = vmatpush1.msra.mxu0 %v6122
      %6720 = vmatprep.subr.mxu0 %v6125
      %6721 = vmatpush1.msra.mxu0 %v6124
      %6722 = vmatprep.subr.mxu0 %v6127
      %6723 = vmatpush1.msra.mxu0 %v6126
      %6724 = vmatprep.mubr.f32.mxu0 %v6304
      %6725 = vmatmul.mubr.f32.gmra.mrb[0].mxu0 %v6303
      %v6726 = vpop.f32.mrb[0].mxu0
      %v6727 = vadd.f32 %v6656, %v6726
      %v6728 = vpop.f32.mrb[0].mxu0
      %v6729 = vadd.f32 %v6658, %v6728
      %6730 = vdwg.mxu0
      %v6733 = vrot.slane %v6727, 6
      %v6734 = vrot.slane %v6729, 6
      %vm6737 = vcmask 1041408
      %v6738 = vsel %vm6737, %v6289, %v6733
      %v6739 = vsel %vm6737, %v6291, %v6734
      %v6740 = vld [vmem:[%s8] sm:$0xff]
      %6742 = vset.pattern.permute.xlu0 0
      %6743 = vperm.xlu0 %6742, %v6740
      %v6744 = vpop.permute.xlu0 %6743
      %v6746 = vadd.f32 %v6738, %v6744
      %v6747 = vadd.f32 %v6739, %v6744
      %6748 = vst [vmem:[%s370] sm:$0xff] %v6746
      %6749 = vst [vmem:[%s370 + $0x8] sm:$0xff] %v6747
      %s6750 = smul.u32 2, %s25
      %p6751 = scmp.lt.s32.totalorder %s24, 1
      %s6752 = scalar_select %p6751, %s24, 1
      %p6753 = scmp.lt.s32.totalorder %s6750, 1
      %s6754 = scalar_select %p6753, %s6750, 1
      %s6755 = smul.addr %s6752, 2
      %s6756 = sadd.s32 %s6754, %s6755
      %s6757 = smul.addr %s6756, 8
      %s6758 = scalar_lea.vmem %s9, %s6757
      // Predicated region
      $region57: #{imageda_forward.1} parent=55 // pred_check
        %p6759 = pneg %p248
      $region58: #{imageda_forward.1} parent=55 // pred_check_branch
        %6761 = sbr.rel (%p6759) target = $region60
      $region59: #{imageda_forward.1} parent=55 // pred_region
        %s6762 = smul.u32 2, %s25
      $region60: #{imageda_forward.1} parent=55 // pred_fallthru
        _
    $region56: #{imageda_forward.1} parent=5 // pred_fallthru
      _
    %p6763 = scmp.le.s32.totalorder 2, %s15
    // Predicated region
    $region61: #{imageda_forward.1} parent=5 // pred_check
      %p6764 = pneg %p6763
    $region62: #{imageda_forward.1} parent=5 // pred_check_branch
      %6766 = sbr.rel (%p6764) target = $region64
    $region63: #{imageda_forward.1} parent=5 // pred_region
      %s6767 = ssub.s32 %s15, 2
      // Predicated region
      $region65: #{imageda_forward.1} parent=63 // pred_check
        %p6768 = pneg %p254
      $region66: #{imageda_forward.1} parent=63 // pred_check_branch
        %6770 = sbr.rel (%p6768) target = $region68
      $region67: #{imageda_forward.1} parent=63 // pred_region
        %s6771 = smul.u32 2, %s27
        %p6772 = scmp.lt.s32.totalorder %s26, 1
        %s6773 = scalar_select %p6772, %s26, 1
        %p6774 = scmp.lt.s32.totalorder %s6771, 1
        %s6775 = scalar_select %p6774, %s6771, 1
        %s6776 = smul.addr %s6773, 2
        %s6777 = sadd.s32 %s6775, %s6776
        %s6778 = smul.addr %s6777, 8
        %s6779 = scalar_lea.vmem %s9, %s6778
      $region68: #{imageda_forward.1} parent=63 // pred_fallthru
        _
    $region64: #{imageda_forward.1} parent=5 // pred_fallthru
      _
  $region6: #{imageda_forward.1} parent=0 // loop_footer
    %s19 = sadd.s32 1, %s15
  $region7: #{imageda_forward.1} parent=0 // loop_footer_branch
    %14 = sbr.rel target = $region3
  $region8: #{imageda_forward.1} parent=0 // loop_exit
    _

</llo_original>
